<compile_context>
chip_gen: v7x
topology: tpu7x:2x2x1
jax: 0.10.0
libtpu: 0.0.40
codegen_flags: <defaults>
</compile_context>

<pallas_src>
import jax
import jax.numpy as jnp
from jax.experimental import pallas as pl
from jax.experimental.pallas import tpu as pltpu


# ----------------------------------------------------------------------------
# Kernel
# ----------------------------------------------------------------------------
def _make_resblock_kernel(H, W, Cin, Cout, has_downsample):
    HW = H * W
    Hp, Wp = H + 2, W + 2

    def _write_padded(pad_ref, interior, C):
        # interior: (H, W, C).  Fills the whole (Hp, Wp, C) scratch each step
        # (zero 1-pixel halo + interior) WITHOUT a full-tile zero fill:
        # 2 border-row stores + 1 row-slab store.  Unconditional so it is
        # correct under megacore sharding of the batch grid axis.
        zrow = jnp.zeros((1, Wp, C), jnp.float32)
        zcol = jnp.zeros((H, 1, C), jnp.float32)
        pad_ref[0:1, :, :] = zrow
        pad_ref[Hp - 1:Hp, :, :] = zrow
        pad_ref[1:H + 1, :, :] = jnp.concatenate([zcol, interior, zcol], axis=1)

    def _conv3x3(pad_ref, w_ref, b_ref, C):
        # im2col: 9 shifted views concatenated on the lane axis -> one MXU
        # matmul with K = 9*C instead of 9 tiny K=C matmuls.
        taps = []
        for dy in range(3):
            for dx in range(3):
                taps.append(pad_ref[dy:dy + H, dx:dx + W, :].reshape(HW, C))
        im = jnp.concatenate(taps, axis=-1)                       # (HW, 9*C)
        return jnp.dot(im, w_ref[...],
                       preferred_element_type=jnp.float32) + b_ref[...]

    def kernel(*refs):
        if has_downsample:
            (x_ref, w1_ref, b1_ref, w2_ref, b2_ref, ds_ref,
             o_ref, xpad_ref, hpad_ref) = refs
        else:
            (x_ref, w1_ref, b1_ref, w2_ref, b2_ref,
             o_ref, xpad_ref, hpad_ref) = refs
            ds_ref = None

        x = x_ref[0]                                              # (HW, Cin)

        # ---- conv1 + ReLU --------------------------------------------------
        _write_padded(xpad_ref, x.reshape(H, W, Cin), Cin)
        h = jnp.maximum(_conv3x3(xpad_ref, w1_ref, b1_ref, Cin), 0.0)

        # ---- conv2 -----------------------------------------------------------
        _write_padded(hpad_ref, h.reshape(H, W, Cout), Cout)
        y = _conv3x3(hpad_ref, w2_ref, b2_ref, Cout)

        # ---- residual + ReLU -------------------------------------------------
        if has_downsample:
            res = jnp.dot(x, ds_ref[...], preferred_element_type=jnp.float32)
        else:
            res = x                                               # Cin == Cout
        o_ref[0] = jnp.maximum(y + res, 0.0)

    return kernel


# ----------------------------------------------------------------------------
# Wrapper (PyTorch layouts in / out)
# ----------------------------------------------------------------------------
def res_block_forward(x_nchw, params):
    """ResBlock forward.  x_nchw: (N, Cin, H, W) float32 (PyTorch layout)."""
    N, Cin, H, W = x_nchw.shape
    w1 = params["conv1_w"]                              # (Cout, Cin, 3, 3) OIHW
    Cout = w1.shape[0]
    has_ds = Cin != Cout

    # One-time layout conversion at the module boundary (outside the kernel):
    # activations -> (N, H*W, C) matmul tiles; conv weights -> im2col matrices
    # whose rows are ordered (dy, dx, cin) to match the kernel's tap order.
    x = jnp.transpose(x_nchw, (0, 2, 3, 1)).reshape(N, H * W, Cin)
    w1f = jnp.transpose(w1, (2, 3, 1, 0)).reshape(9 * Cin, Cout)
    w2f = jnp.transpose(params["conv2_w"], (2, 3, 1, 0)).reshape(9 * Cout, Cout)
    b1 = params["conv1_b"].reshape(1, Cout)
    b2 = params["conv2_b"].reshape(1, Cout)

    args = [x, w1f, b1, w2f, b2]
    in_specs = [
        pl.BlockSpec((1, H * W, Cin), lambda n: (n, 0, 0)),
        pl.BlockSpec((9 * Cin, Cout), lambda n: (0, 0)),
        pl.BlockSpec((1, Cout), lambda n: (0, 0)),
        pl.BlockSpec((9 * Cout, Cout), lambda n: (0, 0)),
        pl.BlockSpec((1, Cout), lambda n: (0, 0)),
    ]
    if has_ds:
        ds = jnp.transpose(params["ds_w"], (2, 3, 1, 0)).reshape(Cin, Cout)
        args.append(ds)
        in_specs.append(pl.BlockSpec((Cin, Cout), lambda n: (0, 0)))

    out = pl.pallas_call(
        _make_resblock_kernel(H, W, Cin, Cout, has_ds),
        out_shape=jax.ShapeDtypeStruct((N, H * W, Cout), jnp.float32),
        grid=(N,),
        in_specs=in_specs,
        out_specs=pl.BlockSpec((1, H * W, Cout), lambda n: (n, 0, 0)),
        scratch_shapes=[
            pltpu.VMEM((H + 2, W + 2, Cin), jnp.float32),   # padded input halo
            pltpu.VMEM((H + 2, W + 2, Cout), jnp.float32),  # padded conv1 halo
        ],
        compiler_params=pltpu.CompilerParams(
            dimension_semantics=("parallel",)),
    )(*args)

    # (N, H*W, Cout) -> NCHW to match the PyTorch module's output layout.
    return out.reshape(N, H, W, Cout).transpose(0, 3, 1, 2)


# ----------------------------------------------------------------------------
# Pure-JAX reference (for correctness), PyTorch layouts
# ----------------------------------------------------------------------------
def res_block_reference(x_nchw, params):
    dn = ("NCHW", "OIHW", "NCHW")
    hp = jax.lax.Precision.HIGHEST
    y = jax.lax.conv_general_dilated(x_nchw, params["conv1_w"], (1, 1),
                                     [(1, 1), (1, 1)], dimension_numbers=dn,
                                     precision=hp)
    y = jnp.maximum(y + params["conv1_b"][None, :, None, None], 0.0)
    y = jax.lax.conv_general_dilated(y, params["conv2_w"], (1, 1),
                                     [(1, 1), (1, 1)], dimension_numbers=dn,
                                     precision=hp)
    y = y + params["conv2_b"][None, :, None, None]
    if "ds_w" in params:
        res = jax.lax.conv_general_dilated(x_nchw, params["ds_w"], (1, 1),
                                           [(0, 0), (0, 0)],
                                           dimension_numbers=dn, precision=hp)
    else:
        res = x_nchw
    return jnp.maximum(y + res, 0.0)


def init_params(key, in_size, out_size):
    ks = jax.random.split(key, 5)

    def nrm(k, shape, scale=0.1):
        return (scale * jax.random.normal(k, shape)).astype(jnp.float32)

    p = {
        "conv1_w": nrm(ks[0], (out_size, in_size, 3, 3)),
        "conv1_b": nrm(ks[1], (out_size,)),
        "conv2_w": nrm(ks[2], (out_size, out_size, 3, 3)),
        "conv2_b": nrm(ks[3], (out_size,)),
    }
    if in_size != out_size:
        p["ds_w"] = nrm(ks[4], (out_size, in_size, 1, 1))
    return p


if __name__ == "__main__":
    key = jax.random.PRNGKey(0)
    k_x, k_p1, k_p2 = jax.random.split(key, 3)

    N, H, W = 2, 16, 16
    fwd = jax.jit(res_block_forward)

    # Case 1: in_size != out_size -> 1x1 downsample on the residual path.
    in_size, out_size = 32, 16
    x = jax.random.normal(k_x, (N, in_size, H, W), dtype=jnp.float32)
    params = init_params(k_p1, in_size, out_size)
    out = jax.block_until_ready(fwd(x, params))
    assert out.shape == (N, out_size, H, W)
    ref = res_block_reference(x, params)
    err = float(jnp.max(jnp.abs(out - ref)))
    assert err < 2e-2, f"case-1 mismatch: max abs err = {err}"

    # Case 2: in_size == out_size -> identity residual.
    in2 = out2_c = 16
    x2 = x[:, :in2]
    params2 = init_params(k_p2, in2, out2_c)
    out2 = jax.block_until_ready(fwd(x2, params2))
    assert out2.shape == (N, out2_c, H, W)
    ref2 = res_block_reference(x2, params2)
    err2 = float(jnp.max(jnp.abs(out2 - ref2)))
    assert err2 < 2e-2, f"case-2 mismatch: max abs err = {err2}"

    print("KERNEL_OK")
</pallas_src>

<mosaic_0001>
module attributes {stable_mosaic.version = 11 : i64} {
  func.func @kernel(%arg0: i32, %arg1: memref<1x256x32xf32, #tpu.memory_space<vmem>>, %arg2: memref<288x16xf32, #tpu.memory_space<vmem>>, %arg3: memref<1x16xf32, #tpu.memory_space<vmem>>, %arg4: memref<144x16xf32, #tpu.memory_space<vmem>>, %arg5: memref<1x16xf32, #tpu.memory_space<vmem>>, %arg6: memref<32x16xf32, #tpu.memory_space<vmem>>, %arg7: memref<1x256x16xf32, #tpu.memory_space<vmem>>, %arg8: memref<18x18x32xf32, #tpu.memory_space<vmem>>, %arg9: memref<18x18x16xf32, #tpu.memory_space<vmem>>) attributes {dimension_semantics = [#tpu.dimension_semantics<parallel>], iteration_bounds = array<i64: 2>, scalar_prefetch = 0 : i64, scratch_operands = 2 : i64, tpu.core_type = #tpu.core_type<tc>, window_params = [{transform_indices = @transform_0, window_bounds = array<i64: 1, 256, 32>}, {pipeline_mode = #tpu.pipeline_mode<synchronous>, transform_indices = @transform_1, window_bounds = array<i64: 288, 16>}, {pipeline_mode = #tpu.pipeline_mode<synchronous>, transform_indices = @transform_2, window_bounds = array<i64: 1, 16>}, {pipeline_mode = #tpu.pipeline_mode<synchronous>, transform_indices = @transform_3, window_bounds = array<i64: 144, 16>}, {pipeline_mode = #tpu.pipeline_mode<synchronous>, transform_indices = @transform_4, window_bounds = array<i64: 1, 16>}, {pipeline_mode = #tpu.pipeline_mode<synchronous>, transform_indices = @transform_5, window_bounds = array<i64: 32, 16>}, {transform_indices = @transform_6, window_bounds = array<i64: 1, 256, 16>}]} {
    %c0 = arith.constant 0 : index
    %c0_0 = arith.constant 0 : index
    %c0_1 = arith.constant 0 : index
    %0 = vector.load %arg1[%c0, %c0_0, %c0_1] : memref<1x256x32xf32, #tpu.memory_space<vmem>>, vector<1x256x32xf32>
    %1 = vector.shape_cast %0 : vector<1x256x32xf32> to vector<256x32xf32>
    %2 = vector.shape_cast %1 : vector<256x32xf32> to vector<16x16x32xf32>
    %cst = arith.constant 0.000000e+00 : f32
    %3 = vector.broadcast %cst : f32 to vector<1x18x32xf32>
    %cst_2 = arith.constant 0.000000e+00 : f32
    %4 = vector.broadcast %cst_2 : f32 to vector<16x1x32xf32>
    %c0_3 = arith.constant 0 : index
    %c0_4 = arith.constant 0 : index
    %c0_5 = arith.constant 0 : index
    %5 = vector.load %arg8[%c0_3, %c0_4, %c0_5] : memref<18x18x32xf32, #tpu.memory_space<vmem>>, vector<1x18x32xf32>
    tpu.vector_store %arg8[%c0_3, %c0_4, %c0_5], %3 {strides = array<i32>} : memref<18x18x32xf32, #tpu.memory_space<vmem>>, vector<1x18x32xf32>,
    %c17 = arith.constant 17 : index
    %c0_6 = arith.constant 0 : index
    %c0_7 = arith.constant 0 : index
    %6 = vector.load %arg8[%c17, %c0_6, %c0_7] : memref<18x18x32xf32, #tpu.memory_space<vmem>>, vector<1x18x32xf32>
    tpu.vector_store %arg8[%c17, %c0_6, %c0_7], %3 {strides = array<i32>} : memref<18x18x32xf32, #tpu.memory_space<vmem>>, vector<1x18x32xf32>,
    %7 = tpu.concatenate %4, %2, %4 in 1 : vector<16x1x32xf32>, vector<16x16x32xf32>, vector<16x1x32xf32> -> vector<16x18x32xf32>
    %c1 = arith.constant 1 : index
    %c0_8 = arith.constant 0 : index
    %c0_9 = arith.constant 0 : index
    %8 = vector.load %arg8[%c1, %c0_8, %c0_9] : memref<18x18x32xf32, #tpu.memory_space<vmem>>, vector<16x18x32xf32>
    tpu.vector_store %arg8[%c1, %c0_8, %c0_9], %7 {strides = array<i32>} : memref<18x18x32xf32, #tpu.memory_space<vmem>>, vector<16x18x32xf32>,
    %c0_10 = arith.constant 0 : index
    %c0_11 = arith.constant 0 : index
    %c0_12 = arith.constant 0 : index
    %9 = vector.load %arg8[%c0_10, %c0_11, %c0_12] : memref<18x18x32xf32, #tpu.memory_space<vmem>>, vector<16x16x32xf32>
    %10 = vector.shape_cast %9 : vector<16x16x32xf32> to vector<256x32xf32>
    %c0_13 = arith.constant 0 : index
    %c1_14 = arith.constant 1 : index
    %c0_15 = arith.constant 0 : index
    %11 = vector.load %arg8[%c0_13, %c1_14, %c0_15] : memref<18x18x32xf32, #tpu.memory_space<vmem>>, vector<16x16x32xf32>
    %12 = vector.shape_cast %11 : vector<16x16x32xf32> to vector<256x32xf32>
    %c0_16 = arith.constant 0 : index
    %c2 = arith.constant 2 : index
    %c0_17 = arith.constant 0 : index
    %13 = vector.load %arg8[%c0_16, %c2, %c0_17] : memref<18x18x32xf32, #tpu.memory_space<vmem>>, vector<16x16x32xf32>
    %14 = vector.shape_cast %13 : vector<16x16x32xf32> to vector<256x32xf32>
    %c1_18 = arith.constant 1 : index
    %c0_19 = arith.constant 0 : index
    %c0_20 = arith.constant 0 : index
    %15 = vector.load %arg8[%c1_18, %c0_19, %c0_20] : memref<18x18x32xf32, #tpu.memory_space<vmem>>, vector<16x16x32xf32>
    %16 = vector.shape_cast %15 : vector<16x16x32xf32> to vector<256x32xf32>
    %c1_21 = arith.constant 1 : index
    %c1_22 = arith.constant 1 : index
    %c0_23 = arith.constant 0 : index
    %17 = vector.load %arg8[%c1_21, %c1_22, %c0_23] : memref<18x18x32xf32, #tpu.memory_space<vmem>>, vector<16x16x32xf32>
    %18 = vector.shape_cast %17 : vector<16x16x32xf32> to vector<256x32xf32>
    %c1_24 = arith.constant 1 : index
    %c2_25 = arith.constant 2 : index
    %c0_26 = arith.constant 0 : index
    %19 = vector.load %arg8[%c1_24, %c2_25, %c0_26] : memref<18x18x32xf32, #tpu.memory_space<vmem>>, vector<16x16x32xf32>
    %20 = vector.shape_cast %19 : vector<16x16x32xf32> to vector<256x32xf32>
    %c2_27 = arith.constant 2 : index
    %c0_28 = arith.constant 0 : index
    %c0_29 = arith.constant 0 : index
    %21 = vector.load %arg8[%c2_27, %c0_28, %c0_29] : memref<18x18x32xf32, #tpu.memory_space<vmem>>, vector<16x16x32xf32>
    %22 = vector.shape_cast %21 : vector<16x16x32xf32> to vector<256x32xf32>
    %c2_30 = arith.constant 2 : index
    %c1_31 = arith.constant 1 : index
    %c0_32 = arith.constant 0 : index
    %23 = vector.load %arg8[%c2_30, %c1_31, %c0_32] : memref<18x18x32xf32, #tpu.memory_space<vmem>>, vector<16x16x32xf32>
    %24 = vector.shape_cast %23 : vector<16x16x32xf32> to vector<256x32xf32>
    %c2_33 = arith.constant 2 : index
    %c2_34 = arith.constant 2 : index
    %c0_35 = arith.constant 0 : index
    %25 = vector.load %arg8[%c2_33, %c2_34, %c0_35] : memref<18x18x32xf32, #tpu.memory_space<vmem>>, vector<16x16x32xf32>
    %26 = vector.shape_cast %25 : vector<16x16x32xf32> to vector<256x32xf32>
    %27 = tpu.concatenate %10, %12, %14, %16, %18, %20, %22, %24, %26 in 1 : vector<256x32xf32>, vector<256x32xf32>, vector<256x32xf32>, vector<256x32xf32>, vector<256x32xf32>, vector<256x32xf32>, vector<256x32xf32>, vector<256x32xf32>, vector<256x32xf32> -> vector<256x288xf32>
    %c0_36 = arith.constant 0 : index
    %c0_37 = arith.constant 0 : index
    %28 = vector.load %arg2[%c0_36, %c0_37] : memref<288x16xf32, #tpu.memory_space<vmem>>, vector<288x16xf32>
    %cst_38 = arith.constant dense<0.000000e+00> : vector<256x16xf32>
    %29 = tpu.matmul %27, %28, %cst_38 {dimension_numbers = #tpu.dot_dimension_numbers<[1], [0], [0], [1], [0, 0, 1, 1], [], []>} : vector<256x288xf32>, vector<288x16xf32>, vector<256x16xf32> -> vector<256x16xf32>
    %c0_39 = arith.constant 0 : index
    %c0_40 = arith.constant 0 : index
    %30 = vector.load %arg3[%c0_39, %c0_40] : memref<1x16xf32, #tpu.memory_space<vmem>>, vector<1x16xf32>
    %31 = vector.broadcast %30 : vector<1x16xf32> to vector<256x16xf32>
    %32 = arith.addf %29, %31 : vector<256x16xf32>
    %cst_41 = arith.constant 0.000000e+00 : f32
    %33 = vector.broadcast %cst_41 : f32 to vector<256x16xf32>
    %34 = arith.maximumf %32, %33 : vector<256x16xf32>
    %35 = vector.shape_cast %34 : vector<256x16xf32> to vector<16x16x16xf32>
    %cst_42 = arith.constant 0.000000e+00 : f32
    %36 = vector.broadcast %cst_42 : f32 to vector<1x18x16xf32>
    %cst_43 = arith.constant 0.000000e+00 : f32
    %37 = vector.broadcast %cst_43 : f32 to vector<16x1x16xf32>
    %c0_44 = arith.constant 0 : index
    %c0_45 = arith.constant 0 : index
    %c0_46 = arith.constant 0 : index
    %38 = vector.load %arg9[%c0_44, %c0_45, %c0_46] : memref<18x18x16xf32, #tpu.memory_space<vmem>>, vector<1x18x16xf32>
    tpu.vector_store %arg9[%c0_44, %c0_45, %c0_46], %36 {strides = array<i32>} : memref<18x18x16xf32, #tpu.memory_space<vmem>>, vector<1x18x16xf32>,
    %c17_47 = arith.constant 17 : index
    %c0_48 = arith.constant 0 : index
    %c0_49 = arith.constant 0 : index
    %39 = vector.load %arg9[%c17_47, %c0_48, %c0_49] : memref<18x18x16xf32, #tpu.memory_space<vmem>>, vector<1x18x16xf32>
    tpu.vector_store %arg9[%c17_47, %c0_48, %c0_49], %36 {strides = array<i32>} : memref<18x18x16xf32, #tpu.memory_space<vmem>>, vector<1x18x16xf32>,
    %40 = tpu.concatenate %37, %35, %37 in 1 : vector<16x1x16xf32>, vector<16x16x16xf32>, vector<16x1x16xf32> -> vector<16x18x16xf32>
    %c1_50 = arith.constant 1 : index
    %c0_51 = arith.constant 0 : index
    %c0_52 = arith.constant 0 : index
    %41 = vector.load %arg9[%c1_50, %c0_51, %c0_52] : memref<18x18x16xf32, #tpu.memory_space<vmem>>, vector<16x18x16xf32>
    tpu.vector_store %arg9[%c1_50, %c0_51, %c0_52], %40 {strides = array<i32>} : memref<18x18x16xf32, #tpu.memory_space<vmem>>, vector<16x18x16xf32>,
    %c0_53 = arith.constant 0 : index
    %c0_54 = arith.constant 0 : index
    %c0_55 = arith.constant 0 : index
    %42 = vector.load %arg9[%c0_53, %c0_54, %c0_55] : memref<18x18x16xf32, #tpu.memory_space<vmem>>, vector<16x16x16xf32>
    %43 = vector.shape_cast %42 : vector<16x16x16xf32> to vector<256x16xf32>
    %c0_56 = arith.constant 0 : index
    %c1_57 = arith.constant 1 : index
    %c0_58 = arith.constant 0 : index
    %44 = vector.load %arg9[%c0_56, %c1_57, %c0_58] : memref<18x18x16xf32, #tpu.memory_space<vmem>>, vector<16x16x16xf32>
    %45 = vector.shape_cast %44 : vector<16x16x16xf32> to vector<256x16xf32>
    %c0_59 = arith.constant 0 : index
    %c2_60 = arith.constant 2 : index
    %c0_61 = arith.constant 0 : index
    %46 = vector.load %arg9[%c0_59, %c2_60, %c0_61] : memref<18x18x16xf32, #tpu.memory_space<vmem>>, vector<16x16x16xf32>
    %47 = vector.shape_cast %46 : vector<16x16x16xf32> to vector<256x16xf32>
    %c1_62 = arith.constant 1 : index
    %c0_63 = arith.constant 0 : index
    %c0_64 = arith.constant 0 : index
    %48 = vector.load %arg9[%c1_62, %c0_63, %c0_64] : memref<18x18x16xf32, #tpu.memory_space<vmem>>, vector<16x16x16xf32>
    %49 = vector.shape_cast %48 : vector<16x16x16xf32> to vector<256x16xf32>
    %c1_65 = arith.constant 1 : index
    %c1_66 = arith.constant 1 : index
    %c0_67 = arith.constant 0 : index
    %50 = vector.load %arg9[%c1_65, %c1_66, %c0_67] : memref<18x18x16xf32, #tpu.memory_space<vmem>>, vector<16x16x16xf32>
    %51 = vector.shape_cast %50 : vector<16x16x16xf32> to vector<256x16xf32>
    %c1_68 = arith.constant 1 : index
    %c2_69 = arith.constant 2 : index
    %c0_70 = arith.constant 0 : index
    %52 = vector.load %arg9[%c1_68, %c2_69, %c0_70] : memref<18x18x16xf32, #tpu.memory_space<vmem>>, vector<16x16x16xf32>
    %53 = vector.shape_cast %52 : vector<16x16x16xf32> to vector<256x16xf32>
    %c2_71 = arith.constant 2 : index
    %c0_72 = arith.constant 0 : index
    %c0_73 = arith.constant 0 : index
    %54 = vector.load %arg9[%c2_71, %c0_72, %c0_73] : memref<18x18x16xf32, #tpu.memory_space<vmem>>, vector<16x16x16xf32>
    %55 = vector.shape_cast %54 : vector<16x16x16xf32> to vector<256x16xf32>
    %c2_74 = arith.constant 2 : index
    %c1_75 = arith.constant 1 : index
    %c0_76 = arith.constant 0 : index
    %56 = vector.load %arg9[%c2_74, %c1_75, %c0_76] : memref<18x18x16xf32, #tpu.memory_space<vmem>>, vector<16x16x16xf32>
    %57 = vector.shape_cast %56 : vector<16x16x16xf32> to vector<256x16xf32>
    %c2_77 = arith.constant 2 : index
    %c2_78 = arith.constant 2 : index
    %c0_79 = arith.constant 0 : index
    %58 = vector.load %arg9[%c2_77, %c2_78, %c0_79] : memref<18x18x16xf32, #tpu.memory_space<vmem>>, vector<16x16x16xf32>
    %59 = vector.shape_cast %58 : vector<16x16x16xf32> to vector<256x16xf32>
    %60 = tpu.concatenate %43, %45, %47, %49, %51, %53, %55, %57, %59 in 1 : vector<256x16xf32>, vector<256x16xf32>, vector<256x16xf32>, vector<256x16xf32>, vector<256x16xf32>, vector<256x16xf32>, vector<256x16xf32>, vector<256x16xf32>, vector<256x16xf32> -> vector<256x144xf32>
    %c0_80 = arith.constant 0 : index
    %c0_81 = arith.constant 0 : index
    %61 = vector.load %arg4[%c0_80, %c0_81] : memref<144x16xf32, #tpu.memory_space<vmem>>, vector<144x16xf32>
    %cst_82 = arith.constant dense<0.000000e+00> : vector<256x16xf32>
    %62 = tpu.matmul %60, %61, %cst_82 {dimension_numbers = #tpu.dot_dimension_numbers<[1], [0], [0], [1], [0, 0, 1, 1], [], []>} : vector<256x144xf32>, vector<144x16xf32>, vector<256x16xf32> -> vector<256x16xf32>
    %c0_83 = arith.constant 0 : index
    %c0_84 = arith.constant 0 : index
    %63 = vector.load %arg5[%c0_83, %c0_84] : memref<1x16xf32, #tpu.memory_space<vmem>>, vector<1x16xf32>
    %64 = vector.broadcast %63 : vector<1x16xf32> to vector<256x16xf32>
    %65 = arith.addf %62, %64 : vector<256x16xf32>
    %c0_85 = arith.constant 0 : index
    %c0_86 = arith.constant 0 : index
    %66 = vector.load %arg6[%c0_85, %c0_86] : memref<32x16xf32, #tpu.memory_space<vmem>>, vector<32x16xf32>
    %cst_87 = arith.constant dense<0.000000e+00> : vector<256x16xf32>
    %67 = tpu.matmul %1, %66, %cst_87 {dimension_numbers = #tpu.dot_dimension_numbers<[1], [0], [0], [1], [0, 0, 1, 1], [], []>} : vector<256x32xf32>, vector<32x16xf32>, vector<256x16xf32> -> vector<256x16xf32>
    %68 = arith.addf %65, %67 : vector<256x16xf32>
    %cst_88 = arith.constant 0.000000e+00 : f32
    %69 = vector.broadcast %cst_88 : f32 to vector<256x16xf32>
    %70 = arith.maximumf %68, %69 : vector<256x16xf32>
    %c0_89 = arith.constant 0 : index
    %c0_90 = arith.constant 0 : index
    %c0_91 = arith.constant 0 : index
    %71 = vector.load %arg7[%c0_89, %c0_90, %c0_91] : memref<1x256x16xf32, #tpu.memory_space<vmem>>, vector<1x256x16xf32>
    %72 = vector.shape_cast %71 : vector<1x256x16xf32> to vector<256x16xf32>
    %73 = vector.shape_cast %70 : vector<256x16xf32> to vector<1x256x16xf32>
    tpu.vector_store %arg7[%c0_89, %c0_90, %c0_91], %73 {strides = array<i32>} : memref<1x256x16xf32, #tpu.memory_space<vmem>>, vector<1x256x16xf32>,
    return
  }
  func.func @transform_0(%arg0: i32) -> (i32, i32, i32) {
    %c0_i32 = arith.constant 0 : i32
    %c0_i32_0 = arith.constant 0 : i32
    %c0_i32_1 = arith.constant 0 : i32
    return %arg0, %c0_i32, %c0_i32_0 : i32, i32, i32
  }
  func.func @transform_1(%arg0: i32) -> (i32, i32) {
    %c0_i32 = arith.constant 0 : i32
    %c0_i32_0 = arith.constant 0 : i32
    %c0_i32_1 = arith.constant 0 : i32
    return %c0_i32, %c0_i32_0 : i32, i32
  }
  func.func @transform_2(%arg0: i32) -> (i32, i32) {
    %c0_i32 = arith.constant 0 : i32
    %c0_i32_0 = arith.constant 0 : i32
    %c0_i32_1 = arith.constant 0 : i32
    return %c0_i32, %c0_i32_0 : i32, i32
  }
  func.func @transform_3(%arg0: i32) -> (i32, i32) {
    %c0_i32 = arith.constant 0 : i32
    %c0_i32_0 = arith.constant 0 : i32
    %c0_i32_1 = arith.constant 0 : i32
    return %c0_i32, %c0_i32_0 : i32, i32
  }
  func.func @transform_4(%arg0: i32) -> (i32, i32) {
    %c0_i32 = arith.constant 0 : i32
    %c0_i32_0 = arith.constant 0 : i32
    %c0_i32_1 = arith.constant 0 : i32
    return %c0_i32, %c0_i32_0 : i32, i32
  }
  func.func @transform_5(%arg0: i32) -> (i32, i32) {
    %c0_i32 = arith.constant 0 : i32
    %c0_i32_0 = arith.constant 0 : i32
    %c0_i32_1 = arith.constant 0 : i32
    return %c0_i32, %c0_i32_0 : i32, i32
  }
  func.func @transform_6(%arg0: i32) -> (i32, i32, i32) {
    %c0_i32 = arith.constant 0 : i32
    %c0_i32_0 = arith.constant 0 : i32
    %c0_i32_1 = arith.constant 0 : i32
    return %arg0, %c0_i32, %c0_i32_0 : i32, i32, i32
  }
}

</mosaic_0001>

<llo_original>
// kernel: res_block_forward.1
$region0: #{res_block_forward.1}
  #allocation0 [shape = 'u32[]', space=smem, size = 0x4, offset = 0x4, fixed_abs, tag = 'smem constant byte address 0x4 - core index']
  #allocation1 [shape = 'u32[144,128]{1,0:T(1,128)}', space=vmem, size = 0x12000, scoped, tag = 'internal scratch']
  #allocation2 [shape = 'f32[18,18,32]{2,1,0:T(8,128)}', space=vmem, size = 0x36000, scoped, tag = 'scratch operand']
  #allocation3 [shape = 'f32[18,18,16]{2,1,0:T(8,128)}', space=vmem, size = 0x36000, scoped, tag = 'scratch operand']
  %s0 = inlined_call_operand.vmem [shape: f32[2,256,32], index: 0, kind: input, shape index: {}]
  %s1 = inlined_call_operand.vmem [shape: f32[288,16], index: 1, kind: input, shape index: {}]
  %s2 = inlined_call_operand.vmem [shape: f32[1,16], index: 2, kind: input, shape index: {}]
  %s3 = inlined_call_operand.vmem [shape: f32[144,16], index: 3, kind: input, shape index: {}]
  %s4 = inlined_call_operand.vmem [shape: f32[1,16], index: 4, kind: input, shape index: {}]
  %s5 = inlined_call_operand.vmem [shape: f32[32,16], index: 5, kind: input, shape index: {}]
  %s6 = inlined_call_operand.vmem [shape: f32[2,256,16], index: 6, kind: output, shape index: {}]
  %s7 = sld [smem:[#allocation0]]
  $region57: #{res_block_forward.1} parent=0
    _
  %s9 = ssub.s32 1, %s7
  %s10 = scalar_select 0, %s9, %s7
  loop: start=0, step=1, limit=4
  $region2: #{res_block_forward.1} parent=0 // loop_pre_header
    _
  $region3: #{res_block_forward.1} parent=0 // loop_header
    %s12 = sphi 0, %s16
    %p13 = scmp.ge.s32.totalorder %s12, 4
    %s22 = sphi 0, %s24
    %s25 = sphi 0, %s22
    %s26 = sphi 0, %s25
    %s42 = sphi 0, %s26
    %s46 = sphi 0, %s46
    %s48 = sphi 0, %s46
    %s49 = sphi 0, %s48
    %s63 = sphi 0, %s49
    %s67 = sphi 0, %s67
    %s69 = sphi 0, %s67
    %s70 = sphi 0, %s69
    %s84 = sphi 0, %s70
    %s88 = sphi 0, %s88
    %s90 = sphi 0, %s88
    %s91 = sphi 0, %s90
    %s105 = sphi 0, %s91
    %s109 = sphi 0, %s109
    %s111 = sphi 0, %s109
    %s112 = sphi 0, %s111
    %s126 = sphi 0, %s112
    %s130 = sphi 0, %s130
    %s132 = sphi 0, %s130
    %s133 = sphi 0, %s132
    %s147 = sphi 0, %s133
    %s153 = sphi 0, %s155
    %s156 = sphi 0, %s153
    %s157 = sphi 0, %s156
    %s173 = sphi 0, %s157
  $region4: #{res_block_forward.1} parent=0 // loop_header_branch
    %15 = sbr.rel (%p13) target = $region8
  $region5: #{res_block_forward.1} parent=0 // loop_body
    %s17 = ssub.s32 %s12, 1
    %s18 = ssub.s32 %s12, 2
    %s19 = sadd.s32 %s12, 1
    %s20 = ssub.s32 %s12, %s19
    %p21 = scmp.eq.s32.totalorder %s20, 0
    %s23 = sadd.s32 %s22, 1
    %s24 = scalar_select %p21, %s22, %s23
    %p27 = pneg %p21
    %p28 = scmp.eq.s32.totalorder %s12, 1
    %p29 = por %p27, %p28
    %p30 = scmp.ne.s32.totalorder %s22, %s25
    %p31 = scmp.eq.s32.totalorder %s12, 0
    %p32 = por %p30, %p31
    %p33 = scmp.ne.s32.totalorder %s22, %s25
    %p34 = scmp.eq.s32.totalorder %s17, 1
    %p35 = por %p33, %p34
    %p36 = scmp.ne.s32.totalorder %s25, %s26
    %p37 = scmp.eq.s32.totalorder %s17, 0
    %p38 = por %p36, %p37
    %p39 = scmp.ne.s32.totalorder %s25, %s26
    %p40 = scmp.eq.s32.totalorder %s18, 1
    %p41 = por %p39, %p40
    %p43 = scmp.ne.s32.totalorder %s26, %s42
    %p44 = scmp.eq.s32.totalorder %s18, 0
    %p45 = por %p43, %p44
    %s47 = sadd.s32 %s46, 1
    %p50 = scmp.eq.s32.totalorder %s12, 1
    %p51 = scmp.ne.s32.totalorder %s46, %s48
    %p52 = scmp.eq.s32.totalorder %s12, 0
    %p53 = por %p51, %p52
    %p54 = scmp.ne.s32.totalorder %s46, %s48
    %p55 = scmp.eq.s32.totalorder %s17, 1
    %p56 = por %p54, %p55
    %p57 = scmp.ne.s32.totalorder %s48, %s49
    %p58 = scmp.eq.s32.totalorder %s17, 0
    %p59 = por %p57, %p58
    %p60 = scmp.ne.s32.totalorder %s48, %s49
    %p61 = scmp.eq.s32.totalorder %s18, 1
    %p62 = por %p60, %p61
    %p64 = scmp.ne.s32.totalorder %s49, %s63
    %p65 = scmp.eq.s32.totalorder %s18, 0
    %p66 = por %p64, %p65
    %s68 = sadd.s32 %s67, 1
    %p71 = scmp.eq.s32.totalorder %s12, 1
    %p72 = scmp.ne.s32.totalorder %s67, %s69
    %p73 = scmp.eq.s32.totalorder %s12, 0
    %p74 = por %p72, %p73
    %p75 = scmp.ne.s32.totalorder %s67, %s69
    %p76 = scmp.eq.s32.totalorder %s17, 1
    %p77 = por %p75, %p76
    %p78 = scmp.ne.s32.totalorder %s69, %s70
    %p79 = scmp.eq.s32.totalorder %s17, 0
    %p80 = por %p78, %p79
    %p81 = scmp.ne.s32.totalorder %s69, %s70
    %p82 = scmp.eq.s32.totalorder %s18, 1
    %p83 = por %p81, %p82
    %p85 = scmp.ne.s32.totalorder %s70, %s84
    %p86 = scmp.eq.s32.totalorder %s18, 0
    %p87 = por %p85, %p86
    %s89 = sadd.s32 %s88, 1
    %p92 = scmp.eq.s32.totalorder %s12, 1
    %p93 = scmp.ne.s32.totalorder %s88, %s90
    %p94 = scmp.eq.s32.totalorder %s12, 0
    %p95 = por %p93, %p94
    %p96 = scmp.ne.s32.totalorder %s88, %s90
    %p97 = scmp.eq.s32.totalorder %s17, 1
    %p98 = por %p96, %p97
    %p99 = scmp.ne.s32.totalorder %s90, %s91
    %p100 = scmp.eq.s32.totalorder %s17, 0
    %p101 = por %p99, %p100
    %p102 = scmp.ne.s32.totalorder %s90, %s91
    %p103 = scmp.eq.s32.totalorder %s18, 1
    %p104 = por %p102, %p103
    %p106 = scmp.ne.s32.totalorder %s91, %s105
    %p107 = scmp.eq.s32.totalorder %s18, 0
    %p108 = por %p106, %p107
    %s110 = sadd.s32 %s109, 1
    %p113 = scmp.eq.s32.totalorder %s12, 1
    %p114 = scmp.ne.s32.totalorder %s109, %s111
    %p115 = scmp.eq.s32.totalorder %s12, 0
    %p116 = por %p114, %p115
    %p117 = scmp.ne.s32.totalorder %s109, %s111
    %p118 = scmp.eq.s32.totalorder %s17, 1
    %p119 = por %p117, %p118
    %p120 = scmp.ne.s32.totalorder %s111, %s112
    %p121 = scmp.eq.s32.totalorder %s17, 0
    %p122 = por %p120, %p121
    %p123 = scmp.ne.s32.totalorder %s111, %s112
    %p124 = scmp.eq.s32.totalorder %s18, 1
    %p125 = por %p123, %p124
    %p127 = scmp.ne.s32.totalorder %s112, %s126
    %p128 = scmp.eq.s32.totalorder %s18, 0
    %p129 = por %p127, %p128
    %s131 = sadd.s32 %s130, 1
    %p134 = scmp.eq.s32.totalorder %s12, 1
    %p135 = scmp.ne.s32.totalorder %s130, %s132
    %p136 = scmp.eq.s32.totalorder %s12, 0
    %p137 = por %p135, %p136
    %p138 = scmp.ne.s32.totalorder %s130, %s132
    %p139 = scmp.eq.s32.totalorder %s17, 1
    %p140 = por %p138, %p139
    %p141 = scmp.ne.s32.totalorder %s132, %s133
    %p142 = scmp.eq.s32.totalorder %s17, 0
    %p143 = por %p141, %p142
    %p144 = scmp.ne.s32.totalorder %s132, %s133
    %p145 = scmp.eq.s32.totalorder %s18, 1
    %p146 = por %p144, %p145
    %p148 = scmp.ne.s32.totalorder %s133, %s147
    %p149 = scmp.eq.s32.totalorder %s18, 0
    %p150 = por %p148, %p149
    %s151 = ssub.s32 %s12, %s19
    %p152 = scmp.eq.s32.totalorder %s151, 0
    %s154 = sadd.s32 %s153, 1
    %s155 = scalar_select %p152, %s153, %s154
    %p158 = pneg %p152
    %p159 = scmp.eq.s32.totalorder %s12, 1
    %p160 = por %p158, %p159
    %p161 = scmp.ne.s32.totalorder %s153, %s156
    %p162 = scmp.eq.s32.totalorder %s12, 0
    %p163 = por %p161, %p162
    %p164 = scmp.ne.s32.totalorder %s153, %s156
    %p165 = scmp.eq.s32.totalorder %s17, 1
    %p166 = por %p164, %p165
    %p167 = scmp.ne.s32.totalorder %s156, %s157
    %p168 = scmp.eq.s32.totalorder %s17, 0
    %p169 = por %p167, %p168
    %p170 = scmp.ne.s32.totalorder %s156, %s157
    %p171 = scmp.eq.s32.totalorder %s18, 1
    %p172 = por %p170, %p171
    %p174 = scmp.ne.s32.totalorder %s157, %s173
    %p175 = scmp.eq.s32.totalorder %s18, 0
    %p176 = por %p174, %p175
    %p177 = scmp.le.s32.totalorder 1, %s12
    %p178 = scmp.lt.s32.totalorder %s12, 3
    %p179 = pnand %p177, %p178
    %p180 = pneg %p179
    // Predicated region
    $region9: #{res_block_forward.1} parent=5 // pred_check
      _
    $region10: #{res_block_forward.1} parent=5 // pred_check_branch
      %182 = sbr.rel (%p179) target = $region12
    $region11: #{res_block_forward.1} parent=5 // pred_region
      %s183 = ssub.s32 %s12, 1
      // Predicated region
      $region13: #{res_block_forward.1} parent=11 // pred_check
        %p184 = pneg %p59
      $region14: #{res_block_forward.1} parent=11 // pred_check_branch
        %186 = sbr.rel (%p184) target = $region16
      $region15: #{res_block_forward.1} parent=11 // pred_region
        _
      $region16: #{res_block_forward.1} parent=11 // pred_fallthru
        _
      // Predicated region
      $region17: #{res_block_forward.1} parent=11 // pred_check
        %p187 = pneg %p80
      $region18: #{res_block_forward.1} parent=11 // pred_check_branch
        %189 = sbr.rel (%p187) target = $region20
      $region19: #{res_block_forward.1} parent=11 // pred_region
        _
      $region20: #{res_block_forward.1} parent=11 // pred_fallthru
        _
      // Predicated region
      $region21: #{res_block_forward.1} parent=11 // pred_check
        %p190 = pneg %p101
      $region22: #{res_block_forward.1} parent=11 // pred_check_branch
        %192 = sbr.rel (%p190) target = $region24
      $region23: #{res_block_forward.1} parent=11 // pred_region
        _
      $region24: #{res_block_forward.1} parent=11 // pred_fallthru
        _
      // Predicated region
      $region25: #{res_block_forward.1} parent=11 // pred_check
        %p193 = pneg %p122
      $region26: #{res_block_forward.1} parent=11 // pred_check_branch
        %195 = sbr.rel (%p193) target = $region28
      $region27: #{res_block_forward.1} parent=11 // pred_region
        _
      $region28: #{res_block_forward.1} parent=11 // pred_fallthru
        _
      // Predicated region
      $region29: #{res_block_forward.1} parent=11 // pred_check
        %p196 = pneg %p143
      $region30: #{res_block_forward.1} parent=11 // pred_check_branch
        %198 = sbr.rel (%p196) target = $region32
      $region31: #{res_block_forward.1} parent=11 // pred_region
        _
      $region32: #{res_block_forward.1} parent=11 // pred_fallthru
        _
    $region12: #{res_block_forward.1} parent=5 // pred_fallthru
      _
    %p199 = scmp.lt.s32.totalorder %s12, 2
    // Predicated region
    $region33: #{res_block_forward.1} parent=5 // pred_check
      %p200 = pneg %p199
    $region34: #{res_block_forward.1} parent=5 // pred_check_branch
      %202 = sbr.rel (%p200) target = $region36
    $region35: #{res_block_forward.1} parent=5 // pred_region
      // Predicated region
      $region37: #{res_block_forward.1} parent=35 // pred_check
        %p203 = pneg %p32
      $region38: #{res_block_forward.1} parent=35 // pred_check_branch
        %205 = sbr.rel (%p203) target = $region40
      $region39: #{res_block_forward.1} parent=35 // pred_region
        %p206 = scmp.lt.s32.totalorder %s12, 1
        %s207 = scalar_select %p206, %s12, 1
        %s208 = smul.addr %s207, 32
        %s209 = smul.addr %s208, 8
        %s210 = scalar_lea.vmem %s0, %s209
      $region40: #{res_block_forward.1} parent=35 // pred_fallthru
        _
    $region36: #{res_block_forward.1} parent=5 // pred_fallthru
      _
    %p211 = scmp.le.s32.totalorder 1, %s12
    %p212 = scmp.lt.s32.totalorder %s12, 3
    %p213 = pnand %p211, %p212
    %p214 = pneg %p213
    // Predicated region
    $region41: #{res_block_forward.1} parent=5 // pred_check
      _
    $region42: #{res_block_forward.1} parent=5 // pred_check_branch
      %216 = sbr.rel (%p213) target = $region44
    $region43: #{res_block_forward.1} parent=5 // pred_region
      %s217 = ssub.s32 %s12, 1
      %p218 = scmp.lt.s32.totalorder %s17, 1
      %s219 = scalar_select %p218, %s17, 1
      %s220 = smul.addr %s219, 32
      %s221 = smul.addr %s220, 8
      %s222 = scalar_lea.vmem %s0, %s221
      %p223 = pneg %p38
      %p224 = pneg %p35
      %p225 = pneg %p59
      %p226 = pneg %p56
      %p227 = pneg %p80
      %p228 = pneg %p77
      %p229 = pneg %p101
      %p230 = pneg %p98
      %p231 = pneg %p122
      %p232 = pneg %p119
      %p233 = pneg %p143
      %p234 = pneg %p140
      %p235 = pneg %p169
      %p236 = pneg %p166
      %p237 = scmp.lt.s32.totalorder %s17, 1
      %s238 = scalar_select %p237, %s17, 1
      %s239 = smul.addr %s238, 32
      %s240 = smul.addr %s239, 8
      %s241 = scalar_lea.vmem %s6, %s240
      %p242 = scmp.lt.s32.totalorder %s17, 1
      %s243 = scalar_select %p242, %s17, 1
      %s244 = smul.addr %s243, 32
      %s245 = smul.addr %s244, 8
      %s246 = scalar_lea.vmem %s0, %s245
      %p247 = scmp.lt.s32.totalorder %s17, 1
      %s248 = scalar_select %p247, %s17, 1
      %s249 = smul.addr %s248, 32
      %s250 = smul.addr %s249, 8
      %s251 = scalar_lea.vmem %s6, %s250
      %v252 = vld [vmem:[%s246] sm:$0xff]
      %v253 = vld [vmem:[%s246 + $0x8] sm:$0xff]
      %v254 = vld [vmem:[%s246 + $0x10] sm:$0xff]
      %v255 = vld [vmem:[%s246 + $0x18] sm:$0xff]
      %v256 = vld [vmem:[%s246 + $0x20] sm:$0xff]
      %v257 = vld [vmem:[%s246 + $0x28] sm:$0xff]
      %v258 = vld [vmem:[%s246 + $0x30] sm:$0xff]
      %v259 = vld [vmem:[%s246 + $0x38] sm:$0xff]
      %v260 = vld [vmem:[%s246 + $0x40] sm:$0xff]
      %v261 = vld [vmem:[%s246 + $0x48] sm:$0xff]
      %v262 = vld [vmem:[%s246 + $0x50] sm:$0xff]
      %v263 = vld [vmem:[%s246 + $0x58] sm:$0xff]
      %v264 = vld [vmem:[%s246 + $0x60] sm:$0xff]
      %v265 = vld [vmem:[%s246 + $0x68] sm:$0xff]
      %v266 = vld [vmem:[%s246 + $0x70] sm:$0xff]
      %v267 = vld [vmem:[%s246 + $0x78] sm:$0xff]
      %v268 = vld [vmem:[%s246 + $0x80] sm:$0xff]
      %v269 = vld [vmem:[%s246 + $0x88] sm:$0xff]
      %v270 = vld [vmem:[%s246 + $0x90] sm:$0xff]
      %v271 = vld [vmem:[%s246 + $0x98] sm:$0xff]
      %v272 = vld [vmem:[%s246 + $0xa0] sm:$0xff]
      %v273 = vld [vmem:[%s246 + $0xa8] sm:$0xff]
      %v274 = vld [vmem:[%s246 + $0xb0] sm:$0xff]
      %v275 = vld [vmem:[%s246 + $0xb8] sm:$0xff]
      %v276 = vld [vmem:[%s246 + $0xc0] sm:$0xff]
      %v277 = vld [vmem:[%s246 + $0xc8] sm:$0xff]
      %v278 = vld [vmem:[%s246 + $0xd0] sm:$0xff]
      %v279 = vld [vmem:[%s246 + $0xd8] sm:$0xff]
      %v280 = vld [vmem:[%s246 + $0xe0] sm:$0xff]
      %v281 = vld [vmem:[%s246 + $0xe8] sm:$0xff]
      %v282 = vld [vmem:[%s246 + $0xf0] sm:$0xff]
      %v283 = vld [vmem:[%s246 + $0xf8] sm:$0xff]
      %vm284 = vcmask 261120
      %285 = vst.msk [vmem:[#allocation2] sm:$0xff] %vm284, 0.0
      %286 = vst.msk [vmem:[#allocation2 + $0x8] sm:$0xff] %vm284, 0.0
      %vm287 = vcmask 254976
      %288 = vst.msk [vmem:[#allocation2 + $0x10] sm:$0x3] %vm287, 0.0
      %s289 = scalar_lea.vmem [#allocation2], 408
      %290 = vst.msk [vmem:[%s289] sm:$0xff] %vm284, 0.0
      %291 = vst.msk [vmem:[%s289 + $0x8] sm:$0xff] %vm284, 0.0
      %292 = vst.msk [vmem:[%s289 + $0x10] sm:$0x3] %vm287, 0.0
      %vm325 = vcmask 1040384
      %v326 = vrot.slane %v252, 7
      %v327 = vrot.slane %v253, 7
      %v328 = vsel %vm325, %v326, %v327
      %v329 = vrot.slane %v254, 7
      %v330 = vrot.slane %v255, 7
      %v331 = vsel %vm325, %v329, %v330
      %v332 = vrot.slane %v256, 7
      %v333 = vrot.slane %v257, 7
      %v334 = vsel %vm325, %v332, %v333
      %v335 = vrot.slane %v258, 7
      %v336 = vrot.slane %v259, 7
      %v337 = vsel %vm325, %v335, %v336
      %v338 = vrot.slane %v260, 7
      %v339 = vrot.slane %v261, 7
      %v340 = vsel %vm325, %v338, %v339
      %v341 = vrot.slane %v262, 7
      %v342 = vrot.slane %v263, 7
      %v343 = vsel %vm325, %v341, %v342
      %v344 = vrot.slane %v264, 7
      %v345 = vrot.slane %v265, 7
      %v346 = vsel %vm325, %v344, %v345
      %v347 = vrot.slane %v266, 7
      %v348 = vrot.slane %v267, 7
      %v349 = vsel %vm325, %v347, %v348
      %v350 = vrot.slane %v268, 7
      %v351 = vrot.slane %v269, 7
      %v352 = vsel %vm325, %v350, %v351
      %v353 = vrot.slane %v270, 7
      %v354 = vrot.slane %v271, 7
      %v355 = vsel %vm325, %v353, %v354
      %v356 = vrot.slane %v272, 7
      %v357 = vrot.slane %v273, 7
      %v358 = vsel %vm325, %v356, %v357
      %v359 = vrot.slane %v274, 7
      %v360 = vrot.slane %v275, 7
      %v361 = vsel %vm325, %v359, %v360
      %v362 = vrot.slane %v276, 7
      %v363 = vrot.slane %v277, 7
      %v364 = vsel %vm325, %v362, %v363
      %v365 = vrot.slane %v278, 7
      %v366 = vrot.slane %v279, 7
      %v367 = vsel %vm325, %v365, %v366
      %v368 = vrot.slane %v280, 7
      %v369 = vrot.slane %v281, 7
      %v370 = vsel %vm325, %v368, %v369
      %v371 = vrot.slane %v282, 7
      %v372 = vrot.slane %v283, 7
      %v373 = vsel %vm325, %v371, %v372
      %v422 = vsel %vm325, 0.0, %v326
      %v423 = vsel %vm325, 0.0, %v329
      %v424 = vsel %vm325, 0.0, %v332
      %v425 = vsel %vm325, 0.0, %v335
      %v426 = vsel %vm325, 0.0, %v338
      %v427 = vsel %vm325, 0.0, %v341
      %v428 = vsel %vm325, 0.0, %v344
      %v429 = vsel %vm325, 0.0, %v347
      %v430 = vsel %vm325, 0.0, %v350
      %v431 = vsel %vm325, 0.0, %v353
      %v432 = vsel %vm325, 0.0, %v356
      %v433 = vsel %vm325, 0.0, %v359
      %v434 = vsel %vm325, 0.0, %v362
      %v435 = vsel %vm325, 0.0, %v365
      %v436 = vsel %vm325, 0.0, %v368
      %v437 = vsel %vm325, 0.0, %v371
      %v438 = vsel %vm325, %v327, 0.0
      %v439 = vsel %vm325, %v330, 0.0
      %v440 = vsel %vm325, %v333, 0.0
      %v441 = vsel %vm325, %v336, 0.0
      %v442 = vsel %vm325, %v339, 0.0
      %v443 = vsel %vm325, %v342, 0.0
      %v444 = vsel %vm325, %v345, 0.0
      %v445 = vsel %vm325, %v348, 0.0
      %v446 = vsel %vm325, %v351, 0.0
      %v447 = vsel %vm325, %v354, 0.0
      %v448 = vsel %vm325, %v357, 0.0
      %v449 = vsel %vm325, %v360, 0.0
      %v450 = vsel %vm325, %v363, 0.0
      %v451 = vsel %vm325, %v366, 0.0
      %v452 = vsel %vm325, %v369, 0.0
      %v453 = vsel %vm325, %v372, 0.0
      %s454 = scalar_lea.vmem [#allocation2], 24
      %455 = vst.msk [vmem:[%s454] sm:$0xff] %vm284, %v422
      %456 = vst.msk [vmem:[%s454 + $0x8] sm:$0xff] %vm284, %v328
      %457 = vst.msk [vmem:[%s454 + $0x10] sm:$0x3] %vm287, %v438
      %458 = vst.msk [vmem:[%s454 + $0x18] sm:$0xff] %vm284, %v423
      %459 = vst.msk [vmem:[%s454 + $0x20] sm:$0xff] %vm284, %v331
      %460 = vst.msk [vmem:[%s454 + $0x28] sm:$0x3] %vm287, %v439
      %461 = vst.msk [vmem:[%s454 + $0x30] sm:$0xff] %vm284, %v424
      %462 = vst.msk [vmem:[%s454 + $0x38] sm:$0xff] %vm284, %v334
      %463 = vst.msk [vmem:[%s454 + $0x40] sm:$0x3] %vm287, %v440
      %464 = vst.msk [vmem:[%s454 + $0x48] sm:$0xff] %vm284, %v425
      %465 = vst.msk [vmem:[%s454 + $0x50] sm:$0xff] %vm284, %v337
      %466 = vst.msk [vmem:[%s454 + $0x58] sm:$0x3] %vm287, %v441
      %467 = vst.msk [vmem:[%s454 + $0x60] sm:$0xff] %vm284, %v426
      %468 = vst.msk [vmem:[%s454 + $0x68] sm:$0xff] %vm284, %v340
      %469 = vst.msk [vmem:[%s454 + $0x70] sm:$0x3] %vm287, %v442
      %470 = vst.msk [vmem:[%s454 + $0x78] sm:$0xff] %vm284, %v427
      %471 = vst.msk [vmem:[%s454 + $0x80] sm:$0xff] %vm284, %v343
      %472 = vst.msk [vmem:[%s454 + $0x88] sm:$0x3] %vm287, %v443
      %473 = vst.msk [vmem:[%s454 + $0x90] sm:$0xff] %vm284, %v428
      %474 = vst.msk [vmem:[%s454 + $0x98] sm:$0xff] %vm284, %v346
      %475 = vst.msk [vmem:[%s454 + $0xa0] sm:$0x3] %vm287, %v444
      %476 = vst.msk [vmem:[%s454 + $0xa8] sm:$0xff] %vm284, %v429
      %477 = vst.msk [vmem:[%s454 + $0xb0] sm:$0xff] %vm284, %v349
      %478 = vst.msk [vmem:[%s454 + $0xb8] sm:$0x3] %vm287, %v445
      %479 = vst.msk [vmem:[%s454 + $0xc0] sm:$0xff] %vm284, %v430
      %480 = vst.msk [vmem:[%s454 + $0xc8] sm:$0xff] %vm284, %v352
      %481 = vst.msk [vmem:[%s454 + $0xd0] sm:$0x3] %vm287, %v446
      %482 = vst.msk [vmem:[%s454 + $0xd8] sm:$0xff] %vm284, %v431
      %483 = vst.msk [vmem:[%s454 + $0xe0] sm:$0xff] %vm284, %v355
      %484 = vst.msk [vmem:[%s454 + $0xe8] sm:$0x3] %vm287, %v447
      %485 = vst.msk [vmem:[%s454 + $0xf0] sm:$0xff] %vm284, %v432
      %486 = vst.msk [vmem:[%s454 + $0xf8] sm:$0xff] %vm284, %v358
      %487 = vst.msk [vmem:[%s454 + $0x100] sm:$0x3] %vm287, %v448
      %488 = vst.msk [vmem:[%s454 + $0x108] sm:$0xff] %vm284, %v433
      %489 = vst.msk [vmem:[%s454 + $0x110] sm:$0xff] %vm284, %v361
      %490 = vst.msk [vmem:[%s454 + $0x118] sm:$0x3] %vm287, %v449
      %491 = vst.msk [vmem:[%s454 + $0x120] sm:$0xff] %vm284, %v434
      %492 = vst.msk [vmem:[%s454 + $0x128] sm:$0xff] %vm284, %v364
      %493 = vst.msk [vmem:[%s454 + $0x130] sm:$0x3] %vm287, %v450
      %494 = vst.msk [vmem:[%s454 + $0x138] sm:$0xff] %vm284, %v435
      %495 = vst.msk [vmem:[%s454 + $0x140] sm:$0xff] %vm284, %v367
      %496 = vst.msk [vmem:[%s454 + $0x148] sm:$0x3] %vm287, %v451
      %497 = vst.msk [vmem:[%s454 + $0x150] sm:$0xff] %vm284, %v436
      %498 = vst.msk [vmem:[%s454 + $0x158] sm:$0xff] %vm284, %v370
      %499 = vst.msk [vmem:[%s454 + $0x160] sm:$0x3] %vm287, %v452
      %500 = vst.msk [vmem:[%s454 + $0x168] sm:$0xff] %vm284, %v437
      %501 = vst.msk [vmem:[%s454 + $0x170] sm:$0xff] %vm284, %v373
      %502 = vst.msk [vmem:[%s454 + $0x178] sm:$0x3] %vm287, %v453
      %v503 = vld [vmem:[#allocation2] sm:$0xff]
      %v504 = vld [vmem:[#allocation2 + $0x8] sm:$0xff]
      %v505 = vld [vmem:[#allocation2 + $0x18] sm:$0xff]
      %v506 = vld [vmem:[#allocation2 + $0x20] sm:$0xff]
      %v507 = vld [vmem:[#allocation2 + $0x30] sm:$0xff]
      %v508 = vld [vmem:[#allocation2 + $0x38] sm:$0xff]
      %v509 = vld [vmem:[#allocation2 + $0x48] sm:$0xff]
      %v510 = vld [vmem:[#allocation2 + $0x50] sm:$0xff]
      %v511 = vld [vmem:[#allocation2 + $0x60] sm:$0xff]
      %v512 = vld [vmem:[#allocation2 + $0x68] sm:$0xff]
      %v513 = vld [vmem:[#allocation2 + $0x78] sm:$0xff]
      %v514 = vld [vmem:[#allocation2 + $0x80] sm:$0xff]
      %v515 = vld [vmem:[#allocation2 + $0x90] sm:$0xff]
      %v516 = vld [vmem:[#allocation2 + $0x98] sm:$0xff]
      %v517 = vld [vmem:[#allocation2 + $0xa8] sm:$0xff]
      %v518 = vld [vmem:[#allocation2 + $0xb0] sm:$0xff]
      %v519 = vld [vmem:[#allocation2 + $0xc0] sm:$0xff]
      %v520 = vld [vmem:[#allocation2 + $0xc8] sm:$0xff]
      %v521 = vld [vmem:[#allocation2 + $0xd8] sm:$0xff]
      %v522 = vld [vmem:[#allocation2 + $0xe0] sm:$0xff]
      %v523 = vld [vmem:[#allocation2 + $0xf0] sm:$0xff]
      %v524 = vld [vmem:[#allocation2 + $0xf8] sm:$0xff]
      %v525 = vld [vmem:[#allocation2 + $0x108] sm:$0xff]
      %v526 = vld [vmem:[#allocation2 + $0x110] sm:$0xff]
      %v527 = vld [vmem:[#allocation2 + $0x120] sm:$0xff]
      %v528 = vld [vmem:[#allocation2 + $0x128] sm:$0xff]
      %v529 = vld [vmem:[#allocation2 + $0x138] sm:$0xff]
      %v530 = vld [vmem:[#allocation2 + $0x140] sm:$0xff]
      %v531 = vld [vmem:[#allocation2 + $0x150] sm:$0xff]
      %v532 = vld [vmem:[#allocation2 + $0x158] sm:$0xff]
      %v533 = vld [vmem:[#allocation2 + $0x168] sm:$0xff]
      %v534 = vld [vmem:[#allocation2 + $0x170] sm:$0xff]
      %v535 = vld [vmem:[#allocation2 + $0x1] sm:$0xff]
      %v536 = vld [vmem:[#allocation2 + $0x9] sm:$0xff]
      %v537 = vld [vmem:[#allocation2 + $0x19] sm:$0xff]
      %v538 = vld [vmem:[#allocation2 + $0x21] sm:$0xff]
      %v539 = vld [vmem:[#allocation2 + $0x31] sm:$0xff]
      %v540 = vld [vmem:[#allocation2 + $0x39] sm:$0xff]
      %v541 = vld [vmem:[#allocation2 + $0x49] sm:$0xff]
      %v542 = vld [vmem:[#allocation2 + $0x51] sm:$0xff]
      %v543 = vld [vmem:[#allocation2 + $0x61] sm:$0xff]
      %v544 = vld [vmem:[#allocation2 + $0x69] sm:$0xff]
      %v545 = vld [vmem:[#allocation2 + $0x79] sm:$0xff]
      %v546 = vld [vmem:[#allocation2 + $0x81] sm:$0xff]
      %v547 = vld [vmem:[#allocation2 + $0x91] sm:$0xff]
      %v548 = vld [vmem:[#allocation2 + $0x99] sm:$0xff]
      %v549 = vld [vmem:[#allocation2 + $0xa9] sm:$0xff]
      %v550 = vld [vmem:[#allocation2 + $0xb1] sm:$0xff]
      %v551 = vld [vmem:[#allocation2 + $0xc1] sm:$0xff]
      %v552 = vld [vmem:[#allocation2 + $0xc9] sm:$0xff]
      %v553 = vld [vmem:[#allocation2 + $0xd9] sm:$0xff]
      %v554 = vld [vmem:[#allocation2 + $0xe1] sm:$0xff]
      %v555 = vld [vmem:[#allocation2 + $0xf1] sm:$0xff]
      %v556 = vld [vmem:[#allocation2 + $0xf9] sm:$0xff]
      %v557 = vld [vmem:[#allocation2 + $0x109] sm:$0xff]
      %v558 = vld [vmem:[#allocation2 + $0x111] sm:$0xff]
      %v559 = vld [vmem:[#allocation2 + $0x121] sm:$0xff]
      %v560 = vld [vmem:[#allocation2 + $0x129] sm:$0xff]
      %v561 = vld [vmem:[#allocation2 + $0x139] sm:$0xff]
      %v562 = vld [vmem:[#allocation2 + $0x141] sm:$0xff]
      %v563 = vld [vmem:[#allocation2 + $0x151] sm:$0xff]
      %v564 = vld [vmem:[#allocation2 + $0x159] sm:$0xff]
      %v565 = vld [vmem:[#allocation2 + $0x169] sm:$0xff]
      %v566 = vld [vmem:[#allocation2 + $0x171] sm:$0xff]
      %v567 = vld [vmem:[#allocation2 + $0x2] sm:$0xff]
      %v568 = vld [vmem:[#allocation2 + $0xa] sm:$0xff]
      %v569 = vld [vmem:[#allocation2 + $0x1a] sm:$0xff]
      %v570 = vld [vmem:[#allocation2 + $0x22] sm:$0xff]
      %v571 = vld [vmem:[#allocation2 + $0x32] sm:$0xff]
      %v572 = vld [vmem:[#allocation2 + $0x3a] sm:$0xff]
      %v573 = vld [vmem:[#allocation2 + $0x4a] sm:$0xff]
      %v574 = vld [vmem:[#allocation2 + $0x52] sm:$0xff]
      %v575 = vld [vmem:[#allocation2 + $0x62] sm:$0xff]
      %v576 = vld [vmem:[#allocation2 + $0x6a] sm:$0xff]
      %v577 = vld [vmem:[#allocation2 + $0x7a] sm:$0xff]
      %v578 = vld [vmem:[#allocation2 + $0x82] sm:$0xff]
      %v579 = vld [vmem:[#allocation2 + $0x92] sm:$0xff]
      %v580 = vld [vmem:[#allocation2 + $0x9a] sm:$0xff]
      %v581 = vld [vmem:[#allocation2 + $0xaa] sm:$0xff]
      %v582 = vld [vmem:[#allocation2 + $0xb2] sm:$0xff]
      %v583 = vld [vmem:[#allocation2 + $0xc2] sm:$0xff]
      %v584 = vld [vmem:[#allocation2 + $0xca] sm:$0xff]
      %v585 = vld [vmem:[#allocation2 + $0xda] sm:$0xff]
      %v586 = vld [vmem:[#allocation2 + $0xe2] sm:$0xff]
      %v587 = vld [vmem:[#allocation2 + $0xf2] sm:$0xff]
      %v588 = vld [vmem:[#allocation2 + $0xfa] sm:$0xff]
      %v589 = vld [vmem:[#allocation2 + $0x10a] sm:$0xff]
      %v590 = vld [vmem:[#allocation2 + $0x112] sm:$0xff]
      %v591 = vld [vmem:[#allocation2 + $0x122] sm:$0xff]
      %v592 = vld [vmem:[#allocation2 + $0x12a] sm:$0xff]
      %v593 = vld [vmem:[#allocation2 + $0x13a] sm:$0xff]
      %v594 = vld [vmem:[#allocation2 + $0x142] sm:$0xff]
      %v595 = vld [vmem:[#allocation2 + $0x152] sm:$0xff]
      %v596 = vld [vmem:[#allocation2 + $0x15a] sm:$0xff]
      %v597 = vld [vmem:[#allocation2 + $0x16a] sm:$0xff]
      %v598 = vld [vmem:[#allocation2 + $0x172] sm:$0xff]
      %v599 = vld [vmem:[%s454] sm:$0xff]
      %v600 = vld [vmem:[%s454 + $0x8] sm:$0xff]
      %v601 = vld [vmem:[%s454 + $0x18] sm:$0xff]
      %v602 = vld [vmem:[%s454 + $0x20] sm:$0xff]
      %v603 = vld [vmem:[%s454 + $0x30] sm:$0xff]
      %v604 = vld [vmem:[%s454 + $0x38] sm:$0xff]
      %v605 = vld [vmem:[%s454 + $0x48] sm:$0xff]
      %v606 = vld [vmem:[%s454 + $0x50] sm:$0xff]
      %v607 = vld [vmem:[%s454 + $0x60] sm:$0xff]
      %v608 = vld [vmem:[%s454 + $0x68] sm:$0xff]
      %v609 = vld [vmem:[%s454 + $0x78] sm:$0xff]
      %v610 = vld [vmem:[%s454 + $0x80] sm:$0xff]
      %v611 = vld [vmem:[%s454 + $0x90] sm:$0xff]
      %v612 = vld [vmem:[%s454 + $0x98] sm:$0xff]
      %v613 = vld [vmem:[%s454 + $0xa8] sm:$0xff]
      %v614 = vld [vmem:[%s454 + $0xb0] sm:$0xff]
      %v615 = vld [vmem:[%s454 + $0xc0] sm:$0xff]
      %v616 = vld [vmem:[%s454 + $0xc8] sm:$0xff]
      %v617 = vld [vmem:[%s454 + $0xd8] sm:$0xff]
      %v618 = vld [vmem:[%s454 + $0xe0] sm:$0xff]
      %v619 = vld [vmem:[%s454 + $0xf0] sm:$0xff]
      %v620 = vld [vmem:[%s454 + $0xf8] sm:$0xff]
      %v621 = vld [vmem:[%s454 + $0x108] sm:$0xff]
      %v622 = vld [vmem:[%s454 + $0x110] sm:$0xff]
      %v623 = vld [vmem:[%s454 + $0x120] sm:$0xff]
      %v624 = vld [vmem:[%s454 + $0x128] sm:$0xff]
      %v625 = vld [vmem:[%s454 + $0x138] sm:$0xff]
      %v626 = vld [vmem:[%s454 + $0x140] sm:$0xff]
      %v627 = vld [vmem:[%s454 + $0x150] sm:$0xff]
      %v628 = vld [vmem:[%s454 + $0x158] sm:$0xff]
      %v629 = vld [vmem:[%s454 + $0x168] sm:$0xff]
      %v630 = vld [vmem:[%s454 + $0x170] sm:$0xff]
      %v631 = vld [vmem:[%s454 + $0x1] sm:$0xff]
      %v632 = vld [vmem:[%s454 + $0x9] sm:$0xff]
      %v633 = vld [vmem:[%s454 + $0x19] sm:$0xff]
      %v634 = vld [vmem:[%s454 + $0x21] sm:$0xff]
      %v635 = vld [vmem:[%s454 + $0x31] sm:$0xff]
      %v636 = vld [vmem:[%s454 + $0x39] sm:$0xff]
      %v637 = vld [vmem:[%s454 + $0x49] sm:$0xff]
      %v638 = vld [vmem:[%s454 + $0x51] sm:$0xff]
      %v639 = vld [vmem:[%s454 + $0x61] sm:$0xff]
      %v640 = vld [vmem:[%s454 + $0x69] sm:$0xff]
      %v641 = vld [vmem:[%s454 + $0x79] sm:$0xff]
      %v642 = vld [vmem:[%s454 + $0x81] sm:$0xff]
      %v643 = vld [vmem:[%s454 + $0x91] sm:$0xff]
      %v644 = vld [vmem:[%s454 + $0x99] sm:$0xff]
      %v645 = vld [vmem:[%s454 + $0xa9] sm:$0xff]
      %v646 = vld [vmem:[%s454 + $0xb1] sm:$0xff]
      %v647 = vld [vmem:[%s454 + $0xc1] sm:$0xff]
      %v648 = vld [vmem:[%s454 + $0xc9] sm:$0xff]
      %v649 = vld [vmem:[%s454 + $0xd9] sm:$0xff]
      %v650 = vld [vmem:[%s454 + $0xe1] sm:$0xff]
      %v651 = vld [vmem:[%s454 + $0xf1] sm:$0xff]
      %v652 = vld [vmem:[%s454 + $0xf9] sm:$0xff]
      %v653 = vld [vmem:[%s454 + $0x109] sm:$0xff]
      %v654 = vld [vmem:[%s454 + $0x111] sm:$0xff]
      %v655 = vld [vmem:[%s454 + $0x121] sm:$0xff]
      %v656 = vld [vmem:[%s454 + $0x129] sm:$0xff]
      %v657 = vld [vmem:[%s454 + $0x139] sm:$0xff]
      %v658 = vld [vmem:[%s454 + $0x141] sm:$0xff]
      %v659 = vld [vmem:[%s454 + $0x151] sm:$0xff]
      %v660 = vld [vmem:[%s454 + $0x159] sm:$0xff]
      %v661 = vld [vmem:[%s454 + $0x169] sm:$0xff]
      %v662 = vld [vmem:[%s454 + $0x171] sm:$0xff]
      %v663 = vld [vmem:[%s454 + $0x2] sm:$0xff]
      %v664 = vld [vmem:[%s454 + $0xa] sm:$0xff]
      %v665 = vld [vmem:[%s454 + $0x1a] sm:$0xff]
      %v666 = vld [vmem:[%s454 + $0x22] sm:$0xff]
      %v667 = vld [vmem:[%s454 + $0x32] sm:$0xff]
      %v668 = vld [vmem:[%s454 + $0x3a] sm:$0xff]
      %v669 = vld [vmem:[%s454 + $0x4a] sm:$0xff]
      %v670 = vld [vmem:[%s454 + $0x52] sm:$0xff]
      %v671 = vld [vmem:[%s454 + $0x62] sm:$0xff]
      %v672 = vld [vmem:[%s454 + $0x6a] sm:$0xff]
      %v673 = vld [vmem:[%s454 + $0x7a] sm:$0xff]
      %v674 = vld [vmem:[%s454 + $0x82] sm:$0xff]
      %v675 = vld [vmem:[%s454 + $0x92] sm:$0xff]
      %v676 = vld [vmem:[%s454 + $0x9a] sm:$0xff]
      %v677 = vld [vmem:[%s454 + $0xaa] sm:$0xff]
      %v678 = vld [vmem:[%s454 + $0xb2] sm:$0xff]
      %v679 = vld [vmem:[%s454 + $0xc2] sm:$0xff]
      %v680 = vld [vmem:[%s454 + $0xca] sm:$0xff]
      %v681 = vld [vmem:[%s454 + $0xda] sm:$0xff]
      %v682 = vld [vmem:[%s454 + $0xe2] sm:$0xff]
      %v683 = vld [vmem:[%s454 + $0xf2] sm:$0xff]
      %v684 = vld [vmem:[%s454 + $0xfa] sm:$0xff]
      %v685 = vld [vmem:[%s454 + $0x10a] sm:$0xff]
      %v686 = vld [vmem:[%s454 + $0x112] sm:$0xff]
      %v687 = vld [vmem:[%s454 + $0x122] sm:$0xff]
      %v688 = vld [vmem:[%s454 + $0x12a] sm:$0xff]
      %v689 = vld [vmem:[%s454 + $0x13a] sm:$0xff]
      %v690 = vld [vmem:[%s454 + $0x142] sm:$0xff]
      %v691 = vld [vmem:[%s454 + $0x152] sm:$0xff]
      %v692 = vld [vmem:[%s454 + $0x15a] sm:$0xff]
      %v693 = vld [vmem:[%s454 + $0x16a] sm:$0xff]
      %v694 = vld [vmem:[%s454 + $0x172] sm:$0xff]
      %s695 = scalar_lea.vmem [#allocation2], 48
      %v696 = vld [vmem:[%s695] sm:$0xff]
      %v697 = vld [vmem:[%s695 + $0x8] sm:$0xff]
      %v698 = vld [vmem:[%s695 + $0x18] sm:$0xff]
      %v699 = vld [vmem:[%s695 + $0x20] sm:$0xff]
      %v700 = vld [vmem:[%s695 + $0x30] sm:$0xff]
      %v701 = vld [vmem:[%s695 + $0x38] sm:$0xff]
      %v702 = vld [vmem:[%s695 + $0x48] sm:$0xff]
      %v703 = vld [vmem:[%s695 + $0x50] sm:$0xff]
      %v704 = vld [vmem:[%s695 + $0x60] sm:$0xff]
      %v705 = vld [vmem:[%s695 + $0x68] sm:$0xff]
      %v706 = vld [vmem:[%s695 + $0x78] sm:$0xff]
      %v707 = vld [vmem:[%s695 + $0x80] sm:$0xff]
      %v708 = vld [vmem:[%s695 + $0x90] sm:$0xff]
      %v709 = vld [vmem:[%s695 + $0x98] sm:$0xff]
      %v710 = vld [vmem:[%s695 + $0xa8] sm:$0xff]
      %v711 = vld [vmem:[%s695 + $0xb0] sm:$0xff]
      %v712 = vld [vmem:[%s695 + $0xc0] sm:$0xff]
      %v713 = vld [vmem:[%s695 + $0xc8] sm:$0xff]
      %v714 = vld [vmem:[%s695 + $0xd8] sm:$0xff]
      %v715 = vld [vmem:[%s695 + $0xe0] sm:$0xff]
      %v716 = vld [vmem:[%s695 + $0xf0] sm:$0xff]
      %v717 = vld [vmem:[%s695 + $0xf8] sm:$0xff]
      %v718 = vld [vmem:[%s695 + $0x108] sm:$0xff]
      %v719 = vld [vmem:[%s695 + $0x110] sm:$0xff]
      %v720 = vld [vmem:[%s695 + $0x120] sm:$0xff]
      %v721 = vld [vmem:[%s695 + $0x128] sm:$0xff]
      %v722 = vld [vmem:[%s695 + $0x138] sm:$0xff]
      %v723 = vld [vmem:[%s695 + $0x140] sm:$0xff]
      %v724 = vld [vmem:[%s695 + $0x150] sm:$0xff]
      %v725 = vld [vmem:[%s695 + $0x158] sm:$0xff]
      %v726 = vld [vmem:[%s695 + $0x168] sm:$0xff]
      %v727 = vld [vmem:[%s695 + $0x170] sm:$0xff]
      %v728 = vld [vmem:[%s695 + $0x1] sm:$0xff]
      %v729 = vld [vmem:[%s695 + $0x9] sm:$0xff]
      %v730 = vld [vmem:[%s695 + $0x19] sm:$0xff]
      %v731 = vld [vmem:[%s695 + $0x21] sm:$0xff]
      %v732 = vld [vmem:[%s695 + $0x31] sm:$0xff]
      %v733 = vld [vmem:[%s695 + $0x39] sm:$0xff]
      %v734 = vld [vmem:[%s695 + $0x49] sm:$0xff]
      %v735 = vld [vmem:[%s695 + $0x51] sm:$0xff]
      %v736 = vld [vmem:[%s695 + $0x61] sm:$0xff]
      %v737 = vld [vmem:[%s695 + $0x69] sm:$0xff]
      %v738 = vld [vmem:[%s695 + $0x79] sm:$0xff]
      %v739 = vld [vmem:[%s695 + $0x81] sm:$0xff]
      %v740 = vld [vmem:[%s695 + $0x91] sm:$0xff]
      %v741 = vld [vmem:[%s695 + $0x99] sm:$0xff]
      %v742 = vld [vmem:[%s695 + $0xa9] sm:$0xff]
      %v743 = vld [vmem:[%s695 + $0xb1] sm:$0xff]
      %v744 = vld [vmem:[%s695 + $0xc1] sm:$0xff]
      %v745 = vld [vmem:[%s695 + $0xc9] sm:$0xff]
      %v746 = vld [vmem:[%s695 + $0xd9] sm:$0xff]
      %v747 = vld [vmem:[%s695 + $0xe1] sm:$0xff]
      %v748 = vld [vmem:[%s695 + $0xf1] sm:$0xff]
      %v749 = vld [vmem:[%s695 + $0xf9] sm:$0xff]
      %v750 = vld [vmem:[%s695 + $0x109] sm:$0xff]
      %v751 = vld [vmem:[%s695 + $0x111] sm:$0xff]
      %v752 = vld [vmem:[%s695 + $0x121] sm:$0xff]
      %v753 = vld [vmem:[%s695 + $0x129] sm:$0xff]
      %v754 = vld [vmem:[%s695 + $0x139] sm:$0xff]
      %v755 = vld [vmem:[%s695 + $0x141] sm:$0xff]
      %v756 = vld [vmem:[%s695 + $0x151] sm:$0xff]
      %v757 = vld [vmem:[%s695 + $0x159] sm:$0xff]
      %v758 = vld [vmem:[%s695 + $0x169] sm:$0xff]
      %v759 = vld [vmem:[%s695 + $0x171] sm:$0xff]
      %v760 = vld [vmem:[%s695 + $0x2] sm:$0xff]
      %v761 = vld [vmem:[%s695 + $0xa] sm:$0xff]
      %v762 = vld [vmem:[%s695 + $0x1a] sm:$0xff]
      %v763 = vld [vmem:[%s695 + $0x22] sm:$0xff]
      %v764 = vld [vmem:[%s695 + $0x32] sm:$0xff]
      %v765 = vld [vmem:[%s695 + $0x3a] sm:$0xff]
      %v766 = vld [vmem:[%s695 + $0x4a] sm:$0xff]
      %v767 = vld [vmem:[%s695 + $0x52] sm:$0xff]
      %v768 = vld [vmem:[%s695 + $0x62] sm:$0xff]
      %v769 = vld [vmem:[%s695 + $0x6a] sm:$0xff]
      %v770 = vld [vmem:[%s695 + $0x7a] sm:$0xff]
      %v771 = vld [vmem:[%s695 + $0x82] sm:$0xff]
      %v772 = vld [vmem:[%s695 + $0x92] sm:$0xff]
      %v773 = vld [vmem:[%s695 + $0x9a] sm:$0xff]
      %v774 = vld [vmem:[%s695 + $0xaa] sm:$0xff]
      %v775 = vld [vmem:[%s695 + $0xb2] sm:$0xff]
      %v776 = vld [vmem:[%s695 + $0xc2] sm:$0xff]
      %v777 = vld [vmem:[%s695 + $0xca] sm:$0xff]
      %v778 = vld [vmem:[%s695 + $0xda] sm:$0xff]
      %v779 = vld [vmem:[%s695 + $0xe2] sm:$0xff]
      %v780 = vld [vmem:[%s695 + $0xf2] sm:$0xff]
      %v781 = vld [vmem:[%s695 + $0xfa] sm:$0xff]
      %v782 = vld [vmem:[%s695 + $0x10a] sm:$0xff]
      %v783 = vld [vmem:[%s695 + $0x112] sm:$0xff]
      %v784 = vld [vmem:[%s695 + $0x122] sm:$0xff]
      %v785 = vld [vmem:[%s695 + $0x12a] sm:$0xff]
      %v786 = vld [vmem:[%s695 + $0x13a] sm:$0xff]
      %v787 = vld [vmem:[%s695 + $0x142] sm:$0xff]
      %v788 = vld [vmem:[%s695 + $0x152] sm:$0xff]
      %v789 = vld [vmem:[%s695 + $0x15a] sm:$0xff]
      %v790 = vld [vmem:[%s695 + $0x16a] sm:$0xff]
      %v791 = vld [vmem:[%s695 + $0x172] sm:$0xff]
      %824 = vrot.lane.b32.xlu0 %v535, 32
      %v825 = vpop.permute.xlu0 %824
      %826 = vrot.lane.b32.xlu0 %v536, 32
      %v827 = vpop.permute.xlu0 %826
      %828 = vrot.lane.b32.xlu0 %v537, 32
      %v829 = vpop.permute.xlu0 %828
      %830 = vrot.lane.b32.xlu0 %v538, 32
      %v831 = vpop.permute.xlu0 %830
      %832 = vrot.lane.b32.xlu0 %v539, 32
      %v833 = vpop.permute.xlu0 %832
      %834 = vrot.lane.b32.xlu0 %v540, 32
      %v835 = vpop.permute.xlu0 %834
      %836 = vrot.lane.b32.xlu0 %v541, 32
      %v837 = vpop.permute.xlu0 %836
      %838 = vrot.lane.b32.xlu0 %v542, 32
      %v839 = vpop.permute.xlu0 %838
      %840 = vrot.lane.b32.xlu0 %v543, 32
      %v841 = vpop.permute.xlu0 %840
      %842 = vrot.lane.b32.xlu0 %v544, 32
      %v843 = vpop.permute.xlu0 %842
      %844 = vrot.lane.b32.xlu0 %v545, 32
      %v845 = vpop.permute.xlu0 %844
      %846 = vrot.lane.b32.xlu0 %v546, 32
      %v847 = vpop.permute.xlu0 %846
      %848 = vrot.lane.b32.xlu0 %v547, 32
      %v849 = vpop.permute.xlu0 %848
      %850 = vrot.lane.b32.xlu0 %v548, 32
      %v851 = vpop.permute.xlu0 %850
      %852 = vrot.lane.b32.xlu0 %v549, 32
      %v853 = vpop.permute.xlu0 %852
      %854 = vrot.lane.b32.xlu0 %v550, 32
      %v855 = vpop.permute.xlu0 %854
      %856 = vrot.lane.b32.xlu0 %v551, 32
      %v857 = vpop.permute.xlu0 %856
      %858 = vrot.lane.b32.xlu0 %v552, 32
      %v859 = vpop.permute.xlu0 %858
      %860 = vrot.lane.b32.xlu0 %v553, 32
      %v861 = vpop.permute.xlu0 %860
      %862 = vrot.lane.b32.xlu0 %v554, 32
      %v863 = vpop.permute.xlu0 %862
      %864 = vrot.lane.b32.xlu0 %v555, 32
      %v865 = vpop.permute.xlu0 %864
      %866 = vrot.lane.b32.xlu0 %v556, 32
      %v867 = vpop.permute.xlu0 %866
      %868 = vrot.lane.b32.xlu0 %v557, 32
      %v869 = vpop.permute.xlu0 %868
      %870 = vrot.lane.b32.xlu0 %v558, 32
      %v871 = vpop.permute.xlu0 %870
      %872 = vrot.lane.b32.xlu0 %v559, 32
      %v873 = vpop.permute.xlu0 %872
      %874 = vrot.lane.b32.xlu0 %v560, 32
      %v875 = vpop.permute.xlu0 %874
      %876 = vrot.lane.b32.xlu0 %v561, 32
      %v877 = vpop.permute.xlu0 %876
      %878 = vrot.lane.b32.xlu0 %v562, 32
      %v879 = vpop.permute.xlu0 %878
      %880 = vrot.lane.b32.xlu0 %v563, 32
      %v881 = vpop.permute.xlu0 %880
      %882 = vrot.lane.b32.xlu0 %v564, 32
      %v883 = vpop.permute.xlu0 %882
      %884 = vrot.lane.b32.xlu0 %v565, 32
      %v885 = vpop.permute.xlu0 %884
      %886 = vrot.lane.b32.xlu0 %v566, 32
      %v887 = vpop.permute.xlu0 %886
      %952 = vrot.lane.b32.xlu0 %v567, 64
      %v953 = vpop.permute.xlu0 %952
      %954 = vrot.lane.b32.xlu0 %v568, 64
      %v955 = vpop.permute.xlu0 %954
      %956 = vrot.lane.b32.xlu0 %v569, 64
      %v957 = vpop.permute.xlu0 %956
      %958 = vrot.lane.b32.xlu0 %v570, 64
      %v959 = vpop.permute.xlu0 %958
      %960 = vrot.lane.b32.xlu0 %v571, 64
      %v961 = vpop.permute.xlu0 %960
      %962 = vrot.lane.b32.xlu0 %v572, 64
      %v963 = vpop.permute.xlu0 %962
      %964 = vrot.lane.b32.xlu0 %v573, 64
      %v965 = vpop.permute.xlu0 %964
      %966 = vrot.lane.b32.xlu0 %v574, 64
      %v967 = vpop.permute.xlu0 %966
      %968 = vrot.lane.b32.xlu0 %v575, 64
      %v969 = vpop.permute.xlu0 %968
      %970 = vrot.lane.b32.xlu0 %v576, 64
      %v971 = vpop.permute.xlu0 %970
      %972 = vrot.lane.b32.xlu0 %v577, 64
      %v973 = vpop.permute.xlu0 %972
      %974 = vrot.lane.b32.xlu0 %v578, 64
      %v975 = vpop.permute.xlu0 %974
      %976 = vrot.lane.b32.xlu0 %v579, 64
      %v977 = vpop.permute.xlu0 %976
      %978 = vrot.lane.b32.xlu0 %v580, 64
      %v979 = vpop.permute.xlu0 %978
      %980 = vrot.lane.b32.xlu0 %v581, 64
      %v981 = vpop.permute.xlu0 %980
      %982 = vrot.lane.b32.xlu0 %v582, 64
      %v983 = vpop.permute.xlu0 %982
      %984 = vrot.lane.b32.xlu0 %v583, 64
      %v985 = vpop.permute.xlu0 %984
      %986 = vrot.lane.b32.xlu0 %v584, 64
      %v987 = vpop.permute.xlu0 %986
      %988 = vrot.lane.b32.xlu0 %v585, 64
      %v989 = vpop.permute.xlu0 %988
      %990 = vrot.lane.b32.xlu0 %v586, 64
      %v991 = vpop.permute.xlu0 %990
      %992 = vrot.lane.b32.xlu0 %v587, 64
      %v993 = vpop.permute.xlu0 %992
      %994 = vrot.lane.b32.xlu0 %v588, 64
      %v995 = vpop.permute.xlu0 %994
      %996 = vrot.lane.b32.xlu0 %v589, 64
      %v997 = vpop.permute.xlu0 %996
      %998 = vrot.lane.b32.xlu0 %v590, 64
      %v999 = vpop.permute.xlu0 %998
      %1000 = vrot.lane.b32.xlu0 %v591, 64
      %v1001 = vpop.permute.xlu0 %1000
      %1002 = vrot.lane.b32.xlu0 %v592, 64
      %v1003 = vpop.permute.xlu0 %1002
      %1004 = vrot.lane.b32.xlu0 %v593, 64
      %v1005 = vpop.permute.xlu0 %1004
      %1006 = vrot.lane.b32.xlu0 %v594, 64
      %v1007 = vpop.permute.xlu0 %1006
      %1008 = vrot.lane.b32.xlu0 %v595, 64
      %v1009 = vpop.permute.xlu0 %1008
      %1010 = vrot.lane.b32.xlu0 %v596, 64
      %v1011 = vpop.permute.xlu0 %1010
      %1012 = vrot.lane.b32.xlu0 %v597, 64
      %v1013 = vpop.permute.xlu0 %1012
      %1014 = vrot.lane.b32.xlu0 %v598, 64
      %v1015 = vpop.permute.xlu0 %1014
      %1080 = vrot.lane.b32.xlu0 %v599, 96
      %v1081 = vpop.permute.xlu0 %1080
      %1082 = vrot.lane.b32.xlu0 %v600, 96
      %v1083 = vpop.permute.xlu0 %1082
      %1084 = vrot.lane.b32.xlu0 %v601, 96
      %v1085 = vpop.permute.xlu0 %1084
      %1086 = vrot.lane.b32.xlu0 %v602, 96
      %v1087 = vpop.permute.xlu0 %1086
      %1088 = vrot.lane.b32.xlu0 %v603, 96
      %v1089 = vpop.permute.xlu0 %1088
      %1090 = vrot.lane.b32.xlu0 %v604, 96
      %v1091 = vpop.permute.xlu0 %1090
      %1092 = vrot.lane.b32.xlu0 %v605, 96
      %v1093 = vpop.permute.xlu0 %1092
      %1094 = vrot.lane.b32.xlu0 %v606, 96
      %v1095 = vpop.permute.xlu0 %1094
      %1096 = vrot.lane.b32.xlu0 %v607, 96
      %v1097 = vpop.permute.xlu0 %1096
      %1098 = vrot.lane.b32.xlu0 %v608, 96
      %v1099 = vpop.permute.xlu0 %1098
      %1100 = vrot.lane.b32.xlu0 %v609, 96
      %v1101 = vpop.permute.xlu0 %1100
      %1102 = vrot.lane.b32.xlu0 %v610, 96
      %v1103 = vpop.permute.xlu0 %1102
      %1104 = vrot.lane.b32.xlu0 %v611, 96
      %v1105 = vpop.permute.xlu0 %1104
      %1106 = vrot.lane.b32.xlu0 %v612, 96
      %v1107 = vpop.permute.xlu0 %1106
      %1108 = vrot.lane.b32.xlu0 %v613, 96
      %v1109 = vpop.permute.xlu0 %1108
      %1110 = vrot.lane.b32.xlu0 %v614, 96
      %v1111 = vpop.permute.xlu0 %1110
      %1112 = vrot.lane.b32.xlu0 %v615, 96
      %v1113 = vpop.permute.xlu0 %1112
      %1114 = vrot.lane.b32.xlu0 %v616, 96
      %v1115 = vpop.permute.xlu0 %1114
      %1116 = vrot.lane.b32.xlu0 %v617, 96
      %v1117 = vpop.permute.xlu0 %1116
      %1118 = vrot.lane.b32.xlu0 %v618, 96
      %v1119 = vpop.permute.xlu0 %1118
      %1120 = vrot.lane.b32.xlu0 %v619, 96
      %v1121 = vpop.permute.xlu0 %1120
      %1122 = vrot.lane.b32.xlu0 %v620, 96
      %v1123 = vpop.permute.xlu0 %1122
      %1124 = vrot.lane.b32.xlu0 %v621, 96
      %v1125 = vpop.permute.xlu0 %1124
      %1126 = vrot.lane.b32.xlu0 %v622, 96
      %v1127 = vpop.permute.xlu0 %1126
      %1128 = vrot.lane.b32.xlu0 %v623, 96
      %v1129 = vpop.permute.xlu0 %1128
      %1130 = vrot.lane.b32.xlu0 %v624, 96
      %v1131 = vpop.permute.xlu0 %1130
      %1132 = vrot.lane.b32.xlu0 %v625, 96
      %v1133 = vpop.permute.xlu0 %1132
      %1134 = vrot.lane.b32.xlu0 %v626, 96
      %v1135 = vpop.permute.xlu0 %1134
      %1136 = vrot.lane.b32.xlu0 %v627, 96
      %v1137 = vpop.permute.xlu0 %1136
      %1138 = vrot.lane.b32.xlu0 %v628, 96
      %v1139 = vpop.permute.xlu0 %1138
      %1140 = vrot.lane.b32.xlu0 %v629, 96
      %v1141 = vpop.permute.xlu0 %1140
      %1142 = vrot.lane.b32.xlu0 %v630, 96
      %v1143 = vpop.permute.xlu0 %1142
      %1208 = vrot.lane.b32.xlu0 %v663, 32
      %v1209 = vpop.permute.xlu0 %1208
      %1210 = vrot.lane.b32.xlu0 %v664, 32
      %v1211 = vpop.permute.xlu0 %1210
      %1212 = vrot.lane.b32.xlu0 %v665, 32
      %v1213 = vpop.permute.xlu0 %1212
      %1214 = vrot.lane.b32.xlu0 %v666, 32
      %v1215 = vpop.permute.xlu0 %1214
      %1216 = vrot.lane.b32.xlu0 %v667, 32
      %v1217 = vpop.permute.xlu0 %1216
      %1218 = vrot.lane.b32.xlu0 %v668, 32
      %v1219 = vpop.permute.xlu0 %1218
      %1220 = vrot.lane.b32.xlu0 %v669, 32
      %v1221 = vpop.permute.xlu0 %1220
      %1222 = vrot.lane.b32.xlu0 %v670, 32
      %v1223 = vpop.permute.xlu0 %1222
      %1224 = vrot.lane.b32.xlu0 %v671, 32
      %v1225 = vpop.permute.xlu0 %1224
      %1226 = vrot.lane.b32.xlu0 %v672, 32
      %v1227 = vpop.permute.xlu0 %1226
      %1228 = vrot.lane.b32.xlu0 %v673, 32
      %v1229 = vpop.permute.xlu0 %1228
      %1230 = vrot.lane.b32.xlu0 %v674, 32
      %v1231 = vpop.permute.xlu0 %1230
      %1232 = vrot.lane.b32.xlu0 %v675, 32
      %v1233 = vpop.permute.xlu0 %1232
      %1234 = vrot.lane.b32.xlu0 %v676, 32
      %v1235 = vpop.permute.xlu0 %1234
      %1236 = vrot.lane.b32.xlu0 %v677, 32
      %v1237 = vpop.permute.xlu0 %1236
      %1238 = vrot.lane.b32.xlu0 %v678, 32
      %v1239 = vpop.permute.xlu0 %1238
      %1240 = vrot.lane.b32.xlu0 %v679, 32
      %v1241 = vpop.permute.xlu0 %1240
      %1242 = vrot.lane.b32.xlu0 %v680, 32
      %v1243 = vpop.permute.xlu0 %1242
      %1244 = vrot.lane.b32.xlu0 %v681, 32
      %v1245 = vpop.permute.xlu0 %1244
      %1246 = vrot.lane.b32.xlu0 %v682, 32
      %v1247 = vpop.permute.xlu0 %1246
      %1248 = vrot.lane.b32.xlu0 %v683, 32
      %v1249 = vpop.permute.xlu0 %1248
      %1250 = vrot.lane.b32.xlu0 %v684, 32
      %v1251 = vpop.permute.xlu0 %1250
      %1252 = vrot.lane.b32.xlu0 %v685, 32
      %v1253 = vpop.permute.xlu0 %1252
      %1254 = vrot.lane.b32.xlu0 %v686, 32
      %v1255 = vpop.permute.xlu0 %1254
      %1256 = vrot.lane.b32.xlu0 %v687, 32
      %v1257 = vpop.permute.xlu0 %1256
      %1258 = vrot.lane.b32.xlu0 %v688, 32
      %v1259 = vpop.permute.xlu0 %1258
      %1260 = vrot.lane.b32.xlu0 %v689, 32
      %v1261 = vpop.permute.xlu0 %1260
      %1262 = vrot.lane.b32.xlu0 %v690, 32
      %v1263 = vpop.permute.xlu0 %1262
      %1264 = vrot.lane.b32.xlu0 %v691, 32
      %v1265 = vpop.permute.xlu0 %1264
      %1266 = vrot.lane.b32.xlu0 %v692, 32
      %v1267 = vpop.permute.xlu0 %1266
      %1268 = vrot.lane.b32.xlu0 %v693, 32
      %v1269 = vpop.permute.xlu0 %1268
      %1270 = vrot.lane.b32.xlu0 %v694, 32
      %v1271 = vpop.permute.xlu0 %1270
      %1336 = vrot.lane.b32.xlu0 %v696, 64
      %v1337 = vpop.permute.xlu0 %1336
      %1338 = vrot.lane.b32.xlu0 %v697, 64
      %v1339 = vpop.permute.xlu0 %1338
      %1340 = vrot.lane.b32.xlu0 %v698, 64
      %v1341 = vpop.permute.xlu0 %1340
      %1342 = vrot.lane.b32.xlu0 %v699, 64
      %v1343 = vpop.permute.xlu0 %1342
      %1344 = vrot.lane.b32.xlu0 %v700, 64
      %v1345 = vpop.permute.xlu0 %1344
      %1346 = vrot.lane.b32.xlu0 %v701, 64
      %v1347 = vpop.permute.xlu0 %1346
      %1348 = vrot.lane.b32.xlu0 %v702, 64
      %v1349 = vpop.permute.xlu0 %1348
      %1350 = vrot.lane.b32.xlu0 %v703, 64
      %v1351 = vpop.permute.xlu0 %1350
      %1352 = vrot.lane.b32.xlu0 %v704, 64
      %v1353 = vpop.permute.xlu0 %1352
      %1354 = vrot.lane.b32.xlu0 %v705, 64
      %v1355 = vpop.permute.xlu0 %1354
      %1356 = vrot.lane.b32.xlu0 %v706, 64
      %v1357 = vpop.permute.xlu0 %1356
      %1358 = vrot.lane.b32.xlu0 %v707, 64
      %v1359 = vpop.permute.xlu0 %1358
      %1360 = vrot.lane.b32.xlu0 %v708, 64
      %v1361 = vpop.permute.xlu0 %1360
      %1362 = vrot.lane.b32.xlu0 %v709, 64
      %v1363 = vpop.permute.xlu0 %1362
      %1364 = vrot.lane.b32.xlu0 %v710, 64
      %v1365 = vpop.permute.xlu0 %1364
      %1366 = vrot.lane.b32.xlu0 %v711, 64
      %v1367 = vpop.permute.xlu0 %1366
      %1368 = vrot.lane.b32.xlu0 %v712, 64
      %v1369 = vpop.permute.xlu0 %1368
      %1370 = vrot.lane.b32.xlu0 %v713, 64
      %v1371 = vpop.permute.xlu0 %1370
      %1372 = vrot.lane.b32.xlu0 %v714, 64
      %v1373 = vpop.permute.xlu0 %1372
      %1374 = vrot.lane.b32.xlu0 %v715, 64
      %v1375 = vpop.permute.xlu0 %1374
      %1376 = vrot.lane.b32.xlu0 %v716, 64
      %v1377 = vpop.permute.xlu0 %1376
      %1378 = vrot.lane.b32.xlu0 %v717, 64
      %v1379 = vpop.permute.xlu0 %1378
      %1380 = vrot.lane.b32.xlu0 %v718, 64
      %v1381 = vpop.permute.xlu0 %1380
      %1382 = vrot.lane.b32.xlu0 %v719, 64
      %v1383 = vpop.permute.xlu0 %1382
      %1384 = vrot.lane.b32.xlu0 %v720, 64
      %v1385 = vpop.permute.xlu0 %1384
      %1386 = vrot.lane.b32.xlu0 %v721, 64
      %v1387 = vpop.permute.xlu0 %1386
      %1388 = vrot.lane.b32.xlu0 %v722, 64
      %v1389 = vpop.permute.xlu0 %1388
      %1390 = vrot.lane.b32.xlu0 %v723, 64
      %v1391 = vpop.permute.xlu0 %1390
      %1392 = vrot.lane.b32.xlu0 %v724, 64
      %v1393 = vpop.permute.xlu0 %1392
      %1394 = vrot.lane.b32.xlu0 %v725, 64
      %v1395 = vpop.permute.xlu0 %1394
      %1396 = vrot.lane.b32.xlu0 %v726, 64
      %v1397 = vpop.permute.xlu0 %1396
      %1398 = vrot.lane.b32.xlu0 %v727, 64
      %v1399 = vpop.permute.xlu0 %1398
      %1464 = vrot.lane.b32.xlu0 %v728, 96
      %v1465 = vpop.permute.xlu0 %1464
      %1466 = vrot.lane.b32.xlu0 %v729, 96
      %v1467 = vpop.permute.xlu0 %1466
      %1468 = vrot.lane.b32.xlu0 %v730, 96
      %v1469 = vpop.permute.xlu0 %1468
      %1470 = vrot.lane.b32.xlu0 %v731, 96
      %v1471 = vpop.permute.xlu0 %1470
      %1472 = vrot.lane.b32.xlu0 %v732, 96
      %v1473 = vpop.permute.xlu0 %1472
      %1474 = vrot.lane.b32.xlu0 %v733, 96
      %v1475 = vpop.permute.xlu0 %1474
      %1476 = vrot.lane.b32.xlu0 %v734, 96
      %v1477 = vpop.permute.xlu0 %1476
      %1478 = vrot.lane.b32.xlu0 %v735, 96
      %v1479 = vpop.permute.xlu0 %1478
      %1480 = vrot.lane.b32.xlu0 %v736, 96
      %v1481 = vpop.permute.xlu0 %1480
      %1482 = vrot.lane.b32.xlu0 %v737, 96
      %v1483 = vpop.permute.xlu0 %1482
      %1484 = vrot.lane.b32.xlu0 %v738, 96
      %v1485 = vpop.permute.xlu0 %1484
      %1486 = vrot.lane.b32.xlu0 %v739, 96
      %v1487 = vpop.permute.xlu0 %1486
      %1488 = vrot.lane.b32.xlu0 %v740, 96
      %v1489 = vpop.permute.xlu0 %1488
      %1490 = vrot.lane.b32.xlu0 %v741, 96
      %v1491 = vpop.permute.xlu0 %1490
      %1492 = vrot.lane.b32.xlu0 %v742, 96
      %v1493 = vpop.permute.xlu0 %1492
      %1494 = vrot.lane.b32.xlu0 %v743, 96
      %v1495 = vpop.permute.xlu0 %1494
      %1496 = vrot.lane.b32.xlu0 %v744, 96
      %v1497 = vpop.permute.xlu0 %1496
      %1498 = vrot.lane.b32.xlu0 %v745, 96
      %v1499 = vpop.permute.xlu0 %1498
      %1500 = vrot.lane.b32.xlu0 %v746, 96
      %v1501 = vpop.permute.xlu0 %1500
      %1502 = vrot.lane.b32.xlu0 %v747, 96
      %v1503 = vpop.permute.xlu0 %1502
      %1504 = vrot.lane.b32.xlu0 %v748, 96
      %v1505 = vpop.permute.xlu0 %1504
      %1506 = vrot.lane.b32.xlu0 %v749, 96
      %v1507 = vpop.permute.xlu0 %1506
      %1508 = vrot.lane.b32.xlu0 %v750, 96
      %v1509 = vpop.permute.xlu0 %1508
      %1510 = vrot.lane.b32.xlu0 %v751, 96
      %v1511 = vpop.permute.xlu0 %1510
      %1512 = vrot.lane.b32.xlu0 %v752, 96
      %v1513 = vpop.permute.xlu0 %1512
      %1514 = vrot.lane.b32.xlu0 %v753, 96
      %v1515 = vpop.permute.xlu0 %1514
      %1516 = vrot.lane.b32.xlu0 %v754, 96
      %v1517 = vpop.permute.xlu0 %1516
      %1518 = vrot.lane.b32.xlu0 %v755, 96
      %v1519 = vpop.permute.xlu0 %1518
      %1520 = vrot.lane.b32.xlu0 %v756, 96
      %v1521 = vpop.permute.xlu0 %1520
      %1522 = vrot.lane.b32.xlu0 %v757, 96
      %v1523 = vpop.permute.xlu0 %1522
      %1524 = vrot.lane.b32.xlu0 %v758, 96
      %v1525 = vpop.permute.xlu0 %1524
      %1526 = vrot.lane.b32.xlu0 %v759, 96
      %v1527 = vpop.permute.xlu0 %1526
      %v1560 = vsel %vm284, %v503, %v825
      %v1561 = vsel %vm284, %v504, %v827
      %v1562 = vsel %vm284, %v505, %v829
      %v1563 = vsel %vm284, %v506, %v831
      %v1564 = vsel %vm284, %v507, %v833
      %v1565 = vsel %vm284, %v508, %v835
      %v1566 = vsel %vm284, %v509, %v837
      %v1567 = vsel %vm284, %v510, %v839
      %v1568 = vsel %vm284, %v511, %v841
      %v1569 = vsel %vm284, %v512, %v843
      %v1570 = vsel %vm284, %v513, %v845
      %v1571 = vsel %vm284, %v514, %v847
      %v1572 = vsel %vm284, %v515, %v849
      %v1573 = vsel %vm284, %v516, %v851
      %v1574 = vsel %vm284, %v517, %v853
      %v1575 = vsel %vm284, %v518, %v855
      %v1576 = vsel %vm284, %v519, %v857
      %v1577 = vsel %vm284, %v520, %v859
      %v1578 = vsel %vm284, %v521, %v861
      %v1579 = vsel %vm284, %v522, %v863
      %v1580 = vsel %vm284, %v523, %v865
      %v1581 = vsel %vm284, %v524, %v867
      %v1582 = vsel %vm284, %v525, %v869
      %v1583 = vsel %vm284, %v526, %v871
      %v1584 = vsel %vm284, %v527, %v873
      %v1585 = vsel %vm284, %v528, %v875
      %v1586 = vsel %vm284, %v529, %v877
      %v1587 = vsel %vm284, %v530, %v879
      %v1588 = vsel %vm284, %v531, %v881
      %v1589 = vsel %vm284, %v532, %v883
      %v1590 = vsel %vm284, %v533, %v885
      %v1591 = vsel %vm284, %v534, %v887
      %vm1592 = vcmask 523264
      %v1593 = vsel %vm1592, %v1560, %v953
      %v1594 = vsel %vm1592, %v1561, %v955
      %v1595 = vsel %vm1592, %v1562, %v957
      %v1596 = vsel %vm1592, %v1563, %v959
      %v1597 = vsel %vm1592, %v1564, %v961
      %v1598 = vsel %vm1592, %v1565, %v963
      %v1599 = vsel %vm1592, %v1566, %v965
      %v1600 = vsel %vm1592, %v1567, %v967
      %v1601 = vsel %vm1592, %v1568, %v969
      %v1602 = vsel %vm1592, %v1569, %v971
      %v1603 = vsel %vm1592, %v1570, %v973
      %v1604 = vsel %vm1592, %v1571, %v975
      %v1605 = vsel %vm1592, %v1572, %v977
      %v1606 = vsel %vm1592, %v1573, %v979
      %v1607 = vsel %vm1592, %v1574, %v981
      %v1608 = vsel %vm1592, %v1575, %v983
      %v1609 = vsel %vm1592, %v1576, %v985
      %v1610 = vsel %vm1592, %v1577, %v987
      %v1611 = vsel %vm1592, %v1578, %v989
      %v1612 = vsel %vm1592, %v1579, %v991
      %v1613 = vsel %vm1592, %v1580, %v993
      %v1614 = vsel %vm1592, %v1581, %v995
      %v1615 = vsel %vm1592, %v1582, %v997
      %v1616 = vsel %vm1592, %v1583, %v999
      %v1617 = vsel %vm1592, %v1584, %v1001
      %v1618 = vsel %vm1592, %v1585, %v1003
      %v1619 = vsel %vm1592, %v1586, %v1005
      %v1620 = vsel %vm1592, %v1587, %v1007
      %v1621 = vsel %vm1592, %v1588, %v1009
      %v1622 = vsel %vm1592, %v1589, %v1011
      %v1623 = vsel %vm1592, %v1590, %v1013
      %v1624 = vsel %vm1592, %v1591, %v1015
      %vm1625 = vcmask 785408
      %v1626 = vsel %vm1625, %v1593, %v1081
      %v1627 = vsel %vm1625, %v1594, %v1083
      %v1628 = vsel %vm1625, %v1595, %v1085
      %v1629 = vsel %vm1625, %v1596, %v1087
      %v1630 = vsel %vm1625, %v1597, %v1089
      %v1631 = vsel %vm1625, %v1598, %v1091
      %v1632 = vsel %vm1625, %v1599, %v1093
      %v1633 = vsel %vm1625, %v1600, %v1095
      %v1634 = vsel %vm1625, %v1601, %v1097
      %v1635 = vsel %vm1625, %v1602, %v1099
      %v1636 = vsel %vm1625, %v1603, %v1101
      %v1637 = vsel %vm1625, %v1604, %v1103
      %v1638 = vsel %vm1625, %v1605, %v1105
      %v1639 = vsel %vm1625, %v1606, %v1107
      %v1640 = vsel %vm1625, %v1607, %v1109
      %v1641 = vsel %vm1625, %v1608, %v1111
      %v1642 = vsel %vm1625, %v1609, %v1113
      %v1643 = vsel %vm1625, %v1610, %v1115
      %v1644 = vsel %vm1625, %v1611, %v1117
      %v1645 = vsel %vm1625, %v1612, %v1119
      %v1646 = vsel %vm1625, %v1613, %v1121
      %v1647 = vsel %vm1625, %v1614, %v1123
      %v1648 = vsel %vm1625, %v1615, %v1125
      %v1649 = vsel %vm1625, %v1616, %v1127
      %v1650 = vsel %vm1625, %v1617, %v1129
      %v1651 = vsel %vm1625, %v1618, %v1131
      %v1652 = vsel %vm1625, %v1619, %v1133
      %v1653 = vsel %vm1625, %v1620, %v1135
      %v1654 = vsel %vm1625, %v1621, %v1137
      %v1655 = vsel %vm1625, %v1622, %v1139
      %v1656 = vsel %vm1625, %v1623, %v1141
      %v1657 = vsel %vm1625, %v1624, %v1143
      %v1658 = vsel %vm284, %v631, %v1209
      %v1659 = vsel %vm284, %v632, %v1211
      %v1660 = vsel %vm284, %v633, %v1213
      %v1661 = vsel %vm284, %v634, %v1215
      %v1662 = vsel %vm284, %v635, %v1217
      %v1663 = vsel %vm284, %v636, %v1219
      %v1664 = vsel %vm284, %v637, %v1221
      %v1665 = vsel %vm284, %v638, %v1223
      %v1666 = vsel %vm284, %v639, %v1225
      %v1667 = vsel %vm284, %v640, %v1227
      %v1668 = vsel %vm284, %v641, %v1229
      %v1669 = vsel %vm284, %v642, %v1231
      %v1670 = vsel %vm284, %v643, %v1233
      %v1671 = vsel %vm284, %v644, %v1235
      %v1672 = vsel %vm284, %v645, %v1237
      %v1673 = vsel %vm284, %v646, %v1239
      %v1674 = vsel %vm284, %v647, %v1241
      %v1675 = vsel %vm284, %v648, %v1243
      %v1676 = vsel %vm284, %v649, %v1245
      %v1677 = vsel %vm284, %v650, %v1247
      %v1678 = vsel %vm284, %v651, %v1249
      %v1679 = vsel %vm284, %v652, %v1251
      %v1680 = vsel %vm284, %v653, %v1253
      %v1681 = vsel %vm284, %v654, %v1255
      %v1682 = vsel %vm284, %v655, %v1257
      %v1683 = vsel %vm284, %v656, %v1259
      %v1684 = vsel %vm284, %v657, %v1261
      %v1685 = vsel %vm284, %v658, %v1263
      %v1686 = vsel %vm284, %v659, %v1265
      %v1687 = vsel %vm284, %v660, %v1267
      %v1688 = vsel %vm284, %v661, %v1269
      %v1689 = vsel %vm284, %v662, %v1271
      %v1690 = vsel %vm1592, %v1658, %v1337
      %v1691 = vsel %vm1592, %v1659, %v1339
      %v1692 = vsel %vm1592, %v1660, %v1341
      %v1693 = vsel %vm1592, %v1661, %v1343
      %v1694 = vsel %vm1592, %v1662, %v1345
      %v1695 = vsel %vm1592, %v1663, %v1347
      %v1696 = vsel %vm1592, %v1664, %v1349
      %v1697 = vsel %vm1592, %v1665, %v1351
      %v1698 = vsel %vm1592, %v1666, %v1353
      %v1699 = vsel %vm1592, %v1667, %v1355
      %v1700 = vsel %vm1592, %v1668, %v1357
      %v1701 = vsel %vm1592, %v1669, %v1359
      %v1702 = vsel %vm1592, %v1670, %v1361
      %v1703 = vsel %vm1592, %v1671, %v1363
      %v1704 = vsel %vm1592, %v1672, %v1365
      %v1705 = vsel %vm1592, %v1673, %v1367
      %v1706 = vsel %vm1592, %v1674, %v1369
      %v1707 = vsel %vm1592, %v1675, %v1371
      %v1708 = vsel %vm1592, %v1676, %v1373
      %v1709 = vsel %vm1592, %v1677, %v1375
      %v1710 = vsel %vm1592, %v1678, %v1377
      %v1711 = vsel %vm1592, %v1679, %v1379
      %v1712 = vsel %vm1592, %v1680, %v1381
      %v1713 = vsel %vm1592, %v1681, %v1383
      %v1714 = vsel %vm1592, %v1682, %v1385
      %v1715 = vsel %vm1592, %v1683, %v1387
      %v1716 = vsel %vm1592, %v1684, %v1389
      %v1717 = vsel %vm1592, %v1685, %v1391
      %v1718 = vsel %vm1592, %v1686, %v1393
      %v1719 = vsel %vm1592, %v1687, %v1395
      %v1720 = vsel %vm1592, %v1688, %v1397
      %v1721 = vsel %vm1592, %v1689, %v1399
      %v1722 = vsel %vm1625, %v1690, %v1465
      %v1723 = vsel %vm1625, %v1691, %v1467
      %v1724 = vsel %vm1625, %v1692, %v1469
      %v1725 = vsel %vm1625, %v1693, %v1471
      %v1726 = vsel %vm1625, %v1694, %v1473
      %v1727 = vsel %vm1625, %v1695, %v1475
      %v1728 = vsel %vm1625, %v1696, %v1477
      %v1729 = vsel %vm1625, %v1697, %v1479
      %v1730 = vsel %vm1625, %v1698, %v1481
      %v1731 = vsel %vm1625, %v1699, %v1483
      %v1732 = vsel %vm1625, %v1700, %v1485
      %v1733 = vsel %vm1625, %v1701, %v1487
      %v1734 = vsel %vm1625, %v1702, %v1489
      %v1735 = vsel %vm1625, %v1703, %v1491
      %v1736 = vsel %vm1625, %v1704, %v1493
      %v1737 = vsel %vm1625, %v1705, %v1495
      %v1738 = vsel %vm1625, %v1706, %v1497
      %v1739 = vsel %vm1625, %v1707, %v1499
      %v1740 = vsel %vm1625, %v1708, %v1501
      %v1741 = vsel %vm1625, %v1709, %v1503
      %v1742 = vsel %vm1625, %v1710, %v1505
      %v1743 = vsel %vm1625, %v1711, %v1507
      %v1744 = vsel %vm1625, %v1712, %v1509
      %v1745 = vsel %vm1625, %v1713, %v1511
      %v1746 = vsel %vm1625, %v1714, %v1513
      %v1747 = vsel %vm1625, %v1715, %v1515
      %v1748 = vsel %vm1625, %v1716, %v1517
      %v1749 = vsel %vm1625, %v1717, %v1519
      %v1750 = vsel %vm1625, %v1718, %v1521
      %v1751 = vsel %vm1625, %v1719, %v1523
      %v1752 = vsel %vm1625, %v1720, %v1525
      %v1753 = vsel %vm1625, %v1721, %v1527
      %v1754 = vld [vmem:[%s1] sm:$0xff]
      %v1755 = vld [vmem:[%s1 + $0x8] sm:$0xff]
      %v1756 = vld [vmem:[%s1 + $0x10] sm:$0xff]
      %v1757 = vld [vmem:[%s1 + $0x18] sm:$0xff]
      %v1758 = vld [vmem:[%s1 + $0x20] sm:$0xff]
      %v1759 = vld [vmem:[%s1 + $0x28] sm:$0xff]
      %v1760 = vld [vmem:[%s1 + $0x30] sm:$0xff]
      %v1761 = vld [vmem:[%s1 + $0x38] sm:$0xff]
      %v1762 = vld [vmem:[%s1 + $0x40] sm:$0xff]
      %v1763 = vld [vmem:[%s1 + $0x48] sm:$0xff]
      %v1764 = vld [vmem:[%s1 + $0x50] sm:$0xff]
      %v1765 = vld [vmem:[%s1 + $0x58] sm:$0xff]
      %v1766 = vld [vmem:[%s1 + $0x60] sm:$0xff]
      %v1767 = vld [vmem:[%s1 + $0x68] sm:$0xff]
      %v1768 = vld [vmem:[%s1 + $0x70] sm:$0xff]
      %v1769 = vld [vmem:[%s1 + $0x78] sm:$0xff]
      %v1770 = vld [vmem:[%s1 + $0x80] sm:$0xff]
      %v1771 = vld [vmem:[%s1 + $0x88] sm:$0xff]
      %v1772 = vld [vmem:[%s1 + $0x90] sm:$0xff]
      %v1773 = vld [vmem:[%s1 + $0x98] sm:$0xff]
      %v1774 = vld [vmem:[%s1 + $0xa0] sm:$0xff]
      %v1775 = vld [vmem:[%s1 + $0xa8] sm:$0xff]
      %v1776 = vld [vmem:[%s1 + $0xb0] sm:$0xff]
      %v1777 = vld [vmem:[%s1 + $0xb8] sm:$0xff]
      %v1778 = vld [vmem:[%s1 + $0xc0] sm:$0xff]
      %v1779 = vld [vmem:[%s1 + $0xc8] sm:$0xff]
      %v1780 = vld [vmem:[%s1 + $0xd0] sm:$0xff]
      %v1781 = vld [vmem:[%s1 + $0xd8] sm:$0xff]
      %v1782 = vld [vmem:[%s1 + $0xe0] sm:$0xff]
      %v1783 = vld [vmem:[%s1 + $0xe8] sm:$0xff]
      %v1784 = vld [vmem:[%s1 + $0xf0] sm:$0xff]
      %v1785 = vld [vmem:[%s1 + $0xf8] sm:$0xff]
      %v1786 = vld [vmem:[%s1 + $0x100] sm:$0xff]
      %v1787 = vld [vmem:[%s1 + $0x108] sm:$0xff]
      %v1788 = vld [vmem:[%s1 + $0x110] sm:$0xff]
      %v1789 = vld [vmem:[%s1 + $0x118] sm:$0xff]
      %v1790 = vld [vmem:[%s2] sm:$0x1]
      %v1792 = vlaneseq
      %v1793 = vshrl.u32 %v1792, 7
      %v1794 = vsub.s32 0, %v1793
      %v1795 = vrot.slane %v1790, %v1794
      %v1798 = vsel %vm284, %v760, 0
      %v1801 = vsel %vm284, %v761, 0
      %v1804 = vsel %vm284, %v762, 0
      %v1807 = vsel %vm284, %v763, 0
      %v1810 = vsel %vm284, %v764, 0
      %v1813 = vsel %vm284, %v765, 0
      %v1816 = vsel %vm284, %v766, 0
      %v1819 = vsel %vm284, %v767, 0
      %v1822 = vsel %vm284, %v768, 0
      %v1825 = vsel %vm284, %v769, 0
      %v1828 = vsel %vm284, %v770, 0
      %v1831 = vsel %vm284, %v771, 0
      %v1834 = vsel %vm284, %v772, 0
      %v1837 = vsel %vm284, %v773, 0
      %v1840 = vsel %vm284, %v774, 0
      %v1843 = vsel %vm284, %v775, 0
      %v1846 = vsel %vm284, %v776, 0
      %v1849 = vsel %vm284, %v777, 0
      %v1852 = vsel %vm284, %v778, 0
      %v1855 = vsel %vm284, %v779, 0
      %v1858 = vsel %vm284, %v780, 0
      %v1861 = vsel %vm284, %v781, 0
      %v1864 = vsel %vm284, %v782, 0
      %v1867 = vsel %vm284, %v783, 0
      %v1870 = vsel %vm284, %v784, 0
      %v1873 = vsel %vm284, %v785, 0
      %v1876 = vsel %vm284, %v786, 0
      %v1879 = vsel %vm284, %v787, 0
      %v1882 = vsel %vm284, %v788, 0
      %v1885 = vsel %vm284, %v789, 0
      %v1888 = vsel %vm284, %v790, 0
      %v1891 = vsel %vm284, %v791, 0
      %1893 = vmatprep.subr.mxu0 0.0
      %1894 = vmatpush1.msra.mxu0 %v1754
      %1895 = vmatprep.subr.mxu0 0.0
      %1896 = vmatpush1.msra.mxu0 %v1755
      %1897 = vmatprep.subr.mxu0 0.0
      %1898 = vmatpush1.msra.mxu0 %v1756
      %1899 = vmatprep.subr.mxu0 0.0
      %1900 = vmatpush1.msra.mxu0 %v1757
      %1901 = vmatprep.subr.mxu0 0.0
      %1902 = vmatpush1.msra.mxu0 %v1758
      %1903 = vmatprep.subr.mxu0 0.0
      %1904 = vmatpush1.msra.mxu0 %v1759
      %1905 = vmatprep.subr.mxu0 0.0
      %1906 = vmatpush1.msra.mxu0 %v1760
      %1907 = vmatprep.subr.mxu0 0.0
      %1908 = vmatpush1.msra.mxu0 %v1761
      %1909 = vmatprep.subr.mxu0 0.0
      %1910 = vmatpush1.msra.mxu0 %v1762
      %1911 = vmatprep.subr.mxu0 0.0
      %1912 = vmatpush1.msra.mxu0 %v1763
      %1913 = vmatprep.subr.mxu0 0.0
      %1914 = vmatpush1.msra.mxu0 %v1764
      %1915 = vmatprep.subr.mxu0 0.0
      %1916 = vmatpush1.msra.mxu0 %v1765
      %1917 = vmatprep.subr.mxu0 0.0
      %1918 = vmatpush1.msra.mxu0 %v1766
      %1919 = vmatprep.subr.mxu0 0.0
      %1920 = vmatpush1.msra.mxu0 %v1767
      %1921 = vmatprep.subr.mxu0 0.0
      %1922 = vmatpush1.msra.mxu0 %v1768
      %1923 = vmatprep.subr.mxu0 0.0
      %1924 = vmatpush1.msra.mxu0 %v1769
      %1925 = vmatprep.subr.mxu0 0.0
      %1926 = vmatpush1.msra.mxu0 %v1770
      %1927 = vmatprep.subr.mxu0 0.0
      %1928 = vmatpush1.msra.mxu0 %v1771
      %1929 = vmatprep.subr.mxu0 0.0
      %1930 = vmatpush1.msra.mxu0 %v1772
      %1931 = vmatprep.subr.mxu0 0.0
      %1932 = vmatpush1.msra.mxu0 %v1773
      %1933 = vmatprep.subr.mxu0 0.0
      %1934 = vmatpush1.msra.mxu0 %v1774
      %1935 = vmatprep.subr.mxu0 0.0
      %1936 = vmatpush1.msra.mxu0 %v1775
      %1937 = vmatprep.subr.mxu0 0.0
      %1938 = vmatpush1.msra.mxu0 %v1776
      %1939 = vmatprep.subr.mxu0 0.0
      %1940 = vmatpush1.msra.mxu0 %v1777
      %1941 = vmatprep.subr.mxu0 0.0
      %1942 = vmatpush1.msra.mxu0 %v1778
      %1943 = vmatprep.subr.mxu0 0.0
      %1944 = vmatpush1.msra.mxu0 %v1779
      %1945 = vmatprep.subr.mxu0 0.0
      %1946 = vmatpush1.msra.mxu0 %v1780
      %1947 = vmatprep.subr.mxu0 0.0
      %1948 = vmatpush1.msra.mxu0 %v1781
      %1949 = vmatprep.subr.mxu0 0.0
      %1950 = vmatpush1.msra.mxu0 %v1782
      %1951 = vmatprep.subr.mxu0 0.0
      %1952 = vmatpush1.msra.mxu0 %v1783
      %1953 = vmatprep.subr.mxu0 0.0
      %1954 = vmatpush1.msra.mxu0 %v1784
      %1955 = vmatprep.subr.mxu0 0.0
      %1956 = vmatpush1.msra.mxu0 %v1785
      %1957 = vmatprep.mubr.f32.mxu0 %v1722
      %1958 = vmatmul.mubr.f32.gmra.mrb[0].mxu0 %v1626
      %v1959 = vpop.f32.mrb[0].mxu0
      %v1960 = vadd.f32 %v1795, %v1959
      %v1961 = vpop.f32.mrb[0].mxu0
      %1962 = vmatprep.mubr.f32.mxu0 %v1723
      %1963 = vmatmul.mubr.f32.gmra.mrb[0].mxu0 %v1627
      %v1964 = vpop.f32.mrb[0].mxu0
      %v1965 = vadd.f32 %v1795, %v1964
      %v1966 = vpop.f32.mrb[0].mxu0
      %1967 = vmatprep.mubr.f32.mxu0 %v1724
      %1968 = vmatmul.mubr.f32.gmra.mrb[0].mxu0 %v1628
      %v1969 = vpop.f32.mrb[0].mxu0
      %v1970 = vadd.f32 %v1795, %v1969
      %v1971 = vpop.f32.mrb[0].mxu0
      %1972 = vmatprep.mubr.f32.mxu0 %v1725
      %1973 = vmatmul.mubr.f32.gmra.mrb[0].mxu0 %v1629
      %v1974 = vpop.f32.mrb[0].mxu0
      %v1975 = vadd.f32 %v1795, %v1974
      %v1976 = vpop.f32.mrb[0].mxu0
      %1977 = vmatprep.mubr.f32.mxu0 %v1726
      %1978 = vmatmul.mubr.f32.gmra.mrb[0].mxu0 %v1630
      %v1979 = vpop.f32.mrb[0].mxu0
      %v1980 = vadd.f32 %v1795, %v1979
      %v1981 = vpop.f32.mrb[0].mxu0
      %1982 = vmatprep.mubr.f32.mxu0 %v1727
      %1983 = vmatmul.mubr.f32.gmra.mrb[0].mxu0 %v1631
      %v1984 = vpop.f32.mrb[0].mxu0
      %v1985 = vadd.f32 %v1795, %v1984
      %v1986 = vpop.f32.mrb[0].mxu0
      %1987 = vmatprep.mubr.f32.mxu0 %v1728
      %1988 = vmatmul.mubr.f32.gmra.mrb[0].mxu0 %v1632
      %v1989 = vpop.f32.mrb[0].mxu0
      %v1990 = vadd.f32 %v1795, %v1989
      %v1991 = vpop.f32.mrb[0].mxu0
      %1992 = vmatprep.mubr.f32.mxu0 %v1729
      %1993 = vmatmul.mubr.f32.gmra.mrb[0].mxu0 %v1633
      %v1994 = vpop.f32.mrb[0].mxu0
      %v1995 = vadd.f32 %v1795, %v1994
      %v1996 = vpop.f32.mrb[0].mxu0
      %1997 = vmatprep.mubr.f32.mxu0 %v1730
      %1998 = vmatmul.mubr.f32.gmra.mrb[0].mxu0 %v1634
      %v1999 = vpop.f32.mrb[0].mxu0
      %v2000 = vadd.f32 %v1795, %v1999
      %v2001 = vpop.f32.mrb[0].mxu0
      %2002 = vmatprep.mubr.f32.mxu0 %v1731
      %2003 = vmatmul.mubr.f32.gmra.mrb[0].mxu0 %v1635
      %v2004 = vpop.f32.mrb[0].mxu0
      %v2005 = vadd.f32 %v1795, %v2004
      %v2006 = vpop.f32.mrb[0].mxu0
      %2007 = vmatprep.mubr.f32.mxu0 %v1732
      %2008 = vmatmul.mubr.f32.gmra.mrb[0].mxu0 %v1636
      %v2009 = vpop.f32.mrb[0].mxu0
      %v2010 = vadd.f32 %v1795, %v2009
      %v2011 = vpop.f32.mrb[0].mxu0
      %2012 = vmatprep.mubr.f32.mxu0 %v1733
      %2013 = vmatmul.mubr.f32.gmra.mrb[0].mxu0 %v1637
      %v2014 = vpop.f32.mrb[0].mxu0
      %v2015 = vadd.f32 %v1795, %v2014
      %v2016 = vpop.f32.mrb[0].mxu0
      %2017 = vmatprep.mubr.f32.mxu0 %v1734
      %2018 = vmatmul.mubr.f32.gmra.mrb[0].mxu0 %v1638
      %v2019 = vpop.f32.mrb[0].mxu0
      %v2020 = vadd.f32 %v1795, %v2019
      %v2021 = vpop.f32.mrb[0].mxu0
      %2022 = vmatprep.mubr.f32.mxu0 %v1735
      %2023 = vmatmul.mubr.f32.gmra.mrb[0].mxu0 %v1639
      %v2024 = vpop.f32.mrb[0].mxu0
      %v2025 = vadd.f32 %v1795, %v2024
      %v2026 = vpop.f32.mrb[0].mxu0
      %2027 = vmatprep.mubr.f32.mxu0 %v1736
      %2028 = vmatmul.mubr.f32.gmra.mrb[0].mxu0 %v1640
      %v2029 = vpop.f32.mrb[0].mxu0
      %v2030 = vadd.f32 %v1795, %v2029
      %v2031 = vpop.f32.mrb[0].mxu0
      %2032 = vmatprep.mubr.f32.mxu0 %v1737
      %2033 = vmatmul.mubr.f32.gmra.mrb[0].mxu0 %v1641
      %v2034 = vpop.f32.mrb[0].mxu0
      %v2035 = vadd.f32 %v1795, %v2034
      %v2036 = vpop.f32.mrb[0].mxu0
      %2037 = vmatprep.mubr.f32.mxu0 %v1738
      %2038 = vmatmul.mubr.f32.gmra.mrb[0].mxu0 %v1642
      %v2039 = vpop.f32.mrb[0].mxu0
      %v2040 = vadd.f32 %v1795, %v2039
      %v2041 = vpop.f32.mrb[0].mxu0
      %2042 = vmatprep.mubr.f32.mxu0 %v1739
      %2043 = vmatmul.mubr.f32.gmra.mrb[0].mxu0 %v1643
      %v2044 = vpop.f32.mrb[0].mxu0
      %v2045 = vadd.f32 %v1795, %v2044
      %v2046 = vpop.f32.mrb[0].mxu0
      %2047 = vmatprep.mubr.f32.mxu0 %v1740
      %2048 = vmatmul.mubr.f32.gmra.mrb[0].mxu0 %v1644
      %v2049 = vpop.f32.mrb[0].mxu0
      %v2050 = vadd.f32 %v1795, %v2049
      %v2051 = vpop.f32.mrb[0].mxu0
      %2052 = vmatprep.mubr.f32.mxu0 %v1741
      %2053 = vmatmul.mubr.f32.gmra.mrb[0].mxu0 %v1645
      %v2054 = vpop.f32.mrb[0].mxu0
      %v2055 = vadd.f32 %v1795, %v2054
      %v2056 = vpop.f32.mrb[0].mxu0
      %2057 = vmatprep.mubr.f32.mxu0 %v1742
      %2058 = vmatmul.mubr.f32.gmra.mrb[0].mxu0 %v1646
      %v2059 = vpop.f32.mrb[0].mxu0
      %v2060 = vadd.f32 %v1795, %v2059
      %v2061 = vpop.f32.mrb[0].mxu0
      %2062 = vmatprep.mubr.f32.mxu0 %v1743
      %2063 = vmatmul.mubr.f32.gmra.mrb[0].mxu0 %v1647
      %v2064 = vpop.f32.mrb[0].mxu0
      %v2065 = vadd.f32 %v1795, %v2064
      %v2066 = vpop.f32.mrb[0].mxu0
      %2067 = vmatprep.mubr.f32.mxu0 %v1744
      %2068 = vmatmul.mubr.f32.gmra.mrb[0].mxu0 %v1648
      %v2069 = vpop.f32.mrb[0].mxu0
      %v2070 = vadd.f32 %v1795, %v2069
      %v2071 = vpop.f32.mrb[0].mxu0
      %2072 = vmatprep.mubr.f32.mxu0 %v1745
      %2073 = vmatmul.mubr.f32.gmra.mrb[0].mxu0 %v1649
      %v2074 = vpop.f32.mrb[0].mxu0
      %v2075 = vadd.f32 %v1795, %v2074
      %v2076 = vpop.f32.mrb[0].mxu0
      %2077 = vmatprep.mubr.f32.mxu0 %v1746
      %2078 = vmatmul.mubr.f32.gmra.mrb[0].mxu0 %v1650
      %v2079 = vpop.f32.mrb[0].mxu0
      %v2080 = vadd.f32 %v1795, %v2079
      %v2081 = vpop.f32.mrb[0].mxu0
      %2082 = vmatprep.mubr.f32.mxu0 %v1747
      %2083 = vmatmul.mubr.f32.gmra.mrb[0].mxu0 %v1651
      %v2084 = vpop.f32.mrb[0].mxu0
      %v2085 = vadd.f32 %v1795, %v2084
      %v2086 = vpop.f32.mrb[0].mxu0
      %2087 = vmatprep.mubr.f32.mxu0 %v1748
      %2088 = vmatmul.mubr.f32.gmra.mrb[0].mxu0 %v1652
      %v2089 = vpop.f32.mrb[0].mxu0
      %v2090 = vadd.f32 %v1795, %v2089
      %v2091 = vpop.f32.mrb[0].mxu0
      %2092 = vmatprep.mubr.f32.mxu0 %v1749
      %2093 = vmatmul.mubr.f32.gmra.mrb[0].mxu0 %v1653
      %v2094 = vpop.f32.mrb[0].mxu0
      %v2095 = vadd.f32 %v1795, %v2094
      %v2096 = vpop.f32.mrb[0].mxu0
      %2097 = vmatprep.mubr.f32.mxu0 %v1750
      %2098 = vmatmul.mubr.f32.gmra.mrb[0].mxu0 %v1654
      %v2099 = vpop.f32.mrb[0].mxu0
      %v2100 = vadd.f32 %v1795, %v2099
      %v2101 = vpop.f32.mrb[0].mxu0
      %2102 = vmatprep.mubr.f32.mxu0 %v1751
      %2103 = vmatmul.mubr.f32.gmra.mrb[0].mxu0 %v1655
      %v2104 = vpop.f32.mrb[0].mxu0
      %v2105 = vadd.f32 %v1795, %v2104
      %v2106 = vpop.f32.mrb[0].mxu0
      %2107 = vmatprep.mubr.f32.mxu0 %v1752
      %2108 = vmatmul.mubr.f32.gmra.mrb[0].mxu0 %v1656
      %v2109 = vpop.f32.mrb[0].mxu0
      %v2110 = vadd.f32 %v1795, %v2109
      %v2111 = vpop.f32.mrb[0].mxu0
      %2112 = vmatprep.mubr.f32.mxu0 %v1753
      %2113 = vmatmul.mubr.f32.gmra.mrb[0].mxu0 %v1657
      %v2114 = vpop.f32.mrb[0].mxu0
      %v2115 = vadd.f32 %v1795, %v2114
      %v2116 = vpop.f32.mrb[0].mxu0
      %2117 = vdwg.mxu0
      %2118 = vmatprep.subr.mxu0 0.0
      %2119 = vmatpush1.msra.mxu0 %v1786
      %2120 = vmatprep.subr.mxu0 0.0
      %2121 = vmatpush1.msra.mxu0 %v1787
      %2122 = vmatprep.subr.mxu0 0.0
      %2123 = vmatpush1.msra.mxu0 %v1788
      %2124 = vmatprep.subr.mxu0 0.0
      %2125 = vmatpush1.msra.mxu0 %v1789
      %2126 = vmatprep.subr.mxu0 0.0
      %2127 = vmatpush1.msra.mxu0 0.0
      %2128 = vmatprep.subr.mxu0 0.0
      %2129 = vmatpush1.msra.mxu0 0.0
      %2130 = vmatprep.subr.mxu0 0.0
      %2131 = vmatpush1.msra.mxu0 0.0
      %2132 = vmatprep.subr.mxu0 0.0
      %2133 = vmatpush1.msra.mxu0 0.0
      %2134 = vmatprep.subr.mxu0 0.0
      %2135 = vmatpush1.msra.mxu0 0.0
      %2136 = vmatprep.subr.mxu0 0.0
      %2137 = vmatpush1.msra.mxu0 0.0
      %2138 = vmatprep.subr.mxu0 0.0
      %2139 = vmatpush1.msra.mxu0 0.0
      %2140 = vmatprep.subr.mxu0 0.0
      %2141 = vmatpush1.msra.mxu0 0.0
      %2142 = vmatprep.subr.mxu0 0.0
      %2143 = vmatpush1.msra.mxu0 0.0
      %2144 = vmatprep.subr.mxu0 0.0
      %2145 = vmatpush1.msra.mxu0 0.0
      %2146 = vmatprep.subr.mxu0 0.0
      %2147 = vmatpush1.msra.mxu0 0.0
      %2148 = vmatprep.subr.mxu0 0.0
      %2149 = vmatpush1.msra.mxu0 0.0
      %2150 = vmatprep.subr.mxu0 0.0
      %2151 = vmatpush1.msra.mxu0 0.0
      %2152 = vmatprep.subr.mxu0 0.0
      %2153 = vmatpush1.msra.mxu0 0.0
      %2154 = vmatprep.subr.mxu0 0.0
      %2155 = vmatpush1.msra.mxu0 0.0
      %2156 = vmatprep.subr.mxu0 0.0
      %2157 = vmatpush1.msra.mxu0 0.0
      %2158 = vmatprep.subr.mxu0 0.0
      %2159 = vmatpush1.msra.mxu0 0.0
      %2160 = vmatprep.subr.mxu0 0.0
      %2161 = vmatpush1.msra.mxu0 0.0
      %2162 = vmatprep.subr.mxu0 0.0
      %2163 = vmatpush1.msra.mxu0 0.0
      %2164 = vmatprep.subr.mxu0 0.0
      %2165 = vmatpush1.msra.mxu0 0.0
      %2166 = vmatprep.subr.mxu0 0.0
      %2167 = vmatpush1.msra.mxu0 0.0
      %2168 = vmatprep.subr.mxu0 0.0
      %2169 = vmatpush1.msra.mxu0 0.0
      %2170 = vmatprep.subr.mxu0 0.0
      %2171 = vmatpush1.msra.mxu0 0.0
      %2172 = vmatprep.subr.mxu0 0.0
      %2173 = vmatpush1.msra.mxu0 0.0
      %2174 = vmatprep.subr.mxu0 0.0
      %2175 = vmatpush1.msra.mxu0 0.0
      %2176 = vmatprep.subr.mxu0 0.0
      %2177 = vmatpush1.msra.mxu0 0.0
      %2178 = vmatprep.subr.mxu0 0.0
      %2179 = vmatpush1.msra.mxu0 0.0
      %2180 = vmatprep.subr.mxu0 0.0
      %2181 = vmatpush1.msra.mxu0 0.0
      %2182 = vmatprep.mubr.f32.mxu0 0.0
      %2183 = vmatmul.mubr.f32.gmra.mrb[0].mxu0 %v1798
      %v2184 = vpop.f32.mrb[0].mxu0
      %v2185 = vadd.f32 %v1960, %v2184
      %v2186 = vpop.f32.mrb[0].mxu0
      %2187 = vmatprep.mubr.f32.mxu0 0.0
      %2188 = vmatmul.mubr.f32.gmra.mrb[0].mxu0 %v1801
      %v2189 = vpop.f32.mrb[0].mxu0
      %v2190 = vadd.f32 %v1965, %v2189
      %v2191 = vpop.f32.mrb[0].mxu0
      %2192 = vmatprep.mubr.f32.mxu0 0.0
      %2193 = vmatmul.mubr.f32.gmra.mrb[0].mxu0 %v1804
      %v2194 = vpop.f32.mrb[0].mxu0
      %v2195 = vadd.f32 %v1970, %v2194
      %v2196 = vpop.f32.mrb[0].mxu0
      %2197 = vmatprep.mubr.f32.mxu0 0.0
      %2198 = vmatmul.mubr.f32.gmra.mrb[0].mxu0 %v1807
      %v2199 = vpop.f32.mrb[0].mxu0
      %v2200 = vadd.f32 %v1975, %v2199
      %v2201 = vpop.f32.mrb[0].mxu0
      %2202 = vmatprep.mubr.f32.mxu0 0.0
      %2203 = vmatmul.mubr.f32.gmra.mrb[0].mxu0 %v1810
      %v2204 = vpop.f32.mrb[0].mxu0
      %v2205 = vadd.f32 %v1980, %v2204
      %v2206 = vpop.f32.mrb[0].mxu0
      %2207 = vmatprep.mubr.f32.mxu0 0.0
      %2208 = vmatmul.mubr.f32.gmra.mrb[0].mxu0 %v1813
      %v2209 = vpop.f32.mrb[0].mxu0
      %v2210 = vadd.f32 %v1985, %v2209
      %v2211 = vpop.f32.mrb[0].mxu0
      %2212 = vmatprep.mubr.f32.mxu0 0.0
      %2213 = vmatmul.mubr.f32.gmra.mrb[0].mxu0 %v1816
      %v2214 = vpop.f32.mrb[0].mxu0
      %v2215 = vadd.f32 %v1990, %v2214
      %v2216 = vpop.f32.mrb[0].mxu0
      %2217 = vmatprep.mubr.f32.mxu0 0.0
      %2218 = vmatmul.mubr.f32.gmra.mrb[0].mxu0 %v1819
      %v2219 = vpop.f32.mrb[0].mxu0
      %v2220 = vadd.f32 %v1995, %v2219
      %v2221 = vpop.f32.mrb[0].mxu0
      %2222 = vmatprep.mubr.f32.mxu0 0.0
      %2223 = vmatmul.mubr.f32.gmra.mrb[0].mxu0 %v1822
      %v2224 = vpop.f32.mrb[0].mxu0
      %v2225 = vadd.f32 %v2000, %v2224
      %v2226 = vpop.f32.mrb[0].mxu0
      %2227 = vmatprep.mubr.f32.mxu0 0.0
      %2228 = vmatmul.mubr.f32.gmra.mrb[0].mxu0 %v1825
      %v2229 = vpop.f32.mrb[0].mxu0
      %v2230 = vadd.f32 %v2005, %v2229
      %v2231 = vpop.f32.mrb[0].mxu0
      %2232 = vmatprep.mubr.f32.mxu0 0.0
      %2233 = vmatmul.mubr.f32.gmra.mrb[0].mxu0 %v1828
      %v2234 = vpop.f32.mrb[0].mxu0
      %v2235 = vadd.f32 %v2010, %v2234
      %v2236 = vpop.f32.mrb[0].mxu0
      %2237 = vmatprep.mubr.f32.mxu0 0.0
      %2238 = vmatmul.mubr.f32.gmra.mrb[0].mxu0 %v1831
      %v2239 = vpop.f32.mrb[0].mxu0
      %v2240 = vadd.f32 %v2015, %v2239
      %v2241 = vpop.f32.mrb[0].mxu0
      %2242 = vmatprep.mubr.f32.mxu0 0.0
      %2243 = vmatmul.mubr.f32.gmra.mrb[0].mxu0 %v1834
      %v2244 = vpop.f32.mrb[0].mxu0
      %v2245 = vadd.f32 %v2020, %v2244
      %v2246 = vpop.f32.mrb[0].mxu0
      %2247 = vmatprep.mubr.f32.mxu0 0.0
      %2248 = vmatmul.mubr.f32.gmra.mrb[0].mxu0 %v1837
      %v2249 = vpop.f32.mrb[0].mxu0
      %v2250 = vadd.f32 %v2025, %v2249
      %v2251 = vpop.f32.mrb[0].mxu0
      %2252 = vmatprep.mubr.f32.mxu0 0.0
      %2253 = vmatmul.mubr.f32.gmra.mrb[0].mxu0 %v1840
      %v2254 = vpop.f32.mrb[0].mxu0
      %v2255 = vadd.f32 %v2030, %v2254
      %v2256 = vpop.f32.mrb[0].mxu0
      %2257 = vmatprep.mubr.f32.mxu0 0.0
      %2258 = vmatmul.mubr.f32.gmra.mrb[0].mxu0 %v1843
      %v2259 = vpop.f32.mrb[0].mxu0
      %v2260 = vadd.f32 %v2035, %v2259
      %v2261 = vpop.f32.mrb[0].mxu0
      %2262 = vmatprep.mubr.f32.mxu0 0.0
      %2263 = vmatmul.mubr.f32.gmra.mrb[0].mxu0 %v1846
      %v2264 = vpop.f32.mrb[0].mxu0
      %v2265 = vadd.f32 %v2040, %v2264
      %v2266 = vpop.f32.mrb[0].mxu0
      %2267 = vmatprep.mubr.f32.mxu0 0.0
      %2268 = vmatmul.mubr.f32.gmra.mrb[0].mxu0 %v1849
      %v2269 = vpop.f32.mrb[0].mxu0
      %v2270 = vadd.f32 %v2045, %v2269
      %v2271 = vpop.f32.mrb[0].mxu0
      %2272 = vmatprep.mubr.f32.mxu0 0.0
      %2273 = vmatmul.mubr.f32.gmra.mrb[0].mxu0 %v1852
      %v2274 = vpop.f32.mrb[0].mxu0
      %v2275 = vadd.f32 %v2050, %v2274
      %v2276 = vpop.f32.mrb[0].mxu0
      %2277 = vmatprep.mubr.f32.mxu0 0.0
      %2278 = vmatmul.mubr.f32.gmra.mrb[0].mxu0 %v1855
      %v2279 = vpop.f32.mrb[0].mxu0
      %v2280 = vadd.f32 %v2055, %v2279
      %v2281 = vpop.f32.mrb[0].mxu0
      %2282 = vmatprep.mubr.f32.mxu0 0.0
      %2283 = vmatmul.mubr.f32.gmra.mrb[0].mxu0 %v1858
      %v2284 = vpop.f32.mrb[0].mxu0
      %v2285 = vadd.f32 %v2060, %v2284
      %v2286 = vpop.f32.mrb[0].mxu0
      %2287 = vmatprep.mubr.f32.mxu0 0.0
      %2288 = vmatmul.mubr.f32.gmra.mrb[0].mxu0 %v1861
      %v2289 = vpop.f32.mrb[0].mxu0
      %v2290 = vadd.f32 %v2065, %v2289
      %v2291 = vpop.f32.mrb[0].mxu0
      %2292 = vmatprep.mubr.f32.mxu0 0.0
      %2293 = vmatmul.mubr.f32.gmra.mrb[0].mxu0 %v1864
      %v2294 = vpop.f32.mrb[0].mxu0
      %v2295 = vadd.f32 %v2070, %v2294
      %v2296 = vpop.f32.mrb[0].mxu0
      %2297 = vmatprep.mubr.f32.mxu0 0.0
      %2298 = vmatmul.mubr.f32.gmra.mrb[0].mxu0 %v1867
      %v2299 = vpop.f32.mrb[0].mxu0
      %v2300 = vadd.f32 %v2075, %v2299
      %v2301 = vpop.f32.mrb[0].mxu0
      %2302 = vmatprep.mubr.f32.mxu0 0.0
      %2303 = vmatmul.mubr.f32.gmra.mrb[0].mxu0 %v1870
      %v2304 = vpop.f32.mrb[0].mxu0
      %v2305 = vadd.f32 %v2080, %v2304
      %v2306 = vpop.f32.mrb[0].mxu0
      %2307 = vmatprep.mubr.f32.mxu0 0.0
      %2308 = vmatmul.mubr.f32.gmra.mrb[0].mxu0 %v1873
      %v2309 = vpop.f32.mrb[0].mxu0
      %v2310 = vadd.f32 %v2085, %v2309
      %v2311 = vpop.f32.mrb[0].mxu0
      %2312 = vmatprep.mubr.f32.mxu0 0.0
      %2313 = vmatmul.mubr.f32.gmra.mrb[0].mxu0 %v1876
      %v2314 = vpop.f32.mrb[0].mxu0
      %v2315 = vadd.f32 %v2090, %v2314
      %v2316 = vpop.f32.mrb[0].mxu0
      %2317 = vmatprep.mubr.f32.mxu0 0.0
      %2318 = vmatmul.mubr.f32.gmra.mrb[0].mxu0 %v1879
      %v2319 = vpop.f32.mrb[0].mxu0
      %v2320 = vadd.f32 %v2095, %v2319
      %v2321 = vpop.f32.mrb[0].mxu0
      %2322 = vmatprep.mubr.f32.mxu0 0.0
      %2323 = vmatmul.mubr.f32.gmra.mrb[0].mxu0 %v1882
      %v2324 = vpop.f32.mrb[0].mxu0
      %v2325 = vadd.f32 %v2100, %v2324
      %v2326 = vpop.f32.mrb[0].mxu0
      %2327 = vmatprep.mubr.f32.mxu0 0.0
      %2328 = vmatmul.mubr.f32.gmra.mrb[0].mxu0 %v1885
      %v2329 = vpop.f32.mrb[0].mxu0
      %v2330 = vadd.f32 %v2105, %v2329
      %v2331 = vpop.f32.mrb[0].mxu0
      %2332 = vmatprep.mubr.f32.mxu0 0.0
      %2333 = vmatmul.mubr.f32.gmra.mrb[0].mxu0 %v1888
      %v2334 = vpop.f32.mrb[0].mxu0
      %v2335 = vadd.f32 %v2110, %v2334
      %v2336 = vpop.f32.mrb[0].mxu0
      %2337 = vmatprep.mubr.f32.mxu0 0.0
      %2338 = vmatmul.mubr.f32.gmra.mrb[0].mxu0 %v1891
      %v2339 = vpop.f32.mrb[0].mxu0
      %v2340 = vadd.f32 %v2115, %v2339
      %v2341 = vpop.f32.mrb[0].mxu0
      %2342 = vdwg.mxu0
      %v2343 = vmax.f32 %v2185, 0.0
      %v2344 = vmax.f32 %v2190, 0.0
      %v2345 = vmax.f32 %v2195, 0.0
      %v2346 = vmax.f32 %v2200, 0.0
      %v2347 = vmax.f32 %v2205, 0.0
      %v2348 = vmax.f32 %v2210, 0.0
      %v2349 = vmax.f32 %v2215, 0.0
      %v2350 = vmax.f32 %v2220, 0.0
      %v2351 = vmax.f32 %v2225, 0.0
      %v2352 = vmax.f32 %v2230, 0.0
      %v2353 = vmax.f32 %v2235, 0.0
      %v2354 = vmax.f32 %v2240, 0.0
      %v2355 = vmax.f32 %v2245, 0.0
      %v2356 = vmax.f32 %v2250, 0.0
      %v2357 = vmax.f32 %v2255, 0.0
      %v2358 = vmax.f32 %v2260, 0.0
      %v2359 = vmax.f32 %v2265, 0.0
      %v2360 = vmax.f32 %v2270, 0.0
      %v2361 = vmax.f32 %v2275, 0.0
      %v2362 = vmax.f32 %v2280, 0.0
      %v2363 = vmax.f32 %v2285, 0.0
      %v2364 = vmax.f32 %v2290, 0.0
      %v2365 = vmax.f32 %v2295, 0.0
      %v2366 = vmax.f32 %v2300, 0.0
      %v2367 = vmax.f32 %v2305, 0.0
      %v2368 = vmax.f32 %v2310, 0.0
      %v2369 = vmax.f32 %v2315, 0.0
      %v2370 = vmax.f32 %v2320, 0.0
      %v2371 = vmax.f32 %v2325, 0.0
      %v2372 = vmax.f32 %v2330, 0.0
      %v2373 = vmax.f32 %v2335, 0.0
      %v2374 = vmax.f32 %v2340, 0.0
      %vm2375 = vcmask 130048
      %2376 = vst.msk [vmem:[#allocation3] sm:$0xff] %vm2375, 0.0
      %2377 = vst.msk [vmem:[#allocation3 + $0x8] sm:$0xff] %vm2375, 0.0
      %vm2378 = vcmask 123904
      %2379 = vst.msk [vmem:[#allocation3 + $0x10] sm:$0x3] %vm2378, 0.0
      %s2380 = scalar_lea.vmem [#allocation3], 408
      %2381 = vst.msk [vmem:[%s2380] sm:$0xff] %vm2375, 0.0
      %2382 = vst.msk [vmem:[%s2380 + $0x8] sm:$0xff] %vm2375, 0.0
      %2383 = vst.msk [vmem:[%s2380 + $0x10] sm:$0x3] %vm2378, 0.0
      %v2416 = vrot.slane %v2343, 7
      %v2417 = vrot.slane %v2344, 7
      %v2418 = vsel %vm325, %v2416, %v2417
      %v2419 = vrot.slane %v2345, 7
      %v2420 = vrot.slane %v2346, 7
      %v2421 = vsel %vm325, %v2419, %v2420
      %v2422 = vrot.slane %v2347, 7
      %v2423 = vrot.slane %v2348, 7
      %v2424 = vsel %vm325, %v2422, %v2423
      %v2425 = vrot.slane %v2349, 7
      %v2426 = vrot.slane %v2350, 7
      %v2427 = vsel %vm325, %v2425, %v2426
      %v2428 = vrot.slane %v2351, 7
      %v2429 = vrot.slane %v2352, 7
      %v2430 = vsel %vm325, %v2428, %v2429
      %v2431 = vrot.slane %v2353, 7
      %v2432 = vrot.slane %v2354, 7
      %v2433 = vsel %vm325, %v2431, %v2432
      %v2434 = vrot.slane %v2355, 7
      %v2435 = vrot.slane %v2356, 7
      %v2436 = vsel %vm325, %v2434, %v2435
      %v2437 = vrot.slane %v2357, 7
      %v2438 = vrot.slane %v2358, 7
      %v2439 = vsel %vm325, %v2437, %v2438
      %v2440 = vrot.slane %v2359, 7
      %v2441 = vrot.slane %v2360, 7
      %v2442 = vsel %vm325, %v2440, %v2441
      %v2443 = vrot.slane %v2361, 7
      %v2444 = vrot.slane %v2362, 7
      %v2445 = vsel %vm325, %v2443, %v2444
      %v2446 = vrot.slane %v2363, 7
      %v2447 = vrot.slane %v2364, 7
      %v2448 = vsel %vm325, %v2446, %v2447
      %v2449 = vrot.slane %v2365, 7
      %v2450 = vrot.slane %v2366, 7
      %v2451 = vsel %vm325, %v2449, %v2450
      %v2452 = vrot.slane %v2367, 7
      %v2453 = vrot.slane %v2368, 7
      %v2454 = vsel %vm325, %v2452, %v2453
      %v2455 = vrot.slane %v2369, 7
      %v2456 = vrot.slane %v2370, 7
      %v2457 = vsel %vm325, %v2455, %v2456
      %v2458 = vrot.slane %v2371, 7
      %v2459 = vrot.slane %v2372, 7
      %v2460 = vsel %vm325, %v2458, %v2459
      %v2461 = vrot.slane %v2373, 7
      %v2462 = vrot.slane %v2374, 7
      %v2463 = vsel %vm325, %v2461, %v2462
      %v2512 = vsel %vm325, 0.0, %v2416
      %v2513 = vsel %vm325, 0.0, %v2419
      %v2514 = vsel %vm325, 0.0, %v2422
      %v2515 = vsel %vm325, 0.0, %v2425
      %v2516 = vsel %vm325, 0.0, %v2428
      %v2517 = vsel %vm325, 0.0, %v2431
      %v2518 = vsel %vm325, 0.0, %v2434
      %v2519 = vsel %vm325, 0.0, %v2437
      %v2520 = vsel %vm325, 0.0, %v2440
      %v2521 = vsel %vm325, 0.0, %v2443
      %v2522 = vsel %vm325, 0.0, %v2446
      %v2523 = vsel %vm325, 0.0, %v2449
      %v2524 = vsel %vm325, 0.0, %v2452
      %v2525 = vsel %vm325, 0.0, %v2455
      %v2526 = vsel %vm325, 0.0, %v2458
      %v2527 = vsel %vm325, 0.0, %v2461
      %v2528 = vsel %vm325, %v2417, 0.0
      %v2529 = vsel %vm325, %v2420, 0.0
      %v2530 = vsel %vm325, %v2423, 0.0
      %v2531 = vsel %vm325, %v2426, 0.0
      %v2532 = vsel %vm325, %v2429, 0.0
      %v2533 = vsel %vm325, %v2432, 0.0
      %v2534 = vsel %vm325, %v2435, 0.0
      %v2535 = vsel %vm325, %v2438, 0.0
      %v2536 = vsel %vm325, %v2441, 0.0
      %v2537 = vsel %vm325, %v2444, 0.0
      %v2538 = vsel %vm325, %v2447, 0.0
      %v2539 = vsel %vm325, %v2450, 0.0
      %v2540 = vsel %vm325, %v2453, 0.0
      %v2541 = vsel %vm325, %v2456, 0.0
      %v2542 = vsel %vm325, %v2459, 0.0
      %v2543 = vsel %vm325, %v2462, 0.0
      %s2544 = scalar_lea.vmem [#allocation3], 24
      %2545 = vst.msk [vmem:[%s2544] sm:$0xff] %vm2375, %v2512
      %2546 = vst.msk [vmem:[%s2544 + $0x8] sm:$0xff] %vm2375, %v2418
      %2547 = vst.msk [vmem:[%s2544 + $0x10] sm:$0x3] %vm2378, %v2528
      %2548 = vst.msk [vmem:[%s2544 + $0x18] sm:$0xff] %vm2375, %v2513
      %2549 = vst.msk [vmem:[%s2544 + $0x20] sm:$0xff] %vm2375, %v2421
      %2550 = vst.msk [vmem:[%s2544 + $0x28] sm:$0x3] %vm2378, %v2529
      %2551 = vst.msk [vmem:[%s2544 + $0x30] sm:$0xff] %vm2375, %v2514
      %2552 = vst.msk [vmem:[%s2544 + $0x38] sm:$0xff] %vm2375, %v2424
      %2553 = vst.msk [vmem:[%s2544 + $0x40] sm:$0x3] %vm2378, %v2530
      %2554 = vst.msk [vmem:[%s2544 + $0x48] sm:$0xff] %vm2375, %v2515
      %2555 = vst.msk [vmem:[%s2544 + $0x50] sm:$0xff] %vm2375, %v2427
      %2556 = vst.msk [vmem:[%s2544 + $0x58] sm:$0x3] %vm2378, %v2531
      %2557 = vst.msk [vmem:[%s2544 + $0x60] sm:$0xff] %vm2375, %v2516
      %2558 = vst.msk [vmem:[%s2544 + $0x68] sm:$0xff] %vm2375, %v2430
      %2559 = vst.msk [vmem:[%s2544 + $0x70] sm:$0x3] %vm2378, %v2532
      %2560 = vst.msk [vmem:[%s2544 + $0x78] sm:$0xff] %vm2375, %v2517
      %2561 = vst.msk [vmem:[%s2544 + $0x80] sm:$0xff] %vm2375, %v2433
      %2562 = vst.msk [vmem:[%s2544 + $0x88] sm:$0x3] %vm2378, %v2533
      %2563 = vst.msk [vmem:[%s2544 + $0x90] sm:$0xff] %vm2375, %v2518
      %2564 = vst.msk [vmem:[%s2544 + $0x98] sm:$0xff] %vm2375, %v2436
      %2565 = vst.msk [vmem:[%s2544 + $0xa0] sm:$0x3] %vm2378, %v2534
      %2566 = vst.msk [vmem:[%s2544 + $0xa8] sm:$0xff] %vm2375, %v2519
      %2567 = vst.msk [vmem:[%s2544 + $0xb0] sm:$0xff] %vm2375, %v2439
      %2568 = vst.msk [vmem:[%s2544 + $0xb8] sm:$0x3] %vm2378, %v2535
      %2569 = vst.msk [vmem:[%s2544 + $0xc0] sm:$0xff] %vm2375, %v2520
      %2570 = vst.msk [vmem:[%s2544 + $0xc8] sm:$0xff] %vm2375, %v2442
      %2571 = vst.msk [vmem:[%s2544 + $0xd0] sm:$0x3] %vm2378, %v2536
      %2572 = vst.msk [vmem:[%s2544 + $0xd8] sm:$0xff] %vm2375, %v2521
      %2573 = vst.msk [vmem:[%s2544 + $0xe0] sm:$0xff] %vm2375, %v2445
      %2574 = vst.msk [vmem:[%s2544 + $0xe8] sm:$0x3] %vm2378, %v2537
      %2575 = vst.msk [vmem:[%s2544 + $0xf0] sm:$0xff] %vm2375, %v2522
      %2576 = vst.msk [vmem:[%s2544 + $0xf8] sm:$0xff] %vm2375, %v2448
      %2577 = vst.msk [vmem:[%s2544 + $0x100] sm:$0x3] %vm2378, %v2538
      %2578 = vst.msk [vmem:[%s2544 + $0x108] sm:$0xff] %vm2375, %v2523
      %2579 = vst.msk [vmem:[%s2544 + $0x110] sm:$0xff] %vm2375, %v2451
      %2580 = vst.msk [vmem:[%s2544 + $0x118] sm:$0x3] %vm2378, %v2539
      %2581 = vst.msk [vmem:[%s2544 + $0x120] sm:$0xff] %vm2375, %v2524
      %2582 = vst.msk [vmem:[%s2544 + $0x128] sm:$0xff] %vm2375, %v2454
      %2583 = vst.msk [vmem:[%s2544 + $0x130] sm:$0x3] %vm2378, %v2540
      %2584 = vst.msk [vmem:[%s2544 + $0x138] sm:$0xff] %vm2375, %v2525
      %2585 = vst.msk [vmem:[%s2544 + $0x140] sm:$0xff] %vm2375, %v2457
      %2586 = vst.msk [vmem:[%s2544 + $0x148] sm:$0x3] %vm2378, %v2541
      %2587 = vst.msk [vmem:[%s2544 + $0x150] sm:$0xff] %vm2375, %v2526
      %2588 = vst.msk [vmem:[%s2544 + $0x158] sm:$0xff] %vm2375, %v2460
      %2589 = vst.msk [vmem:[%s2544 + $0x160] sm:$0x3] %vm2378, %v2542
      %2590 = vst.msk [vmem:[%s2544 + $0x168] sm:$0xff] %vm2375, %v2527
      %2591 = vst.msk [vmem:[%s2544 + $0x170] sm:$0xff] %vm2375, %v2463
      %2592 = vst.msk [vmem:[%s2544 + $0x178] sm:$0x3] %vm2378, %v2543
      %v2593 = vld [vmem:[#allocation3] sm:$0xff]
      %v2594 = vld [vmem:[#allocation3 + $0x8] sm:$0xff]
      %v2595 = vld [vmem:[#allocation3 + $0x18] sm:$0xff]
      %v2596 = vld [vmem:[#allocation3 + $0x20] sm:$0xff]
      %v2597 = vld [vmem:[#allocation3 + $0x30] sm:$0xff]
      %v2598 = vld [vmem:[#allocation3 + $0x38] sm:$0xff]
      %v2599 = vld [vmem:[#allocation3 + $0x48] sm:$0xff]
      %v2600 = vld [vmem:[#allocation3 + $0x50] sm:$0xff]
      %v2601 = vld [vmem:[#allocation3 + $0x60] sm:$0xff]
      %v2602 = vld [vmem:[#allocation3 + $0x68] sm:$0xff]
      %v2603 = vld [vmem:[#allocation3 + $0x78] sm:$0xff]
      %v2604 = vld [vmem:[#allocation3 + $0x80] sm:$0xff]
      %v2605 = vld [vmem:[#allocation3 + $0x90] sm:$0xff]
      %v2606 = vld [vmem:[#allocation3 + $0x98] sm:$0xff]
      %v2607 = vld [vmem:[#allocation3 + $0xa8] sm:$0xff]
      %v2608 = vld [vmem:[#allocation3 + $0xb0] sm:$0xff]
      %v2609 = vld [vmem:[#allocation3 + $0xc0] sm:$0xff]
      %v2610 = vld [vmem:[#allocation3 + $0xc8] sm:$0xff]
      %v2611 = vld [vmem:[#allocation3 + $0xd8] sm:$0xff]
      %v2612 = vld [vmem:[#allocation3 + $0xe0] sm:$0xff]
      %v2613 = vld [vmem:[#allocation3 + $0xf0] sm:$0xff]
      %v2614 = vld [vmem:[#allocation3 + $0xf8] sm:$0xff]
      %v2615 = vld [vmem:[#allocation3 + $0x108] sm:$0xff]
      %v2616 = vld [vmem:[#allocation3 + $0x110] sm:$0xff]
      %v2617 = vld [vmem:[#allocation3 + $0x120] sm:$0xff]
      %v2618 = vld [vmem:[#allocation3 + $0x128] sm:$0xff]
      %v2619 = vld [vmem:[#allocation3 + $0x138] sm:$0xff]
      %v2620 = vld [vmem:[#allocation3 + $0x140] sm:$0xff]
      %v2621 = vld [vmem:[#allocation3 + $0x150] sm:$0xff]
      %v2622 = vld [vmem:[#allocation3 + $0x158] sm:$0xff]
      %v2623 = vld [vmem:[#allocation3 + $0x168] sm:$0xff]
      %v2624 = vld [vmem:[#allocation3 + $0x170] sm:$0xff]
      %v2625 = vld [vmem:[#allocation3 + $0x1] sm:$0xff]
      %v2626 = vld [vmem:[#allocation3 + $0x9] sm:$0xff]
      %v2627 = vld [vmem:[#allocation3 + $0x19] sm:$0xff]
      %v2628 = vld [vmem:[#allocation3 + $0x21] sm:$0xff]
      %v2629 = vld [vmem:[#allocation3 + $0x31] sm:$0xff]
      %v2630 = vld [vmem:[#allocation3 + $0x39] sm:$0xff]
      %v2631 = vld [vmem:[#allocation3 + $0x49] sm:$0xff]
      %v2632 = vld [vmem:[#allocation3 + $0x51] sm:$0xff]
      %v2633 = vld [vmem:[#allocation3 + $0x61] sm:$0xff]
      %v2634 = vld [vmem:[#allocation3 + $0x69] sm:$0xff]
      %v2635 = vld [vmem:[#allocation3 + $0x79] sm:$0xff]
      %v2636 = vld [vmem:[#allocation3 + $0x81] sm:$0xff]
      %v2637 = vld [vmem:[#allocation3 + $0x91] sm:$0xff]
      %v2638 = vld [vmem:[#allocation3 + $0x99] sm:$0xff]
      %v2639 = vld [vmem:[#allocation3 + $0xa9] sm:$0xff]
      %v2640 = vld [vmem:[#allocation3 + $0xb1] sm:$0xff]
      %v2641 = vld [vmem:[#allocation3 + $0xc1] sm:$0xff]
      %v2642 = vld [vmem:[#allocation3 + $0xc9] sm:$0xff]
      %v2643 = vld [vmem:[#allocation3 + $0xd9] sm:$0xff]
      %v2644 = vld [vmem:[#allocation3 + $0xe1] sm:$0xff]
      %v2645 = vld [vmem:[#allocation3 + $0xf1] sm:$0xff]
      %v2646 = vld [vmem:[#allocation3 + $0xf9] sm:$0xff]
      %v2647 = vld [vmem:[#allocation3 + $0x109] sm:$0xff]
      %v2648 = vld [vmem:[#allocation3 + $0x111] sm:$0xff]
      %v2649 = vld [vmem:[#allocation3 + $0x121] sm:$0xff]
      %v2650 = vld [vmem:[#allocation3 + $0x129] sm:$0xff]
      %v2651 = vld [vmem:[#allocation3 + $0x139] sm:$0xff]
      %v2652 = vld [vmem:[#allocation3 + $0x141] sm:$0xff]
      %v2653 = vld [vmem:[#allocation3 + $0x151] sm:$0xff]
      %v2654 = vld [vmem:[#allocation3 + $0x159] sm:$0xff]
      %v2655 = vld [vmem:[#allocation3 + $0x169] sm:$0xff]
      %v2656 = vld [vmem:[#allocation3 + $0x171] sm:$0xff]
      %v2657 = vld [vmem:[#allocation3 + $0x2] sm:$0xff]
      %v2658 = vld [vmem:[#allocation3 + $0xa] sm:$0xff]
      %v2659 = vld [vmem:[#allocation3 + $0x1a] sm:$0xff]
      %v2660 = vld [vmem:[#allocation3 + $0x22] sm:$0xff]
      %v2661 = vld [vmem:[#allocation3 + $0x32] sm:$0xff]
      %v2662 = vld [vmem:[#allocation3 + $0x3a] sm:$0xff]
      %v2663 = vld [vmem:[#allocation3 + $0x4a] sm:$0xff]
      %v2664 = vld [vmem:[#allocation3 + $0x52] sm:$0xff]
      %v2665 = vld [vmem:[#allocation3 + $0x62] sm:$0xff]
      %v2666 = vld [vmem:[#allocation3 + $0x6a] sm:$0xff]
      %v2667 = vld [vmem:[#allocation3 + $0x7a] sm:$0xff]
      %v2668 = vld [vmem:[#allocation3 + $0x82] sm:$0xff]
      %v2669 = vld [vmem:[#allocation3 + $0x92] sm:$0xff]
      %v2670 = vld [vmem:[#allocation3 + $0x9a] sm:$0xff]
      %v2671 = vld [vmem:[#allocation3 + $0xaa] sm:$0xff]
      %v2672 = vld [vmem:[#allocation3 + $0xb2] sm:$0xff]
      %v2673 = vld [vmem:[#allocation3 + $0xc2] sm:$0xff]
      %v2674 = vld [vmem:[#allocation3 + $0xca] sm:$0xff]
      %v2675 = vld [vmem:[#allocation3 + $0xda] sm:$0xff]
      %v2676 = vld [vmem:[#allocation3 + $0xe2] sm:$0xff]
      %v2677 = vld [vmem:[#allocation3 + $0xf2] sm:$0xff]
      %v2678 = vld [vmem:[#allocation3 + $0xfa] sm:$0xff]
      %v2679 = vld [vmem:[#allocation3 + $0x10a] sm:$0xff]
      %v2680 = vld [vmem:[#allocation3 + $0x112] sm:$0xff]
      %v2681 = vld [vmem:[#allocation3 + $0x122] sm:$0xff]
      %v2682 = vld [vmem:[#allocation3 + $0x12a] sm:$0xff]
      %v2683 = vld [vmem:[#allocation3 + $0x13a] sm:$0xff]
      %v2684 = vld [vmem:[#allocation3 + $0x142] sm:$0xff]
      %v2685 = vld [vmem:[#allocation3 + $0x152] sm:$0xff]
      %v2686 = vld [vmem:[#allocation3 + $0x15a] sm:$0xff]
      %v2687 = vld [vmem:[#allocation3 + $0x16a] sm:$0xff]
      %v2688 = vld [vmem:[#allocation3 + $0x172] sm:$0xff]
      %v2689 = vld [vmem:[%s2544] sm:$0xff]
      %v2690 = vld [vmem:[%s2544 + $0x8] sm:$0xff]
      %v2691 = vld [vmem:[%s2544 + $0x18] sm:$0xff]
      %v2692 = vld [vmem:[%s2544 + $0x20] sm:$0xff]
      %v2693 = vld [vmem:[%s2544 + $0x30] sm:$0xff]
      %v2694 = vld [vmem:[%s2544 + $0x38] sm:$0xff]
      %v2695 = vld [vmem:[%s2544 + $0x48] sm:$0xff]
      %v2696 = vld [vmem:[%s2544 + $0x50] sm:$0xff]
      %v2697 = vld [vmem:[%s2544 + $0x60] sm:$0xff]
      %v2698 = vld [vmem:[%s2544 + $0x68] sm:$0xff]
      %v2699 = vld [vmem:[%s2544 + $0x78] sm:$0xff]
      %v2700 = vld [vmem:[%s2544 + $0x80] sm:$0xff]
      %v2701 = vld [vmem:[%s2544 + $0x90] sm:$0xff]
      %v2702 = vld [vmem:[%s2544 + $0x98] sm:$0xff]
      %v2703 = vld [vmem:[%s2544 + $0xa8] sm:$0xff]
      %v2704 = vld [vmem:[%s2544 + $0xb0] sm:$0xff]
      %v2705 = vld [vmem:[%s2544 + $0xc0] sm:$0xff]
      %v2706 = vld [vmem:[%s2544 + $0xc8] sm:$0xff]
      %v2707 = vld [vmem:[%s2544 + $0xd8] sm:$0xff]
      %v2708 = vld [vmem:[%s2544 + $0xe0] sm:$0xff]
      %v2709 = vld [vmem:[%s2544 + $0xf0] sm:$0xff]
      %v2710 = vld [vmem:[%s2544 + $0xf8] sm:$0xff]
      %v2711 = vld [vmem:[%s2544 + $0x108] sm:$0xff]
      %v2712 = vld [vmem:[%s2544 + $0x110] sm:$0xff]
      %v2713 = vld [vmem:[%s2544 + $0x120] sm:$0xff]
      %v2714 = vld [vmem:[%s2544 + $0x128] sm:$0xff]
      %v2715 = vld [vmem:[%s2544 + $0x138] sm:$0xff]
      %v2716 = vld [vmem:[%s2544 + $0x140] sm:$0xff]
      %v2717 = vld [vmem:[%s2544 + $0x150] sm:$0xff]
      %v2718 = vld [vmem:[%s2544 + $0x158] sm:$0xff]
      %v2719 = vld [vmem:[%s2544 + $0x168] sm:$0xff]
      %v2720 = vld [vmem:[%s2544 + $0x170] sm:$0xff]
      %v2721 = vld [vmem:[%s2544 + $0x1] sm:$0xff]
      %v2722 = vld [vmem:[%s2544 + $0x9] sm:$0xff]
      %v2723 = vld [vmem:[%s2544 + $0x19] sm:$0xff]
      %v2724 = vld [vmem:[%s2544 + $0x21] sm:$0xff]
      %v2725 = vld [vmem:[%s2544 + $0x31] sm:$0xff]
      %v2726 = vld [vmem:[%s2544 + $0x39] sm:$0xff]
      %v2727 = vld [vmem:[%s2544 + $0x49] sm:$0xff]
      %v2728 = vld [vmem:[%s2544 + $0x51] sm:$0xff]
      %v2729 = vld [vmem:[%s2544 + $0x61] sm:$0xff]
      %v2730 = vld [vmem:[%s2544 + $0x69] sm:$0xff]
      %v2731 = vld [vmem:[%s2544 + $0x79] sm:$0xff]
      %v2732 = vld [vmem:[%s2544 + $0x81] sm:$0xff]
      %v2733 = vld [vmem:[%s2544 + $0x91] sm:$0xff]
      %v2734 = vld [vmem:[%s2544 + $0x99] sm:$0xff]
      %v2735 = vld [vmem:[%s2544 + $0xa9] sm:$0xff]
      %v2736 = vld [vmem:[%s2544 + $0xb1] sm:$0xff]
      %v2737 = vld [vmem:[%s2544 + $0xc1] sm:$0xff]
      %v2738 = vld [vmem:[%s2544 + $0xc9] sm:$0xff]
      %v2739 = vld [vmem:[%s2544 + $0xd9] sm:$0xff]
      %v2740 = vld [vmem:[%s2544 + $0xe1] sm:$0xff]
      %v2741 = vld [vmem:[%s2544 + $0xf1] sm:$0xff]
      %v2742 = vld [vmem:[%s2544 + $0xf9] sm:$0xff]
      %v2743 = vld [vmem:[%s2544 + $0x109] sm:$0xff]
      %v2744 = vld [vmem:[%s2544 + $0x111] sm:$0xff]
      %v2745 = vld [vmem:[%s2544 + $0x121] sm:$0xff]
      %v2746 = vld [vmem:[%s2544 + $0x129] sm:$0xff]
      %v2747 = vld [vmem:[%s2544 + $0x139] sm:$0xff]
      %v2748 = vld [vmem:[%s2544 + $0x141] sm:$0xff]
      %v2749 = vld [vmem:[%s2544 + $0x151] sm:$0xff]
      %v2750 = vld [vmem:[%s2544 + $0x159] sm:$0xff]
      %v2751 = vld [vmem:[%s2544 + $0x169] sm:$0xff]
      %v2752 = vld [vmem:[%s2544 + $0x171] sm:$0xff]
      %v2753 = vld [vmem:[%s2544 + $0x2] sm:$0xff]
      %v2754 = vld [vmem:[%s2544 + $0xa] sm:$0xff]
      %v2755 = vld [vmem:[%s2544 + $0x1a] sm:$0xff]
      %v2756 = vld [vmem:[%s2544 + $0x22] sm:$0xff]
      %v2757 = vld [vmem:[%s2544 + $0x32] sm:$0xff]
      %v2758 = vld [vmem:[%s2544 + $0x3a] sm:$0xff]
      %v2759 = vld [vmem:[%s2544 + $0x4a] sm:$0xff]
      %v2760 = vld [vmem:[%s2544 + $0x52] sm:$0xff]
      %v2761 = vld [vmem:[%s2544 + $0x62] sm:$0xff]
      %v2762 = vld [vmem:[%s2544 + $0x6a] sm:$0xff]
      %v2763 = vld [vmem:[%s2544 + $0x7a] sm:$0xff]
      %v2764 = vld [vmem:[%s2544 + $0x82] sm:$0xff]
      %v2765 = vld [vmem:[%s2544 + $0x92] sm:$0xff]
      %v2766 = vld [vmem:[%s2544 + $0x9a] sm:$0xff]
      %v2767 = vld [vmem:[%s2544 + $0xaa] sm:$0xff]
      %v2768 = vld [vmem:[%s2544 + $0xb2] sm:$0xff]
      %v2769 = vld [vmem:[%s2544 + $0xc2] sm:$0xff]
      %v2770 = vld [vmem:[%s2544 + $0xca] sm:$0xff]
      %v2771 = vld [vmem:[%s2544 + $0xda] sm:$0xff]
      %v2772 = vld [vmem:[%s2544 + $0xe2] sm:$0xff]
      %v2773 = vld [vmem:[%s2544 + $0xf2] sm:$0xff]
      %v2774 = vld [vmem:[%s2544 + $0xfa] sm:$0xff]
      %v2775 = vld [vmem:[%s2544 + $0x10a] sm:$0xff]
      %v2776 = vld [vmem:[%s2544 + $0x112] sm:$0xff]
      %v2777 = vld [vmem:[%s2544 + $0x122] sm:$0xff]
      %v2778 = vld [vmem:[%s2544 + $0x12a] sm:$0xff]
      %v2779 = vld [vmem:[%s2544 + $0x13a] sm:$0xff]
      %v2780 = vld [vmem:[%s2544 + $0x142] sm:$0xff]
      %v2781 = vld [vmem:[%s2544 + $0x152] sm:$0xff]
      %v2782 = vld [vmem:[%s2544 + $0x15a] sm:$0xff]
      %v2783 = vld [vmem:[%s2544 + $0x16a] sm:$0xff]
      %v2784 = vld [vmem:[%s2544 + $0x172] sm:$0xff]
      %s2785 = scalar_lea.vmem [#allocation3], 48
      %v2786 = vld [vmem:[%s2785] sm:$0xff]
      %v2787 = vld [vmem:[%s2785 + $0x8] sm:$0xff]
      %v2788 = vld [vmem:[%s2785 + $0x18] sm:$0xff]
      %v2789 = vld [vmem:[%s2785 + $0x20] sm:$0xff]
      %v2790 = vld [vmem:[%s2785 + $0x30] sm:$0xff]
      %v2791 = vld [vmem:[%s2785 + $0x38] sm:$0xff]
      %v2792 = vld [vmem:[%s2785 + $0x48] sm:$0xff]
      %v2793 = vld [vmem:[%s2785 + $0x50] sm:$0xff]
      %v2794 = vld [vmem:[%s2785 + $0x60] sm:$0xff]
      %v2795 = vld [vmem:[%s2785 + $0x68] sm:$0xff]
      %v2796 = vld [vmem:[%s2785 + $0x78] sm:$0xff]
      %v2797 = vld [vmem:[%s2785 + $0x80] sm:$0xff]
      %v2798 = vld [vmem:[%s2785 + $0x90] sm:$0xff]
      %v2799 = vld [vmem:[%s2785 + $0x98] sm:$0xff]
      %v2800 = vld [vmem:[%s2785 + $0xa8] sm:$0xff]
      %v2801 = vld [vmem:[%s2785 + $0xb0] sm:$0xff]
      %v2802 = vld [vmem:[%s2785 + $0xc0] sm:$0xff]
      %v2803 = vld [vmem:[%s2785 + $0xc8] sm:$0xff]
      %v2804 = vld [vmem:[%s2785 + $0xd8] sm:$0xff]
      %v2805 = vld [vmem:[%s2785 + $0xe0] sm:$0xff]
      %v2806 = vld [vmem:[%s2785 + $0xf0] sm:$0xff]
      %v2807 = vld [vmem:[%s2785 + $0xf8] sm:$0xff]
      %v2808 = vld [vmem:[%s2785 + $0x108] sm:$0xff]
      %v2809 = vld [vmem:[%s2785 + $0x110] sm:$0xff]
      %v2810 = vld [vmem:[%s2785 + $0x120] sm:$0xff]
      %v2811 = vld [vmem:[%s2785 + $0x128] sm:$0xff]
      %v2812 = vld [vmem:[%s2785 + $0x138] sm:$0xff]
      %v2813 = vld [vmem:[%s2785 + $0x140] sm:$0xff]
      %v2814 = vld [vmem:[%s2785 + $0x150] sm:$0xff]
      %v2815 = vld [vmem:[%s2785 + $0x158] sm:$0xff]
      %v2816 = vld [vmem:[%s2785 + $0x168] sm:$0xff]
      %v2817 = vld [vmem:[%s2785 + $0x170] sm:$0xff]
      %v2818 = vld [vmem:[%s2785 + $0x1] sm:$0xff]
      %v2819 = vld [vmem:[%s2785 + $0x9] sm:$0xff]
      %v2820 = vld [vmem:[%s2785 + $0x19] sm:$0xff]
      %v2821 = vld [vmem:[%s2785 + $0x21] sm:$0xff]
      %v2822 = vld [vmem:[%s2785 + $0x31] sm:$0xff]
      %v2823 = vld [vmem:[%s2785 + $0x39] sm:$0xff]
      %v2824 = vld [vmem:[%s2785 + $0x49] sm:$0xff]
      %v2825 = vld [vmem:[%s2785 + $0x51] sm:$0xff]
      %v2826 = vld [vmem:[%s2785 + $0x61] sm:$0xff]
      %v2827 = vld [vmem:[%s2785 + $0x69] sm:$0xff]
      %v2828 = vld [vmem:[%s2785 + $0x79] sm:$0xff]
      %v2829 = vld [vmem:[%s2785 + $0x81] sm:$0xff]
      %v2830 = vld [vmem:[%s2785 + $0x91] sm:$0xff]
      %v2831 = vld [vmem:[%s2785 + $0x99] sm:$0xff]
      %v2832 = vld [vmem:[%s2785 + $0xa9] sm:$0xff]
      %v2833 = vld [vmem:[%s2785 + $0xb1] sm:$0xff]
      %v2834 = vld [vmem:[%s2785 + $0xc1] sm:$0xff]
      %v2835 = vld [vmem:[%s2785 + $0xc9] sm:$0xff]
      %v2836 = vld [vmem:[%s2785 + $0xd9] sm:$0xff]
      %v2837 = vld [vmem:[%s2785 + $0xe1] sm:$0xff]
      %v2838 = vld [vmem:[%s2785 + $0xf1] sm:$0xff]
      %v2839 = vld [vmem:[%s2785 + $0xf9] sm:$0xff]
      %v2840 = vld [vmem:[%s2785 + $0x109] sm:$0xff]
      %v2841 = vld [vmem:[%s2785 + $0x111] sm:$0xff]
      %v2842 = vld [vmem:[%s2785 + $0x121] sm:$0xff]
      %v2843 = vld [vmem:[%s2785 + $0x129] sm:$0xff]
      %v2844 = vld [vmem:[%s2785 + $0x139] sm:$0xff]
      %v2845 = vld [vmem:[%s2785 + $0x141] sm:$0xff]
      %v2846 = vld [vmem:[%s2785 + $0x151] sm:$0xff]
      %v2847 = vld [vmem:[%s2785 + $0x159] sm:$0xff]
      %v2848 = vld [vmem:[%s2785 + $0x169] sm:$0xff]
      %v2849 = vld [vmem:[%s2785 + $0x171] sm:$0xff]
      %v2850 = vld [vmem:[%s2785 + $0x2] sm:$0xff]
      %v2851 = vld [vmem:[%s2785 + $0xa] sm:$0xff]
      %v2852 = vld [vmem:[%s2785 + $0x1a] sm:$0xff]
      %v2853 = vld [vmem:[%s2785 + $0x22] sm:$0xff]
      %v2854 = vld [vmem:[%s2785 + $0x32] sm:$0xff]
      %v2855 = vld [vmem:[%s2785 + $0x3a] sm:$0xff]
      %v2856 = vld [vmem:[%s2785 + $0x4a] sm:$0xff]
      %v2857 = vld [vmem:[%s2785 + $0x52] sm:$0xff]
      %v2858 = vld [vmem:[%s2785 + $0x62] sm:$0xff]
      %v2859 = vld [vmem:[%s2785 + $0x6a] sm:$0xff]
      %v2860 = vld [vmem:[%s2785 + $0x7a] sm:$0xff]
      %v2861 = vld [vmem:[%s2785 + $0x82] sm:$0xff]
      %v2862 = vld [vmem:[%s2785 + $0x92] sm:$0xff]
      %v2863 = vld [vmem:[%s2785 + $0x9a] sm:$0xff]
      %v2864 = vld [vmem:[%s2785 + $0xaa] sm:$0xff]
      %v2865 = vld [vmem:[%s2785 + $0xb2] sm:$0xff]
      %v2866 = vld [vmem:[%s2785 + $0xc2] sm:$0xff]
      %v2867 = vld [vmem:[%s2785 + $0xca] sm:$0xff]
      %v2868 = vld [vmem:[%s2785 + $0xda] sm:$0xff]
      %v2869 = vld [vmem:[%s2785 + $0xe2] sm:$0xff]
      %v2870 = vld [vmem:[%s2785 + $0xf2] sm:$0xff]
      %v2871 = vld [vmem:[%s2785 + $0xfa] sm:$0xff]
      %v2872 = vld [vmem:[%s2785 + $0x10a] sm:$0xff]
      %v2873 = vld [vmem:[%s2785 + $0x112] sm:$0xff]
      %v2874 = vld [vmem:[%s2785 + $0x122] sm:$0xff]
      %v2875 = vld [vmem:[%s2785 + $0x12a] sm:$0xff]
      %v2876 = vld [vmem:[%s2785 + $0x13a] sm:$0xff]
      %v2877 = vld [vmem:[%s2785 + $0x142] sm:$0xff]
      %v2878 = vld [vmem:[%s2785 + $0x152] sm:$0xff]
      %v2879 = vld [vmem:[%s2785 + $0x15a] sm:$0xff]
      %v2880 = vld [vmem:[%s2785 + $0x16a] sm:$0xff]
      %v2881 = vld [vmem:[%s2785 + $0x172] sm:$0xff]
      %2914 = vrot.lane.b32.xlu0 %v2625, 16
      %v2915 = vpop.permute.xlu0 %2914
      %2916 = vrot.lane.b32.xlu0 %v2626, 16
      %v2917 = vpop.permute.xlu0 %2916
      %2918 = vrot.lane.b32.xlu0 %v2627, 16
      %v2919 = vpop.permute.xlu0 %2918
      %2920 = vrot.lane.b32.xlu0 %v2628, 16
      %v2921 = vpop.permute.xlu0 %2920
      %2922 = vrot.lane.b32.xlu0 %v2629, 16
      %v2923 = vpop.permute.xlu0 %2922
      %2924 = vrot.lane.b32.xlu0 %v2630, 16
      %v2925 = vpop.permute.xlu0 %2924
      %2926 = vrot.lane.b32.xlu0 %v2631, 16
      %v2927 = vpop.permute.xlu0 %2926
      %2928 = vrot.lane.b32.xlu0 %v2632, 16
      %v2929 = vpop.permute.xlu0 %2928
      %2930 = vrot.lane.b32.xlu0 %v2633, 16
      %v2931 = vpop.permute.xlu0 %2930
      %2932 = vrot.lane.b32.xlu0 %v2634, 16
      %v2933 = vpop.permute.xlu0 %2932
      %2934 = vrot.lane.b32.xlu0 %v2635, 16
      %v2935 = vpop.permute.xlu0 %2934
      %2936 = vrot.lane.b32.xlu0 %v2636, 16
      %v2937 = vpop.permute.xlu0 %2936
      %2938 = vrot.lane.b32.xlu0 %v2637, 16
      %v2939 = vpop.permute.xlu0 %2938
      %2940 = vrot.lane.b32.xlu0 %v2638, 16
      %v2941 = vpop.permute.xlu0 %2940
      %2942 = vrot.lane.b32.xlu0 %v2639, 16
      %v2943 = vpop.permute.xlu0 %2942
      %2944 = vrot.lane.b32.xlu0 %v2640, 16
      %v2945 = vpop.permute.xlu0 %2944
      %2946 = vrot.lane.b32.xlu0 %v2641, 16
      %v2947 = vpop.permute.xlu0 %2946
      %2948 = vrot.lane.b32.xlu0 %v2642, 16
      %v2949 = vpop.permute.xlu0 %2948
      %2950 = vrot.lane.b32.xlu0 %v2643, 16
      %v2951 = vpop.permute.xlu0 %2950
      %2952 = vrot.lane.b32.xlu0 %v2644, 16
      %v2953 = vpop.permute.xlu0 %2952
      %2954 = vrot.lane.b32.xlu0 %v2645, 16
      %v2955 = vpop.permute.xlu0 %2954
      %2956 = vrot.lane.b32.xlu0 %v2646, 16
      %v2957 = vpop.permute.xlu0 %2956
      %2958 = vrot.lane.b32.xlu0 %v2647, 16
      %v2959 = vpop.permute.xlu0 %2958
      %2960 = vrot.lane.b32.xlu0 %v2648, 16
      %v2961 = vpop.permute.xlu0 %2960
      %2962 = vrot.lane.b32.xlu0 %v2649, 16
      %v2963 = vpop.permute.xlu0 %2962
      %2964 = vrot.lane.b32.xlu0 %v2650, 16
      %v2965 = vpop.permute.xlu0 %2964
      %2966 = vrot.lane.b32.xlu0 %v2651, 16
      %v2967 = vpop.permute.xlu0 %2966
      %2968 = vrot.lane.b32.xlu0 %v2652, 16
      %v2969 = vpop.permute.xlu0 %2968
      %2970 = vrot.lane.b32.xlu0 %v2653, 16
      %v2971 = vpop.permute.xlu0 %2970
      %2972 = vrot.lane.b32.xlu0 %v2654, 16
      %v2973 = vpop.permute.xlu0 %2972
      %2974 = vrot.lane.b32.xlu0 %v2655, 16
      %v2975 = vpop.permute.xlu0 %2974
      %2976 = vrot.lane.b32.xlu0 %v2656, 16
      %v2977 = vpop.permute.xlu0 %2976
      %3042 = vrot.lane.b32.xlu0 %v2657, 32
      %v3043 = vpop.permute.xlu0 %3042
      %3044 = vrot.lane.b32.xlu0 %v2658, 32
      %v3045 = vpop.permute.xlu0 %3044
      %3046 = vrot.lane.b32.xlu0 %v2659, 32
      %v3047 = vpop.permute.xlu0 %3046
      %3048 = vrot.lane.b32.xlu0 %v2660, 32
      %v3049 = vpop.permute.xlu0 %3048
      %3050 = vrot.lane.b32.xlu0 %v2661, 32
      %v3051 = vpop.permute.xlu0 %3050
      %3052 = vrot.lane.b32.xlu0 %v2662, 32
      %v3053 = vpop.permute.xlu0 %3052
      %3054 = vrot.lane.b32.xlu0 %v2663, 32
      %v3055 = vpop.permute.xlu0 %3054
      %3056 = vrot.lane.b32.xlu0 %v2664, 32
      %v3057 = vpop.permute.xlu0 %3056
      %3058 = vrot.lane.b32.xlu0 %v2665, 32
      %v3059 = vpop.permute.xlu0 %3058
      %3060 = vrot.lane.b32.xlu0 %v2666, 32
      %v3061 = vpop.permute.xlu0 %3060
      %3062 = vrot.lane.b32.xlu0 %v2667, 32
      %v3063 = vpop.permute.xlu0 %3062
      %3064 = vrot.lane.b32.xlu0 %v2668, 32
      %v3065 = vpop.permute.xlu0 %3064
      %3066 = vrot.lane.b32.xlu0 %v2669, 32
      %v3067 = vpop.permute.xlu0 %3066
      %3068 = vrot.lane.b32.xlu0 %v2670, 32
      %v3069 = vpop.permute.xlu0 %3068
      %3070 = vrot.lane.b32.xlu0 %v2671, 32
      %v3071 = vpop.permute.xlu0 %3070
      %3072 = vrot.lane.b32.xlu0 %v2672, 32
      %v3073 = vpop.permute.xlu0 %3072
      %3074 = vrot.lane.b32.xlu0 %v2673, 32
      %v3075 = vpop.permute.xlu0 %3074
      %3076 = vrot.lane.b32.xlu0 %v2674, 32
      %v3077 = vpop.permute.xlu0 %3076
      %3078 = vrot.lane.b32.xlu0 %v2675, 32
      %v3079 = vpop.permute.xlu0 %3078
      %3080 = vrot.lane.b32.xlu0 %v2676, 32
      %v3081 = vpop.permute.xlu0 %3080
      %3082 = vrot.lane.b32.xlu0 %v2677, 32
      %v3083 = vpop.permute.xlu0 %3082
      %3084 = vrot.lane.b32.xlu0 %v2678, 32
      %v3085 = vpop.permute.xlu0 %3084
      %3086 = vrot.lane.b32.xlu0 %v2679, 32
      %v3087 = vpop.permute.xlu0 %3086
      %3088 = vrot.lane.b32.xlu0 %v2680, 32
      %v3089 = vpop.permute.xlu0 %3088
      %3090 = vrot.lane.b32.xlu0 %v2681, 32
      %v3091 = vpop.permute.xlu0 %3090
      %3092 = vrot.lane.b32.xlu0 %v2682, 32
      %v3093 = vpop.permute.xlu0 %3092
      %3094 = vrot.lane.b32.xlu0 %v2683, 32
      %v3095 = vpop.permute.xlu0 %3094
      %3096 = vrot.lane.b32.xlu0 %v2684, 32
      %v3097 = vpop.permute.xlu0 %3096
      %3098 = vrot.lane.b32.xlu0 %v2685, 32
      %v3099 = vpop.permute.xlu0 %3098
      %3100 = vrot.lane.b32.xlu0 %v2686, 32
      %v3101 = vpop.permute.xlu0 %3100
      %3102 = vrot.lane.b32.xlu0 %v2687, 32
      %v3103 = vpop.permute.xlu0 %3102
      %3104 = vrot.lane.b32.xlu0 %v2688, 32
      %v3105 = vpop.permute.xlu0 %3104
      %3170 = vrot.lane.b32.xlu0 %v2689, 48
      %v3171 = vpop.permute.xlu0 %3170
      %3172 = vrot.lane.b32.xlu0 %v2690, 48
      %v3173 = vpop.permute.xlu0 %3172
      %3174 = vrot.lane.b32.xlu0 %v2691, 48
      %v3175 = vpop.permute.xlu0 %3174
      %3176 = vrot.lane.b32.xlu0 %v2692, 48
      %v3177 = vpop.permute.xlu0 %3176
      %3178 = vrot.lane.b32.xlu0 %v2693, 48
      %v3179 = vpop.permute.xlu0 %3178
      %3180 = vrot.lane.b32.xlu0 %v2694, 48
      %v3181 = vpop.permute.xlu0 %3180
      %3182 = vrot.lane.b32.xlu0 %v2695, 48
      %v3183 = vpop.permute.xlu0 %3182
      %3184 = vrot.lane.b32.xlu0 %v2696, 48
      %v3185 = vpop.permute.xlu0 %3184
      %3186 = vrot.lane.b32.xlu0 %v2697, 48
      %v3187 = vpop.permute.xlu0 %3186
      %3188 = vrot.lane.b32.xlu0 %v2698, 48
      %v3189 = vpop.permute.xlu0 %3188
      %3190 = vrot.lane.b32.xlu0 %v2699, 48
      %v3191 = vpop.permute.xlu0 %3190
      %3192 = vrot.lane.b32.xlu0 %v2700, 48
      %v3193 = vpop.permute.xlu0 %3192
      %3194 = vrot.lane.b32.xlu0 %v2701, 48
      %v3195 = vpop.permute.xlu0 %3194
      %3196 = vrot.lane.b32.xlu0 %v2702, 48
      %v3197 = vpop.permute.xlu0 %3196
      %3198 = vrot.lane.b32.xlu0 %v2703, 48
      %v3199 = vpop.permute.xlu0 %3198
      %3200 = vrot.lane.b32.xlu0 %v2704, 48
      %v3201 = vpop.permute.xlu0 %3200
      %3202 = vrot.lane.b32.xlu0 %v2705, 48
      %v3203 = vpop.permute.xlu0 %3202
      %3204 = vrot.lane.b32.xlu0 %v2706, 48
      %v3205 = vpop.permute.xlu0 %3204
      %3206 = vrot.lane.b32.xlu0 %v2707, 48
      %v3207 = vpop.permute.xlu0 %3206
      %3208 = vrot.lane.b32.xlu0 %v2708, 48
      %v3209 = vpop.permute.xlu0 %3208
      %3210 = vrot.lane.b32.xlu0 %v2709, 48
      %v3211 = vpop.permute.xlu0 %3210
      %3212 = vrot.lane.b32.xlu0 %v2710, 48
      %v3213 = vpop.permute.xlu0 %3212
      %3214 = vrot.lane.b32.xlu0 %v2711, 48
      %v3215 = vpop.permute.xlu0 %3214
      %3216 = vrot.lane.b32.xlu0 %v2712, 48
      %v3217 = vpop.permute.xlu0 %3216
      %3218 = vrot.lane.b32.xlu0 %v2713, 48
      %v3219 = vpop.permute.xlu0 %3218
      %3220 = vrot.lane.b32.xlu0 %v2714, 48
      %v3221 = vpop.permute.xlu0 %3220
      %3222 = vrot.lane.b32.xlu0 %v2715, 48
      %v3223 = vpop.permute.xlu0 %3222
      %3224 = vrot.lane.b32.xlu0 %v2716, 48
      %v3225 = vpop.permute.xlu0 %3224
      %3226 = vrot.lane.b32.xlu0 %v2717, 48
      %v3227 = vpop.permute.xlu0 %3226
      %3228 = vrot.lane.b32.xlu0 %v2718, 48
      %v3229 = vpop.permute.xlu0 %3228
      %3230 = vrot.lane.b32.xlu0 %v2719, 48
      %v3231 = vpop.permute.xlu0 %3230
      %3232 = vrot.lane.b32.xlu0 %v2720, 48
      %v3233 = vpop.permute.xlu0 %3232
      %3298 = vrot.lane.b32.xlu0 %v2721, 64
      %v3299 = vpop.permute.xlu0 %3298
      %3300 = vrot.lane.b32.xlu0 %v2722, 64
      %v3301 = vpop.permute.xlu0 %3300
      %3302 = vrot.lane.b32.xlu0 %v2723, 64
      %v3303 = vpop.permute.xlu0 %3302
      %3304 = vrot.lane.b32.xlu0 %v2724, 64
      %v3305 = vpop.permute.xlu0 %3304
      %3306 = vrot.lane.b32.xlu0 %v2725, 64
      %v3307 = vpop.permute.xlu0 %3306
      %3308 = vrot.lane.b32.xlu0 %v2726, 64
      %v3309 = vpop.permute.xlu0 %3308
      %3310 = vrot.lane.b32.xlu0 %v2727, 64
      %v3311 = vpop.permute.xlu0 %3310
      %3312 = vrot.lane.b32.xlu0 %v2728, 64
      %v3313 = vpop.permute.xlu0 %3312
      %3314 = vrot.lane.b32.xlu0 %v2729, 64
      %v3315 = vpop.permute.xlu0 %3314
      %3316 = vrot.lane.b32.xlu0 %v2730, 64
      %v3317 = vpop.permute.xlu0 %3316
      %3318 = vrot.lane.b32.xlu0 %v2731, 64
      %v3319 = vpop.permute.xlu0 %3318
      %3320 = vrot.lane.b32.xlu0 %v2732, 64
      %v3321 = vpop.permute.xlu0 %3320
      %3322 = vrot.lane.b32.xlu0 %v2733, 64
      %v3323 = vpop.permute.xlu0 %3322
      %3324 = vrot.lane.b32.xlu0 %v2734, 64
      %v3325 = vpop.permute.xlu0 %3324
      %3326 = vrot.lane.b32.xlu0 %v2735, 64
      %v3327 = vpop.permute.xlu0 %3326
      %3328 = vrot.lane.b32.xlu0 %v2736, 64
      %v3329 = vpop.permute.xlu0 %3328
      %3330 = vrot.lane.b32.xlu0 %v2737, 64
      %v3331 = vpop.permute.xlu0 %3330
      %3332 = vrot.lane.b32.xlu0 %v2738, 64
      %v3333 = vpop.permute.xlu0 %3332
      %3334 = vrot.lane.b32.xlu0 %v2739, 64
      %v3335 = vpop.permute.xlu0 %3334
      %3336 = vrot.lane.b32.xlu0 %v2740, 64
      %v3337 = vpop.permute.xlu0 %3336
      %3338 = vrot.lane.b32.xlu0 %v2741, 64
      %v3339 = vpop.permute.xlu0 %3338
      %3340 = vrot.lane.b32.xlu0 %v2742, 64
      %v3341 = vpop.permute.xlu0 %3340
      %3342 = vrot.lane.b32.xlu0 %v2743, 64
      %v3343 = vpop.permute.xlu0 %3342
      %3344 = vrot.lane.b32.xlu0 %v2744, 64
      %v3345 = vpop.permute.xlu0 %3344
      %3346 = vrot.lane.b32.xlu0 %v2745, 64
      %v3347 = vpop.permute.xlu0 %3346
      %3348 = vrot.lane.b32.xlu0 %v2746, 64
      %v3349 = vpop.permute.xlu0 %3348
      %3350 = vrot.lane.b32.xlu0 %v2747, 64
      %v3351 = vpop.permute.xlu0 %3350
      %3352 = vrot.lane.b32.xlu0 %v2748, 64
      %v3353 = vpop.permute.xlu0 %3352
      %3354 = vrot.lane.b32.xlu0 %v2749, 64
      %v3355 = vpop.permute.xlu0 %3354
      %3356 = vrot.lane.b32.xlu0 %v2750, 64
      %v3357 = vpop.permute.xlu0 %3356
      %3358 = vrot.lane.b32.xlu0 %v2751, 64
      %v3359 = vpop.permute.xlu0 %3358
      %3360 = vrot.lane.b32.xlu0 %v2752, 64
      %v3361 = vpop.permute.xlu0 %3360
      %3426 = vrot.lane.b32.xlu0 %v2753, 80
      %v3427 = vpop.permute.xlu0 %3426
      %3428 = vrot.lane.b32.xlu0 %v2754, 80
      %v3429 = vpop.permute.xlu0 %3428
      %3430 = vrot.lane.b32.xlu0 %v2755, 80
      %v3431 = vpop.permute.xlu0 %3430
      %3432 = vrot.lane.b32.xlu0 %v2756, 80
      %v3433 = vpop.permute.xlu0 %3432
      %3434 = vrot.lane.b32.xlu0 %v2757, 80
      %v3435 = vpop.permute.xlu0 %3434
      %3436 = vrot.lane.b32.xlu0 %v2758, 80
      %v3437 = vpop.permute.xlu0 %3436
      %3438 = vrot.lane.b32.xlu0 %v2759, 80
      %v3439 = vpop.permute.xlu0 %3438
      %3440 = vrot.lane.b32.xlu0 %v2760, 80
      %v3441 = vpop.permute.xlu0 %3440
      %3442 = vrot.lane.b32.xlu0 %v2761, 80
      %v3443 = vpop.permute.xlu0 %3442
      %3444 = vrot.lane.b32.xlu0 %v2762, 80
      %v3445 = vpop.permute.xlu0 %3444
      %3446 = vrot.lane.b32.xlu0 %v2763, 80
      %v3447 = vpop.permute.xlu0 %3446
      %3448 = vrot.lane.b32.xlu0 %v2764, 80
      %v3449 = vpop.permute.xlu0 %3448
      %3450 = vrot.lane.b32.xlu0 %v2765, 80
      %v3451 = vpop.permute.xlu0 %3450
      %3452 = vrot.lane.b32.xlu0 %v2766, 80
      %v3453 = vpop.permute.xlu0 %3452
      %3454 = vrot.lane.b32.xlu0 %v2767, 80
      %v3455 = vpop.permute.xlu0 %3454
      %3456 = vrot.lane.b32.xlu0 %v2768, 80
      %v3457 = vpop.permute.xlu0 %3456
      %3458 = vrot.lane.b32.xlu0 %v2769, 80
      %v3459 = vpop.permute.xlu0 %3458
      %3460 = vrot.lane.b32.xlu0 %v2770, 80
      %v3461 = vpop.permute.xlu0 %3460
      %3462 = vrot.lane.b32.xlu0 %v2771, 80
      %v3463 = vpop.permute.xlu0 %3462
      %3464 = vrot.lane.b32.xlu0 %v2772, 80
      %v3465 = vpop.permute.xlu0 %3464
      %3466 = vrot.lane.b32.xlu0 %v2773, 80
      %v3467 = vpop.permute.xlu0 %3466
      %3468 = vrot.lane.b32.xlu0 %v2774, 80
      %v3469 = vpop.permute.xlu0 %3468
      %3470 = vrot.lane.b32.xlu0 %v2775, 80
      %v3471 = vpop.permute.xlu0 %3470
      %3472 = vrot.lane.b32.xlu0 %v2776, 80
      %v3473 = vpop.permute.xlu0 %3472
      %3474 = vrot.lane.b32.xlu0 %v2777, 80
      %v3475 = vpop.permute.xlu0 %3474
      %3476 = vrot.lane.b32.xlu0 %v2778, 80
      %v3477 = vpop.permute.xlu0 %3476
      %3478 = vrot.lane.b32.xlu0 %v2779, 80
      %v3479 = vpop.permute.xlu0 %3478
      %3480 = vrot.lane.b32.xlu0 %v2780, 80
      %v3481 = vpop.permute.xlu0 %3480
      %3482 = vrot.lane.b32.xlu0 %v2781, 80
      %v3483 = vpop.permute.xlu0 %3482
      %3484 = vrot.lane.b32.xlu0 %v2782, 80
      %v3485 = vpop.permute.xlu0 %3484
      %3486 = vrot.lane.b32.xlu0 %v2783, 80
      %v3487 = vpop.permute.xlu0 %3486
      %3488 = vrot.lane.b32.xlu0 %v2784, 80
      %v3489 = vpop.permute.xlu0 %3488
      %3554 = vrot.lane.b32.xlu0 %v2786, 96
      %v3555 = vpop.permute.xlu0 %3554
      %3556 = vrot.lane.b32.xlu0 %v2787, 96
      %v3557 = vpop.permute.xlu0 %3556
      %3558 = vrot.lane.b32.xlu0 %v2788, 96
      %v3559 = vpop.permute.xlu0 %3558
      %3560 = vrot.lane.b32.xlu0 %v2789, 96
      %v3561 = vpop.permute.xlu0 %3560
      %3562 = vrot.lane.b32.xlu0 %v2790, 96
      %v3563 = vpop.permute.xlu0 %3562
      %3564 = vrot.lane.b32.xlu0 %v2791, 96
      %v3565 = vpop.permute.xlu0 %3564
      %3566 = vrot.lane.b32.xlu0 %v2792, 96
      %v3567 = vpop.permute.xlu0 %3566
      %3568 = vrot.lane.b32.xlu0 %v2793, 96
      %v3569 = vpop.permute.xlu0 %3568
      %3570 = vrot.lane.b32.xlu0 %v2794, 96
      %v3571 = vpop.permute.xlu0 %3570
      %3572 = vrot.lane.b32.xlu0 %v2795, 96
      %v3573 = vpop.permute.xlu0 %3572
      %3574 = vrot.lane.b32.xlu0 %v2796, 96
      %v3575 = vpop.permute.xlu0 %3574
      %3576 = vrot.lane.b32.xlu0 %v2797, 96
      %v3577 = vpop.permute.xlu0 %3576
      %3578 = vrot.lane.b32.xlu0 %v2798, 96
      %v3579 = vpop.permute.xlu0 %3578
      %3580 = vrot.lane.b32.xlu0 %v2799, 96
      %v3581 = vpop.permute.xlu0 %3580
      %3582 = vrot.lane.b32.xlu0 %v2800, 96
      %v3583 = vpop.permute.xlu0 %3582
      %3584 = vrot.lane.b32.xlu0 %v2801, 96
      %v3585 = vpop.permute.xlu0 %3584
      %3586 = vrot.lane.b32.xlu0 %v2802, 96
      %v3587 = vpop.permute.xlu0 %3586
      %3588 = vrot.lane.b32.xlu0 %v2803, 96
      %v3589 = vpop.permute.xlu0 %3588
      %3590 = vrot.lane.b32.xlu0 %v2804, 96
      %v3591 = vpop.permute.xlu0 %3590
      %3592 = vrot.lane.b32.xlu0 %v2805, 96
      %v3593 = vpop.permute.xlu0 %3592
      %3594 = vrot.lane.b32.xlu0 %v2806, 96
      %v3595 = vpop.permute.xlu0 %3594
      %3596 = vrot.lane.b32.xlu0 %v2807, 96
      %v3597 = vpop.permute.xlu0 %3596
      %3598 = vrot.lane.b32.xlu0 %v2808, 96
      %v3599 = vpop.permute.xlu0 %3598
      %3600 = vrot.lane.b32.xlu0 %v2809, 96
      %v3601 = vpop.permute.xlu0 %3600
      %3602 = vrot.lane.b32.xlu0 %v2810, 96
      %v3603 = vpop.permute.xlu0 %3602
      %3604 = vrot.lane.b32.xlu0 %v2811, 96
      %v3605 = vpop.permute.xlu0 %3604
      %3606 = vrot.lane.b32.xlu0 %v2812, 96
      %v3607 = vpop.permute.xlu0 %3606
      %3608 = vrot.lane.b32.xlu0 %v2813, 96
      %v3609 = vpop.permute.xlu0 %3608
      %3610 = vrot.lane.b32.xlu0 %v2814, 96
      %v3611 = vpop.permute.xlu0 %3610
      %3612 = vrot.lane.b32.xlu0 %v2815, 96
      %v3613 = vpop.permute.xlu0 %3612
      %3614 = vrot.lane.b32.xlu0 %v2816, 96
      %v3615 = vpop.permute.xlu0 %3614
      %3616 = vrot.lane.b32.xlu0 %v2817, 96
      %v3617 = vpop.permute.xlu0 %3616
      %3682 = vrot.lane.b32.xlu0 %v2818, 112
      %v3683 = vpop.permute.xlu0 %3682
      %3684 = vrot.lane.b32.xlu0 %v2819, 112
      %v3685 = vpop.permute.xlu0 %3684
      %3686 = vrot.lane.b32.xlu0 %v2820, 112
      %v3687 = vpop.permute.xlu0 %3686
      %3688 = vrot.lane.b32.xlu0 %v2821, 112
      %v3689 = vpop.permute.xlu0 %3688
      %3690 = vrot.lane.b32.xlu0 %v2822, 112
      %v3691 = vpop.permute.xlu0 %3690
      %3692 = vrot.lane.b32.xlu0 %v2823, 112
      %v3693 = vpop.permute.xlu0 %3692
      %3694 = vrot.lane.b32.xlu0 %v2824, 112
      %v3695 = vpop.permute.xlu0 %3694
      %3696 = vrot.lane.b32.xlu0 %v2825, 112
      %v3697 = vpop.permute.xlu0 %3696
      %3698 = vrot.lane.b32.xlu0 %v2826, 112
      %v3699 = vpop.permute.xlu0 %3698
      %3700 = vrot.lane.b32.xlu0 %v2827, 112
      %v3701 = vpop.permute.xlu0 %3700
      %3702 = vrot.lane.b32.xlu0 %v2828, 112
      %v3703 = vpop.permute.xlu0 %3702
      %3704 = vrot.lane.b32.xlu0 %v2829, 112
      %v3705 = vpop.permute.xlu0 %3704
      %3706 = vrot.lane.b32.xlu0 %v2830, 112
      %v3707 = vpop.permute.xlu0 %3706
      %3708 = vrot.lane.b32.xlu0 %v2831, 112
      %v3709 = vpop.permute.xlu0 %3708
      %3710 = vrot.lane.b32.xlu0 %v2832, 112
      %v3711 = vpop.permute.xlu0 %3710
      %3712 = vrot.lane.b32.xlu0 %v2833, 112
      %v3713 = vpop.permute.xlu0 %3712
      %3714 = vrot.lane.b32.xlu0 %v2834, 112
      %v3715 = vpop.permute.xlu0 %3714
      %3716 = vrot.lane.b32.xlu0 %v2835, 112
      %v3717 = vpop.permute.xlu0 %3716
      %3718 = vrot.lane.b32.xlu0 %v2836, 112
      %v3719 = vpop.permute.xlu0 %3718
      %3720 = vrot.lane.b32.xlu0 %v2837, 112
      %v3721 = vpop.permute.xlu0 %3720
      %3722 = vrot.lane.b32.xlu0 %v2838, 112
      %v3723 = vpop.permute.xlu0 %3722
      %3724 = vrot.lane.b32.xlu0 %v2839, 112
      %v3725 = vpop.permute.xlu0 %3724
      %3726 = vrot.lane.b32.xlu0 %v2840, 112
      %v3727 = vpop.permute.xlu0 %3726
      %3728 = vrot.lane.b32.xlu0 %v2841, 112
      %v3729 = vpop.permute.xlu0 %3728
      %3730 = vrot.lane.b32.xlu0 %v2842, 112
      %v3731 = vpop.permute.xlu0 %3730
      %3732 = vrot.lane.b32.xlu0 %v2843, 112
      %v3733 = vpop.permute.xlu0 %3732
      %3734 = vrot.lane.b32.xlu0 %v2844, 112
      %v3735 = vpop.permute.xlu0 %3734
      %3736 = vrot.lane.b32.xlu0 %v2845, 112
      %v3737 = vpop.permute.xlu0 %3736
      %3738 = vrot.lane.b32.xlu0 %v2846, 112
      %v3739 = vpop.permute.xlu0 %3738
      %3740 = vrot.lane.b32.xlu0 %v2847, 112
      %v3741 = vpop.permute.xlu0 %3740
      %3742 = vrot.lane.b32.xlu0 %v2848, 112
      %v3743 = vpop.permute.xlu0 %3742
      %3744 = vrot.lane.b32.xlu0 %v2849, 112
      %v3745 = vpop.permute.xlu0 %3744
      %v3778 = vsel %vm2375, %v2593, %v2915
      %v3779 = vsel %vm2375, %v2594, %v2917
      %v3780 = vsel %vm2375, %v2595, %v2919
      %v3781 = vsel %vm2375, %v2596, %v2921
      %v3782 = vsel %vm2375, %v2597, %v2923
      %v3783 = vsel %vm2375, %v2598, %v2925
      %v3784 = vsel %vm2375, %v2599, %v2927
      %v3785 = vsel %vm2375, %v2600, %v2929
      %v3786 = vsel %vm2375, %v2601, %v2931
      %v3787 = vsel %vm2375, %v2602, %v2933
      %v3788 = vsel %vm2375, %v2603, %v2935
      %v3789 = vsel %vm2375, %v2604, %v2937
      %v3790 = vsel %vm2375, %v2605, %v2939
      %v3791 = vsel %vm2375, %v2606, %v2941
      %v3792 = vsel %vm2375, %v2607, %v2943
      %v3793 = vsel %vm2375, %v2608, %v2945
      %v3794 = vsel %vm2375, %v2609, %v2947
      %v3795 = vsel %vm2375, %v2610, %v2949
      %v3796 = vsel %vm2375, %v2611, %v2951
      %v3797 = vsel %vm2375, %v2612, %v2953
      %v3798 = vsel %vm2375, %v2613, %v2955
      %v3799 = vsel %vm2375, %v2614, %v2957
      %v3800 = vsel %vm2375, %v2615, %v2959
      %v3801 = vsel %vm2375, %v2616, %v2961
      %v3802 = vsel %vm2375, %v2617, %v2963
      %v3803 = vsel %vm2375, %v2618, %v2965
      %v3804 = vsel %vm2375, %v2619, %v2967
      %v3805 = vsel %vm2375, %v2620, %v2969
      %v3806 = vsel %vm2375, %v2621, %v2971
      %v3807 = vsel %vm2375, %v2622, %v2973
      %v3808 = vsel %vm2375, %v2623, %v2975
      %v3809 = vsel %vm2375, %v2624, %v2977
      %v3810 = vsel %vm284, %v3778, %v3043
      %v3811 = vsel %vm284, %v3779, %v3045
      %v3812 = vsel %vm284, %v3780, %v3047
      %v3813 = vsel %vm284, %v3781, %v3049
      %v3814 = vsel %vm284, %v3782, %v3051
      %v3815 = vsel %vm284, %v3783, %v3053
      %v3816 = vsel %vm284, %v3784, %v3055
      %v3817 = vsel %vm284, %v3785, %v3057
      %v3818 = vsel %vm284, %v3786, %v3059
      %v3819 = vsel %vm284, %v3787, %v3061
      %v3820 = vsel %vm284, %v3788, %v3063
      %v3821 = vsel %vm284, %v3789, %v3065
      %v3822 = vsel %vm284, %v3790, %v3067
      %v3823 = vsel %vm284, %v3791, %v3069
      %v3824 = vsel %vm284, %v3792, %v3071
      %v3825 = vsel %vm284, %v3793, %v3073
      %v3826 = vsel %vm284, %v3794, %v3075
      %v3827 = vsel %vm284, %v3795, %v3077
      %v3828 = vsel %vm284, %v3796, %v3079
      %v3829 = vsel %vm284, %v3797, %v3081
      %v3830 = vsel %vm284, %v3798, %v3083
      %v3831 = vsel %vm284, %v3799, %v3085
      %v3832 = vsel %vm284, %v3800, %v3087
      %v3833 = vsel %vm284, %v3801, %v3089
      %v3834 = vsel %vm284, %v3802, %v3091
      %v3835 = vsel %vm284, %v3803, %v3093
      %v3836 = vsel %vm284, %v3804, %v3095
      %v3837 = vsel %vm284, %v3805, %v3097
      %v3838 = vsel %vm284, %v3806, %v3099
      %v3839 = vsel %vm284, %v3807, %v3101
      %v3840 = vsel %vm284, %v3808, %v3103
      %v3841 = vsel %vm284, %v3809, %v3105
      %vm3842 = vcmask 392192
      %v3843 = vsel %vm3842, %v3810, %v3171
      %v3844 = vsel %vm3842, %v3811, %v3173
      %v3845 = vsel %vm3842, %v3812, %v3175
      %v3846 = vsel %vm3842, %v3813, %v3177
      %v3847 = vsel %vm3842, %v3814, %v3179
      %v3848 = vsel %vm3842, %v3815, %v3181
      %v3849 = vsel %vm3842, %v3816, %v3183
      %v3850 = vsel %vm3842, %v3817, %v3185
      %v3851 = vsel %vm3842, %v3818, %v3187
      %v3852 = vsel %vm3842, %v3819, %v3189
      %v3853 = vsel %vm3842, %v3820, %v3191
      %v3854 = vsel %vm3842, %v3821, %v3193
      %v3855 = vsel %vm3842, %v3822, %v3195
      %v3856 = vsel %vm3842, %v3823, %v3197
      %v3857 = vsel %vm3842, %v3824, %v3199
      %v3858 = vsel %vm3842, %v3825, %v3201
      %v3859 = vsel %vm3842, %v3826, %v3203
      %v3860 = vsel %vm3842, %v3827, %v3205
      %v3861 = vsel %vm3842, %v3828, %v3207
      %v3862 = vsel %vm3842, %v3829, %v3209
      %v3863 = vsel %vm3842, %v3830, %v3211
      %v3864 = vsel %vm3842, %v3831, %v3213
      %v3865 = vsel %vm3842, %v3832, %v3215
      %v3866 = vsel %vm3842, %v3833, %v3217
      %v3867 = vsel %vm3842, %v3834, %v3219
      %v3868 = vsel %vm3842, %v3835, %v3221
      %v3869 = vsel %vm3842, %v3836, %v3223
      %v3870 = vsel %vm3842, %v3837, %v3225
      %v3871 = vsel %vm3842, %v3838, %v3227
      %v3872 = vsel %vm3842, %v3839, %v3229
      %v3873 = vsel %vm3842, %v3840, %v3231
      %v3874 = vsel %vm3842, %v3841, %v3233
      %v3875 = vsel %vm1592, %v3843, %v3299
      %v3876 = vsel %vm1592, %v3844, %v3301
      %v3877 = vsel %vm1592, %v3845, %v3303
      %v3878 = vsel %vm1592, %v3846, %v3305
      %v3879 = vsel %vm1592, %v3847, %v3307
      %v3880 = vsel %vm1592, %v3848, %v3309
      %v3881 = vsel %vm1592, %v3849, %v3311
      %v3882 = vsel %vm1592, %v3850, %v3313
      %v3883 = vsel %vm1592, %v3851, %v3315
      %v3884 = vsel %vm1592, %v3852, %v3317
      %v3885 = vsel %vm1592, %v3853, %v3319
      %v3886 = vsel %vm1592, %v3854, %v3321
      %v3887 = vsel %vm1592, %v3855, %v3323
      %v3888 = vsel %vm1592, %v3856, %v3325
      %v3889 = vsel %vm1592, %v3857, %v3327
      %v3890 = vsel %vm1592, %v3858, %v3329
      %v3891 = vsel %vm1592, %v3859, %v3331
      %v3892 = vsel %vm1592, %v3860, %v3333
      %v3893 = vsel %vm1592, %v3861, %v3335
      %v3894 = vsel %vm1592, %v3862, %v3337
      %v3895 = vsel %vm1592, %v3863, %v3339
      %v3896 = vsel %vm1592, %v3864, %v3341
      %v3897 = vsel %vm1592, %v3865, %v3343
      %v3898 = vsel %vm1592, %v3866, %v3345
      %v3899 = vsel %vm1592, %v3867, %v3347
      %v3900 = vsel %vm1592, %v3868, %v3349
      %v3901 = vsel %vm1592, %v3869, %v3351
      %v3902 = vsel %vm1592, %v3870, %v3353
      %v3903 = vsel %vm1592, %v3871, %v3355
      %v3904 = vsel %vm1592, %v3872, %v3357
      %v3905 = vsel %vm1592, %v3873, %v3359
      %v3906 = vsel %vm1592, %v3874, %v3361
      %vm3907 = vcmask 654336
      %v3908 = vsel %vm3907, %v3875, %v3427
      %v3909 = vsel %vm3907, %v3876, %v3429
      %v3910 = vsel %vm3907, %v3877, %v3431
      %v3911 = vsel %vm3907, %v3878, %v3433
      %v3912 = vsel %vm3907, %v3879, %v3435
      %v3913 = vsel %vm3907, %v3880, %v3437
      %v3914 = vsel %vm3907, %v3881, %v3439
      %v3915 = vsel %vm3907, %v3882, %v3441
      %v3916 = vsel %vm3907, %v3883, %v3443
      %v3917 = vsel %vm3907, %v3884, %v3445
      %v3918 = vsel %vm3907, %v3885, %v3447
      %v3919 = vsel %vm3907, %v3886, %v3449
      %v3920 = vsel %vm3907, %v3887, %v3451
      %v3921 = vsel %vm3907, %v3888, %v3453
      %v3922 = vsel %vm3907, %v3889, %v3455
      %v3923 = vsel %vm3907, %v3890, %v3457
      %v3924 = vsel %vm3907, %v3891, %v3459
      %v3925 = vsel %vm3907, %v3892, %v3461
      %v3926 = vsel %vm3907, %v3893, %v3463
      %v3927 = vsel %vm3907, %v3894, %v3465
      %v3928 = vsel %vm3907, %v3895, %v3467
      %v3929 = vsel %vm3907, %v3896, %v3469
      %v3930 = vsel %vm3907, %v3897, %v3471
      %v3931 = vsel %vm3907, %v3898, %v3473
      %v3932 = vsel %vm3907, %v3899, %v3475
      %v3933 = vsel %vm3907, %v3900, %v3477
      %v3934 = vsel %vm3907, %v3901, %v3479
      %v3935 = vsel %vm3907, %v3902, %v3481
      %v3936 = vsel %vm3907, %v3903, %v3483
      %v3937 = vsel %vm3907, %v3904, %v3485
      %v3938 = vsel %vm3907, %v3905, %v3487
      %v3939 = vsel %vm3907, %v3906, %v3489
      %v3940 = vsel %vm1625, %v3908, %v3555
      %v3941 = vsel %vm1625, %v3909, %v3557
      %v3942 = vsel %vm1625, %v3910, %v3559
      %v3943 = vsel %vm1625, %v3911, %v3561
      %v3944 = vsel %vm1625, %v3912, %v3563
      %v3945 = vsel %vm1625, %v3913, %v3565
      %v3946 = vsel %vm1625, %v3914, %v3567
      %v3947 = vsel %vm1625, %v3915, %v3569
      %v3948 = vsel %vm1625, %v3916, %v3571
      %v3949 = vsel %vm1625, %v3917, %v3573
      %v3950 = vsel %vm1625, %v3918, %v3575
      %v3951 = vsel %vm1625, %v3919, %v3577
      %v3952 = vsel %vm1625, %v3920, %v3579
      %v3953 = vsel %vm1625, %v3921, %v3581
      %v3954 = vsel %vm1625, %v3922, %v3583
      %v3955 = vsel %vm1625, %v3923, %v3585
      %v3956 = vsel %vm1625, %v3924, %v3587
      %v3957 = vsel %vm1625, %v3925, %v3589
      %v3958 = vsel %vm1625, %v3926, %v3591
      %v3959 = vsel %vm1625, %v3927, %v3593
      %v3960 = vsel %vm1625, %v3928, %v3595
      %v3961 = vsel %vm1625, %v3929, %v3597
      %v3962 = vsel %vm1625, %v3930, %v3599
      %v3963 = vsel %vm1625, %v3931, %v3601
      %v3964 = vsel %vm1625, %v3932, %v3603
      %v3965 = vsel %vm1625, %v3933, %v3605
      %v3966 = vsel %vm1625, %v3934, %v3607
      %v3967 = vsel %vm1625, %v3935, %v3609
      %v3968 = vsel %vm1625, %v3936, %v3611
      %v3969 = vsel %vm1625, %v3937, %v3613
      %v3970 = vsel %vm1625, %v3938, %v3615
      %v3971 = vsel %vm1625, %v3939, %v3617
      %vm3972 = vcmask 916480
      %v3973 = vsel %vm3972, %v3940, %v3683
      %v3974 = vsel %vm3972, %v3941, %v3685
      %v3975 = vsel %vm3972, %v3942, %v3687
      %v3976 = vsel %vm3972, %v3943, %v3689
      %v3977 = vsel %vm3972, %v3944, %v3691
      %v3978 = vsel %vm3972, %v3945, %v3693
      %v3979 = vsel %vm3972, %v3946, %v3695
      %v3980 = vsel %vm3972, %v3947, %v3697
      %v3981 = vsel %vm3972, %v3948, %v3699
      %v3982 = vsel %vm3972, %v3949, %v3701
      %v3983 = vsel %vm3972, %v3950, %v3703
      %v3984 = vsel %vm3972, %v3951, %v3705
      %v3985 = vsel %vm3972, %v3952, %v3707
      %v3986 = vsel %vm3972, %v3953, %v3709
      %v3987 = vsel %vm3972, %v3954, %v3711
      %v3988 = vsel %vm3972, %v3955, %v3713
      %v3989 = vsel %vm3972, %v3956, %v3715
      %v3990 = vsel %vm3972, %v3957, %v3717
      %v3991 = vsel %vm3972, %v3958, %v3719
      %v3992 = vsel %vm3972, %v3959, %v3721
      %v3993 = vsel %vm3972, %v3960, %v3723
      %v3994 = vsel %vm3972, %v3961, %v3725
      %v3995 = vsel %vm3972, %v3962, %v3727
      %v3996 = vsel %vm3972, %v3963, %v3729
      %v3997 = vsel %vm3972, %v3964, %v3731
      %v3998 = vsel %vm3972, %v3965, %v3733
      %v3999 = vsel %vm3972, %v3966, %v3735
      %v4000 = vsel %vm3972, %v3967, %v3737
      %v4001 = vsel %vm3972, %v3968, %v3739
      %v4002 = vsel %vm3972, %v3969, %v3741
      %v4003 = vsel %vm3972, %v3970, %v3743
      %v4004 = vsel %vm3972, %v3971, %v3745
      %v4005 = vld [vmem:[%s3] sm:$0xff]
      %v4006 = vld [vmem:[%s3 + $0x8] sm:$0xff]
      %v4007 = vld [vmem:[%s3 + $0x10] sm:$0xff]
      %v4008 = vld [vmem:[%s3 + $0x18] sm:$0xff]
      %v4009 = vld [vmem:[%s3 + $0x20] sm:$0xff]
      %v4010 = vld [vmem:[%s3 + $0x28] sm:$0xff]
      %v4011 = vld [vmem:[%s3 + $0x30] sm:$0xff]
      %v4012 = vld [vmem:[%s3 + $0x38] sm:$0xff]
      %v4013 = vld [vmem:[%s3 + $0x40] sm:$0xff]
      %v4014 = vld [vmem:[%s3 + $0x48] sm:$0xff]
      %v4015 = vld [vmem:[%s3 + $0x50] sm:$0xff]
      %v4016 = vld [vmem:[%s3 + $0x58] sm:$0xff]
      %v4017 = vld [vmem:[%s3 + $0x60] sm:$0xff]
      %v4018 = vld [vmem:[%s3 + $0x68] sm:$0xff]
      %v4019 = vld [vmem:[%s3 + $0x70] sm:$0xff]
      %v4020 = vld [vmem:[%s3 + $0x78] sm:$0xff]
      %v4021 = vld [vmem:[%s3 + $0x80] sm:$0xff]
      %v4022 = vld [vmem:[%s3 + $0x88] sm:$0xff]
      %v4023 = vld [vmem:[%s4] sm:$0x1]
      %v4025 = vlaneseq
      %v4026 = vshrl.u32 %v4025, 7
      %v4027 = vsub.s32 0, %v4026
      %v4028 = vrot.slane %v4023, %v4027
      %v4031 = vsel %vm2375, %v2850, 0
      %v4034 = vsel %vm2375, %v2851, 0
      %v4037 = vsel %vm2375, %v2852, 0
      %v4040 = vsel %vm2375, %v2853, 0
      %v4043 = vsel %vm2375, %v2854, 0
      %v4046 = vsel %vm2375, %v2855, 0
      %v4049 = vsel %vm2375, %v2856, 0
      %v4052 = vsel %vm2375, %v2857, 0
      %v4055 = vsel %vm2375, %v2858, 0
      %v4058 = vsel %vm2375, %v2859, 0
      %v4061 = vsel %vm2375, %v2860, 0
      %v4064 = vsel %vm2375, %v2861, 0
      %v4067 = vsel %vm2375, %v2862, 0
      %v4070 = vsel %vm2375, %v2863, 0
      %v4073 = vsel %vm2375, %v2864, 0
      %v4076 = vsel %vm2375, %v2865, 0
      %v4079 = vsel %vm2375, %v2866, 0
      %v4082 = vsel %vm2375, %v2867, 0
      %v4085 = vsel %vm2375, %v2868, 0
      %v4088 = vsel %vm2375, %v2869, 0
      %v4091 = vsel %vm2375, %v2870, 0
      %v4094 = vsel %vm2375, %v2871, 0
      %v4097 = vsel %vm2375, %v2872, 0
      %v4100 = vsel %vm2375, %v2873, 0
      %v4103 = vsel %vm2375, %v2874, 0
      %v4106 = vsel %vm2375, %v2875, 0
      %v4109 = vsel %vm2375, %v2876, 0
      %v4112 = vsel %vm2375, %v2877, 0
      %v4115 = vsel %vm2375, %v2878, 0
      %v4118 = vsel %vm2375, %v2879, 0
      %v4121 = vsel %vm2375, %v2880, 0
      %v4124 = vsel %vm2375, %v2881, 0
      %4126 = vmatprep.subr.mxu0 0.0
      %4127 = vmatpush1.msra.mxu0 %v4005
      %4128 = vmatprep.subr.mxu0 0.0
      %4129 = vmatpush1.msra.mxu0 %v4006
      %4130 = vmatprep.subr.mxu0 0.0
      %4131 = vmatpush1.msra.mxu0 %v4007
      %4132 = vmatprep.subr.mxu0 0.0
      %4133 = vmatpush1.msra.mxu0 %v4008
      %4134 = vmatprep.subr.mxu0 0.0
      %4135 = vmatpush1.msra.mxu0 %v4009
      %4136 = vmatprep.subr.mxu0 0.0
      %4137 = vmatpush1.msra.mxu0 %v4010
      %4138 = vmatprep.subr.mxu0 0.0
      %4139 = vmatpush1.msra.mxu0 %v4011
      %4140 = vmatprep.subr.mxu0 0.0
      %4141 = vmatpush1.msra.mxu0 %v4012
      %4142 = vmatprep.subr.mxu0 0.0
      %4143 = vmatpush1.msra.mxu0 %v4013
      %4144 = vmatprep.subr.mxu0 0.0
      %4145 = vmatpush1.msra.mxu0 %v4014
      %4146 = vmatprep.subr.mxu0 0.0
      %4147 = vmatpush1.msra.mxu0 %v4015
      %4148 = vmatprep.subr.mxu0 0.0
      %4149 = vmatpush1.msra.mxu0 %v4016
      %4150 = vmatprep.subr.mxu0 0.0
      %4151 = vmatpush1.msra.mxu0 %v4017
      %4152 = vmatprep.subr.mxu0 0.0
      %4153 = vmatpush1.msra.mxu0 %v4018
      %4154 = vmatprep.subr.mxu0 0.0
      %4155 = vmatpush1.msra.mxu0 %v4019
      %4156 = vmatprep.subr.mxu0 0.0
      %4157 = vmatpush1.msra.mxu0 %v4020
      %4158 = vmatprep.subr.mxu0 0.0
      %4159 = vmatpush1.msra.mxu0 %v4021
      %4160 = vmatprep.subr.mxu0 0.0
      %4161 = vmatpush1.msra.mxu0 %v4022
      %4162 = vmatprep.subr.mxu0 0.0
      %4163 = vmatpush1.msra.mxu0 0.0
      %4164 = vmatprep.subr.mxu0 0.0
      %4165 = vmatpush1.msra.mxu0 0.0
      %4166 = vmatprep.subr.mxu0 0.0
      %4167 = vmatpush1.msra.mxu0 0.0
      %4168 = vmatprep.subr.mxu0 0.0
      %4169 = vmatpush1.msra.mxu0 0.0
      %4170 = vmatprep.subr.mxu0 0.0
      %4171 = vmatpush1.msra.mxu0 0.0
      %4172 = vmatprep.subr.mxu0 0.0
      %4173 = vmatpush1.msra.mxu0 0.0
      %4174 = vmatprep.subr.mxu0 0.0
      %4175 = vmatpush1.msra.mxu0 0.0
      %4176 = vmatprep.subr.mxu0 0.0
      %4177 = vmatpush1.msra.mxu0 0.0
      %4178 = vmatprep.subr.mxu0 0.0
      %4179 = vmatpush1.msra.mxu0 0.0
      %4180 = vmatprep.subr.mxu0 0.0
      %4181 = vmatpush1.msra.mxu0 0.0
      %4182 = vmatprep.subr.mxu0 0.0
      %4183 = vmatpush1.msra.mxu0 0.0
      %4184 = vmatprep.subr.mxu0 0.0
      %4185 = vmatpush1.msra.mxu0 0.0
      %4186 = vmatprep.subr.mxu0 0.0
      %4187 = vmatpush1.msra.mxu0 0.0
      %4188 = vmatprep.subr.mxu0 0.0
      %4189 = vmatpush1.msra.mxu0 0.0
      %4190 = vmatprep.mubr.f32.mxu0 %v4031
      %4191 = vmatmul.mubr.f32.gmra.mrb[0].mxu0 %v3973
      %v4192 = vpop.f32.mrb[0].mxu0
      %v4193 = vadd.f32 %v4028, %v4192
      %v4194 = vpop.f32.mrb[0].mxu0
      %4195 = vmatprep.mubr.f32.mxu0 %v4034
      %4196 = vmatmul.mubr.f32.gmra.mrb[0].mxu0 %v3974
      %v4197 = vpop.f32.mrb[0].mxu0
      %v4198 = vadd.f32 %v4028, %v4197
      %v4199 = vpop.f32.mrb[0].mxu0
      %4200 = vmatprep.mubr.f32.mxu0 %v4037
      %4201 = vmatmul.mubr.f32.gmra.mrb[0].mxu0 %v3975
      %v4202 = vpop.f32.mrb[0].mxu0
      %v4203 = vadd.f32 %v4028, %v4202
      %v4204 = vpop.f32.mrb[0].mxu0
      %4205 = vmatprep.mubr.f32.mxu0 %v4040
      %4206 = vmatmul.mubr.f32.gmra.mrb[0].mxu0 %v3976
      %v4207 = vpop.f32.mrb[0].mxu0
      %v4208 = vadd.f32 %v4028, %v4207
      %v4209 = vpop.f32.mrb[0].mxu0
      %4210 = vmatprep.mubr.f32.mxu0 %v4043
      %4211 = vmatmul.mubr.f32.gmra.mrb[0].mxu0 %v3977
      %v4212 = vpop.f32.mrb[0].mxu0
      %v4213 = vadd.f32 %v4028, %v4212
      %v4214 = vpop.f32.mrb[0].mxu0
      %4215 = vmatprep.mubr.f32.mxu0 %v4046
      %4216 = vmatmul.mubr.f32.gmra.mrb[0].mxu0 %v3978
      %v4217 = vpop.f32.mrb[0].mxu0
      %v4218 = vadd.f32 %v4028, %v4217
      %v4219 = vpop.f32.mrb[0].mxu0
      %4220 = vmatprep.mubr.f32.mxu0 %v4049
      %4221 = vmatmul.mubr.f32.gmra.mrb[0].mxu0 %v3979
      %v4222 = vpop.f32.mrb[0].mxu0
      %v4223 = vadd.f32 %v4028, %v4222
      %v4224 = vpop.f32.mrb[0].mxu0
      %4225 = vmatprep.mubr.f32.mxu0 %v4052
      %4226 = vmatmul.mubr.f32.gmra.mrb[0].mxu0 %v3980
      %v4227 = vpop.f32.mrb[0].mxu0
      %v4228 = vadd.f32 %v4028, %v4227
      %v4229 = vpop.f32.mrb[0].mxu0
      %4230 = vmatprep.mubr.f32.mxu0 %v4055
      %4231 = vmatmul.mubr.f32.gmra.mrb[0].mxu0 %v3981
      %v4232 = vpop.f32.mrb[0].mxu0
      %v4233 = vadd.f32 %v4028, %v4232
      %v4234 = vpop.f32.mrb[0].mxu0
      %4235 = vmatprep.mubr.f32.mxu0 %v4058
      %4236 = vmatmul.mubr.f32.gmra.mrb[0].mxu0 %v3982
      %v4237 = vpop.f32.mrb[0].mxu0
      %v4238 = vadd.f32 %v4028, %v4237
      %v4239 = vpop.f32.mrb[0].mxu0
      %4240 = vmatprep.mubr.f32.mxu0 %v4061
      %4241 = vmatmul.mubr.f32.gmra.mrb[0].mxu0 %v3983
      %v4242 = vpop.f32.mrb[0].mxu0
      %v4243 = vadd.f32 %v4028, %v4242
      %v4244 = vpop.f32.mrb[0].mxu0
      %4245 = vmatprep.mubr.f32.mxu0 %v4064
      %4246 = vmatmul.mubr.f32.gmra.mrb[0].mxu0 %v3984
      %v4247 = vpop.f32.mrb[0].mxu0
      %v4248 = vadd.f32 %v4028, %v4247
      %v4249 = vpop.f32.mrb[0].mxu0
      %4250 = vmatprep.mubr.f32.mxu0 %v4067
      %4251 = vmatmul.mubr.f32.gmra.mrb[0].mxu0 %v3985
      %v4252 = vpop.f32.mrb[0].mxu0
      %v4253 = vadd.f32 %v4028, %v4252
      %v4254 = vpop.f32.mrb[0].mxu0
      %4255 = vmatprep.mubr.f32.mxu0 %v4070
      %4256 = vmatmul.mubr.f32.gmra.mrb[0].mxu0 %v3986
      %v4257 = vpop.f32.mrb[0].mxu0
      %v4258 = vadd.f32 %v4028, %v4257
      %v4259 = vpop.f32.mrb[0].mxu0
      %4260 = vmatprep.mubr.f32.mxu0 %v4073
      %4261 = vmatmul.mubr.f32.gmra.mrb[0].mxu0 %v3987
      %v4262 = vpop.f32.mrb[0].mxu0
      %v4263 = vadd.f32 %v4028, %v4262
      %v4264 = vpop.f32.mrb[0].mxu0
      %4265 = vmatprep.mubr.f32.mxu0 %v4076
      %4266 = vmatmul.mubr.f32.gmra.mrb[0].mxu0 %v3988
      %v4267 = vpop.f32.mrb[0].mxu0
      %v4268 = vadd.f32 %v4028, %v4267
      %v4269 = vpop.f32.mrb[0].mxu0
      %4270 = vmatprep.mubr.f32.mxu0 %v4079
      %4271 = vmatmul.mubr.f32.gmra.mrb[0].mxu0 %v3989
      %v4272 = vpop.f32.mrb[0].mxu0
      %v4273 = vadd.f32 %v4028, %v4272
      %v4274 = vpop.f32.mrb[0].mxu0
      %4275 = vmatprep.mubr.f32.mxu0 %v4082
      %4276 = vmatmul.mubr.f32.gmra.mrb[0].mxu0 %v3990
      %v4277 = vpop.f32.mrb[0].mxu0
      %v4278 = vadd.f32 %v4028, %v4277
      %v4279 = vpop.f32.mrb[0].mxu0
      %4280 = vmatprep.mubr.f32.mxu0 %v4085
      %4281 = vmatmul.mubr.f32.gmra.mrb[0].mxu0 %v3991
      %v4282 = vpop.f32.mrb[0].mxu0
      %v4283 = vadd.f32 %v4028, %v4282
      %v4284 = vpop.f32.mrb[0].mxu0
      %4285 = vmatprep.mubr.f32.mxu0 %v4088
      %4286 = vmatmul.mubr.f32.gmra.mrb[0].mxu0 %v3992
      %v4287 = vpop.f32.mrb[0].mxu0
      %v4288 = vadd.f32 %v4028, %v4287
      %v4289 = vpop.f32.mrb[0].mxu0
      %4290 = vmatprep.mubr.f32.mxu0 %v4091
      %4291 = vmatmul.mubr.f32.gmra.mrb[0].mxu0 %v3993
      %v4292 = vpop.f32.mrb[0].mxu0
      %v4293 = vadd.f32 %v4028, %v4292
      %v4294 = vpop.f32.mrb[0].mxu0
      %4295 = vmatprep.mubr.f32.mxu0 %v4094
      %4296 = vmatmul.mubr.f32.gmra.mrb[0].mxu0 %v3994
      %v4297 = vpop.f32.mrb[0].mxu0
      %v4298 = vadd.f32 %v4028, %v4297
      %v4299 = vpop.f32.mrb[0].mxu0
      %4300 = vmatprep.mubr.f32.mxu0 %v4097
      %4301 = vmatmul.mubr.f32.gmra.mrb[0].mxu0 %v3995
      %v4302 = vpop.f32.mrb[0].mxu0
      %v4303 = vadd.f32 %v4028, %v4302
      %v4304 = vpop.f32.mrb[0].mxu0
      %4305 = vmatprep.mubr.f32.mxu0 %v4100
      %4306 = vmatmul.mubr.f32.gmra.mrb[0].mxu0 %v3996
      %v4307 = vpop.f32.mrb[0].mxu0
      %v4308 = vadd.f32 %v4028, %v4307
      %v4309 = vpop.f32.mrb[0].mxu0
      %4310 = vmatprep.mubr.f32.mxu0 %v4103
      %4311 = vmatmul.mubr.f32.gmra.mrb[0].mxu0 %v3997
      %v4312 = vpop.f32.mrb[0].mxu0
      %v4313 = vadd.f32 %v4028, %v4312
      %v4314 = vpop.f32.mrb[0].mxu0
      %4315 = vmatprep.mubr.f32.mxu0 %v4106
      %4316 = vmatmul.mubr.f32.gmra.mrb[0].mxu0 %v3998
      %v4317 = vpop.f32.mrb[0].mxu0
      %v4318 = vadd.f32 %v4028, %v4317
      %v4319 = vpop.f32.mrb[0].mxu0
      %4320 = vmatprep.mubr.f32.mxu0 %v4109
      %4321 = vmatmul.mubr.f32.gmra.mrb[0].mxu0 %v3999
      %v4322 = vpop.f32.mrb[0].mxu0
      %v4323 = vadd.f32 %v4028, %v4322
      %v4324 = vpop.f32.mrb[0].mxu0
      %4325 = vmatprep.mubr.f32.mxu0 %v4112
      %4326 = vmatmul.mubr.f32.gmra.mrb[0].mxu0 %v4000
      %v4327 = vpop.f32.mrb[0].mxu0
      %v4328 = vadd.f32 %v4028, %v4327
      %v4329 = vpop.f32.mrb[0].mxu0
      %4330 = vmatprep.mubr.f32.mxu0 %v4115
      %4331 = vmatmul.mubr.f32.gmra.mrb[0].mxu0 %v4001
      %v4332 = vpop.f32.mrb[0].mxu0
      %v4333 = vadd.f32 %v4028, %v4332
      %v4334 = vpop.f32.mrb[0].mxu0
      %4335 = vmatprep.mubr.f32.mxu0 %v4118
      %4336 = vmatmul.mubr.f32.gmra.mrb[0].mxu0 %v4002
      %v4337 = vpop.f32.mrb[0].mxu0
      %v4338 = vadd.f32 %v4028, %v4337
      %v4339 = vpop.f32.mrb[0].mxu0
      %4340 = vmatprep.mubr.f32.mxu0 %v4121
      %4341 = vmatmul.mubr.f32.gmra.mrb[0].mxu0 %v4003
      %v4342 = vpop.f32.mrb[0].mxu0
      %v4343 = vadd.f32 %v4028, %v4342
      %v4344 = vpop.f32.mrb[0].mxu0
      %4345 = vmatprep.mubr.f32.mxu0 %v4124
      %4346 = vmatmul.mubr.f32.gmra.mrb[0].mxu0 %v4004
      %v4347 = vpop.f32.mrb[0].mxu0
      %v4348 = vadd.f32 %v4028, %v4347
      %v4349 = vpop.f32.mrb[0].mxu0
      %4350 = vdwg.mxu0
      %v4351 = vld [vmem:[%s5] sm:$0xff]
      %v4352 = vld [vmem:[%s5 + $0x8] sm:$0xff]
      %v4353 = vld [vmem:[%s5 + $0x10] sm:$0xff]
      %v4354 = vld [vmem:[%s5 + $0x18] sm:$0xff]
      %v4355 = vsel %vm284, %v252, 0
      %v4357 = vsel %vm284, %v253, 0
      %v4359 = vsel %vm284, %v254, 0
      %v4361 = vsel %vm284, %v255, 0
      %v4363 = vsel %vm284, %v256, 0
      %v4365 = vsel %vm284, %v257, 0
      %v4367 = vsel %vm284, %v258, 0
      %v4369 = vsel %vm284, %v259, 0
      %v4371 = vsel %vm284, %v260, 0
      %v4373 = vsel %vm284, %v261, 0
      %v4375 = vsel %vm284, %v262, 0
      %v4377 = vsel %vm284, %v263, 0
      %v4379 = vsel %vm284, %v264, 0
      %v4381 = vsel %vm284, %v265, 0
      %v4383 = vsel %vm284, %v266, 0
      %v4385 = vsel %vm284, %v267, 0
      %v4387 = vsel %vm284, %v268, 0
      %v4389 = vsel %vm284, %v269, 0
      %v4391 = vsel %vm284, %v270, 0
      %v4393 = vsel %vm284, %v271, 0
      %v4395 = vsel %vm284, %v272, 0
      %v4397 = vsel %vm284, %v273, 0
      %v4399 = vsel %vm284, %v274, 0
      %v4401 = vsel %vm284, %v275, 0
      %v4403 = vsel %vm284, %v276, 0
      %v4405 = vsel %vm284, %v277, 0
      %v4407 = vsel %vm284, %v278, 0
      %v4409 = vsel %vm284, %v279, 0
      %v4411 = vsel %vm284, %v280, 0
      %v4413 = vsel %vm284, %v281, 0
      %v4415 = vsel %vm284, %v282, 0
      %v4417 = vsel %vm284, %v283, 0
      %4419 = vmatprep.subr.mxu0 0.0
      %4420 = vmatpush1.msra.mxu0 %v4351
      %4421 = vmatprep.subr.mxu0 0.0
      %4422 = vmatpush1.msra.mxu0 %v4352
      %4423 = vmatprep.subr.mxu0 0.0
      %4424 = vmatpush1.msra.mxu0 %v4353
      %4425 = vmatprep.subr.mxu0 0.0
      %4426 = vmatpush1.msra.mxu0 %v4354
      %4427 = vmatprep.subr.mxu0 0.0
      %4428 = vmatpush1.msra.mxu0 0.0
      %4429 = vmatprep.subr.mxu0 0.0
      %4430 = vmatpush1.msra.mxu0 0.0
      %4431 = vmatprep.subr.mxu0 0.0
      %4432 = vmatpush1.msra.mxu0 0.0
      %4433 = vmatprep.subr.mxu0 0.0
      %4434 = vmatpush1.msra.mxu0 0.0
      %4435 = vmatprep.subr.mxu0 0.0
      %4436 = vmatpush1.msra.mxu0 0.0
      %4437 = vmatprep.subr.mxu0 0.0
      %4438 = vmatpush1.msra.mxu0 0.0
      %4439 = vmatprep.subr.mxu0 0.0
      %4440 = vmatpush1.msra.mxu0 0.0
      %4441 = vmatprep.subr.mxu0 0.0
      %4442 = vmatpush1.msra.mxu0 0.0
      %4443 = vmatprep.subr.mxu0 0.0
      %4444 = vmatpush1.msra.mxu0 0.0
      %4445 = vmatprep.subr.mxu0 0.0
      %4446 = vmatpush1.msra.mxu0 0.0
      %4447 = vmatprep.subr.mxu0 0.0
      %4448 = vmatpush1.msra.mxu0 0.0
      %4449 = vmatprep.subr.mxu0 0.0
      %4450 = vmatpush1.msra.mxu0 0.0
      %4451 = vmatprep.subr.mxu0 0.0
      %4452 = vmatpush1.msra.mxu0 0.0
      %4453 = vmatprep.subr.mxu0 0.0
      %4454 = vmatpush1.msra.mxu0 0.0
      %4455 = vmatprep.subr.mxu0 0.0
      %4456 = vmatpush1.msra.mxu0 0.0
      %4457 = vmatprep.subr.mxu0 0.0
      %4458 = vmatpush1.msra.mxu0 0.0
      %4459 = vmatprep.subr.mxu0 0.0
      %4460 = vmatpush1.msra.mxu0 0.0
      %4461 = vmatprep.subr.mxu0 0.0
      %4462 = vmatpush1.msra.mxu0 0.0
      %4463 = vmatprep.subr.mxu0 0.0
      %4464 = vmatpush1.msra.mxu0 0.0
      %4465 = vmatprep.subr.mxu0 0.0
      %4466 = vmatpush1.msra.mxu0 0.0
      %4467 = vmatprep.subr.mxu0 0.0
      %4468 = vmatpush1.msra.mxu0 0.0
      %4469 = vmatprep.subr.mxu0 0.0
      %4470 = vmatpush1.msra.mxu0 0.0
      %4471 = vmatprep.subr.mxu0 0.0
      %4472 = vmatpush1.msra.mxu0 0.0
      %4473 = vmatprep.subr.mxu0 0.0
      %4474 = vmatpush1.msra.mxu0 0.0
      %4475 = vmatprep.subr.mxu0 0.0
      %4476 = vmatpush1.msra.mxu0 0.0
      %4477 = vmatprep.subr.mxu0 0.0
      %4478 = vmatpush1.msra.mxu0 0.0
      %4479 = vmatprep.subr.mxu0 0.0
      %4480 = vmatpush1.msra.mxu0 0.0
      %4481 = vmatprep.subr.mxu0 0.0
      %4482 = vmatpush1.msra.mxu0 0.0
      %4483 = vmatprep.mubr.f32.mxu0 0.0
      %4484 = vmatmul.mubr.f32.gmra.mrb[0].mxu0 %v4355
      %v4485 = vpop.f32.mrb[0].mxu0
      %v4486 = vadd.f32 0.0, %v4485
      %v4487 = vpop.f32.mrb[0].mxu0
      %4488 = vmatprep.mubr.f32.mxu0 0.0
      %4489 = vmatmul.mubr.f32.gmra.mrb[0].mxu0 %v4357
      %v4490 = vpop.f32.mrb[0].mxu0
      %v4491 = vadd.f32 0.0, %v4490
      %v4492 = vpop.f32.mrb[0].mxu0
      %4493 = vmatprep.mubr.f32.mxu0 0.0
      %4494 = vmatmul.mubr.f32.gmra.mrb[0].mxu0 %v4359
      %v4495 = vpop.f32.mrb[0].mxu0
      %v4496 = vadd.f32 0.0, %v4495
      %v4497 = vpop.f32.mrb[0].mxu0
      %4498 = vmatprep.mubr.f32.mxu0 0.0
      %4499 = vmatmul.mubr.f32.gmra.mrb[0].mxu0 %v4361
      %v4500 = vpop.f32.mrb[0].mxu0
      %v4501 = vadd.f32 0.0, %v4500
      %v4502 = vpop.f32.mrb[0].mxu0
      %4503 = vmatprep.mubr.f32.mxu0 0.0
      %4504 = vmatmul.mubr.f32.gmra.mrb[0].mxu0 %v4363
      %v4505 = vpop.f32.mrb[0].mxu0
      %v4506 = vadd.f32 0.0, %v4505
      %v4507 = vpop.f32.mrb[0].mxu0
      %4508 = vmatprep.mubr.f32.mxu0 0.0
      %4509 = vmatmul.mubr.f32.gmra.mrb[0].mxu0 %v4365
      %v4510 = vpop.f32.mrb[0].mxu0
      %v4511 = vadd.f32 0.0, %v4510
      %v4512 = vpop.f32.mrb[0].mxu0
      %4513 = vmatprep.mubr.f32.mxu0 0.0
      %4514 = vmatmul.mubr.f32.gmra.mrb[0].mxu0 %v4367
      %v4515 = vpop.f32.mrb[0].mxu0
      %v4516 = vadd.f32 0.0, %v4515
      %v4517 = vpop.f32.mrb[0].mxu0
      %4518 = vmatprep.mubr.f32.mxu0 0.0
      %4519 = vmatmul.mubr.f32.gmra.mrb[0].mxu0 %v4369
      %v4520 = vpop.f32.mrb[0].mxu0
      %v4521 = vadd.f32 0.0, %v4520
      %v4522 = vpop.f32.mrb[0].mxu0
      %4523 = vmatprep.mubr.f32.mxu0 0.0
      %4524 = vmatmul.mubr.f32.gmra.mrb[0].mxu0 %v4371
      %v4525 = vpop.f32.mrb[0].mxu0
      %v4526 = vadd.f32 0.0, %v4525
      %v4527 = vpop.f32.mrb[0].mxu0
      %4528 = vmatprep.mubr.f32.mxu0 0.0
      %4529 = vmatmul.mubr.f32.gmra.mrb[0].mxu0 %v4373
      %v4530 = vpop.f32.mrb[0].mxu0
      %v4531 = vadd.f32 0.0, %v4530
      %v4532 = vpop.f32.mrb[0].mxu0
      %4533 = vmatprep.mubr.f32.mxu0 0.0
      %4534 = vmatmul.mubr.f32.gmra.mrb[0].mxu0 %v4375
      %v4535 = vpop.f32.mrb[0].mxu0
      %v4536 = vadd.f32 0.0, %v4535
      %v4537 = vpop.f32.mrb[0].mxu0
      %4538 = vmatprep.mubr.f32.mxu0 0.0
      %4539 = vmatmul.mubr.f32.gmra.mrb[0].mxu0 %v4377
      %v4540 = vpop.f32.mrb[0].mxu0
      %v4541 = vadd.f32 0.0, %v4540
      %v4542 = vpop.f32.mrb[0].mxu0
      %4543 = vmatprep.mubr.f32.mxu0 0.0
      %4544 = vmatmul.mubr.f32.gmra.mrb[0].mxu0 %v4379
      %v4545 = vpop.f32.mrb[0].mxu0
      %v4546 = vadd.f32 0.0, %v4545
      %v4547 = vpop.f32.mrb[0].mxu0
      %4548 = vmatprep.mubr.f32.mxu0 0.0
      %4549 = vmatmul.mubr.f32.gmra.mrb[0].mxu0 %v4381
      %v4550 = vpop.f32.mrb[0].mxu0
      %v4551 = vadd.f32 0.0, %v4550
      %v4552 = vpop.f32.mrb[0].mxu0
      %4553 = vmatprep.mubr.f32.mxu0 0.0
      %4554 = vmatmul.mubr.f32.gmra.mrb[0].mxu0 %v4383
      %v4555 = vpop.f32.mrb[0].mxu0
      %v4556 = vadd.f32 0.0, %v4555
      %v4557 = vpop.f32.mrb[0].mxu0
      %4558 = vmatprep.mubr.f32.mxu0 0.0
      %4559 = vmatmul.mubr.f32.gmra.mrb[0].mxu0 %v4385
      %v4560 = vpop.f32.mrb[0].mxu0
      %v4561 = vadd.f32 0.0, %v4560
      %v4562 = vpop.f32.mrb[0].mxu0
      %4563 = vmatprep.mubr.f32.mxu0 0.0
      %4564 = vmatmul.mubr.f32.gmra.mrb[0].mxu0 %v4387
      %v4565 = vpop.f32.mrb[0].mxu0
      %v4566 = vadd.f32 0.0, %v4565
      %v4567 = vpop.f32.mrb[0].mxu0
      %4568 = vmatprep.mubr.f32.mxu0 0.0
      %4569 = vmatmul.mubr.f32.gmra.mrb[0].mxu0 %v4389
      %v4570 = vpop.f32.mrb[0].mxu0
      %v4571 = vadd.f32 0.0, %v4570
      %v4572 = vpop.f32.mrb[0].mxu0
      %4573 = vmatprep.mubr.f32.mxu0 0.0
      %4574 = vmatmul.mubr.f32.gmra.mrb[0].mxu0 %v4391
      %v4575 = vpop.f32.mrb[0].mxu0
      %v4576 = vadd.f32 0.0, %v4575
      %v4577 = vpop.f32.mrb[0].mxu0
      %4578 = vmatprep.mubr.f32.mxu0 0.0
      %4579 = vmatmul.mubr.f32.gmra.mrb[0].mxu0 %v4393
      %v4580 = vpop.f32.mrb[0].mxu0
      %v4581 = vadd.f32 0.0, %v4580
      %v4582 = vpop.f32.mrb[0].mxu0
      %4583 = vmatprep.mubr.f32.mxu0 0.0
      %4584 = vmatmul.mubr.f32.gmra.mrb[0].mxu0 %v4395
      %v4585 = vpop.f32.mrb[0].mxu0
      %v4586 = vadd.f32 0.0, %v4585
      %v4587 = vpop.f32.mrb[0].mxu0
      %4588 = vmatprep.mubr.f32.mxu0 0.0
      %4589 = vmatmul.mubr.f32.gmra.mrb[0].mxu0 %v4397
      %v4590 = vpop.f32.mrb[0].mxu0
      %v4591 = vadd.f32 0.0, %v4590
      %v4592 = vpop.f32.mrb[0].mxu0
      %4593 = vmatprep.mubr.f32.mxu0 0.0
      %4594 = vmatmul.mubr.f32.gmra.mrb[0].mxu0 %v4399
      %v4595 = vpop.f32.mrb[0].mxu0
      %v4596 = vadd.f32 0.0, %v4595
      %v4597 = vpop.f32.mrb[0].mxu0
      %4598 = vmatprep.mubr.f32.mxu0 0.0
      %4599 = vmatmul.mubr.f32.gmra.mrb[0].mxu0 %v4401
      %v4600 = vpop.f32.mrb[0].mxu0
      %v4601 = vadd.f32 0.0, %v4600
      %v4602 = vpop.f32.mrb[0].mxu0
      %4603 = vmatprep.mubr.f32.mxu0 0.0
      %4604 = vmatmul.mubr.f32.gmra.mrb[0].mxu0 %v4403
      %v4605 = vpop.f32.mrb[0].mxu0
      %v4606 = vadd.f32 0.0, %v4605
      %v4607 = vpop.f32.mrb[0].mxu0
      %4608 = vmatprep.mubr.f32.mxu0 0.0
      %4609 = vmatmul.mubr.f32.gmra.mrb[0].mxu0 %v4405
      %v4610 = vpop.f32.mrb[0].mxu0
      %v4611 = vadd.f32 0.0, %v4610
      %v4612 = vpop.f32.mrb[0].mxu0
      %4613 = vmatprep.mubr.f32.mxu0 0.0
      %4614 = vmatmul.mubr.f32.gmra.mrb[0].mxu0 %v4407
      %v4615 = vpop.f32.mrb[0].mxu0
      %v4616 = vadd.f32 0.0, %v4615
      %v4617 = vpop.f32.mrb[0].mxu0
      %4618 = vmatprep.mubr.f32.mxu0 0.0
      %4619 = vmatmul.mubr.f32.gmra.mrb[0].mxu0 %v4409
      %v4620 = vpop.f32.mrb[0].mxu0
      %v4621 = vadd.f32 0.0, %v4620
      %v4622 = vpop.f32.mrb[0].mxu0
      %4623 = vmatprep.mubr.f32.mxu0 0.0
      %4624 = vmatmul.mubr.f32.gmra.mrb[0].mxu0 %v4411
      %v4625 = vpop.f32.mrb[0].mxu0
      %v4626 = vadd.f32 0.0, %v4625
      %v4627 = vpop.f32.mrb[0].mxu0
      %4628 = vmatprep.mubr.f32.mxu0 0.0
      %4629 = vmatmul.mubr.f32.gmra.mrb[0].mxu0 %v4413
      %v4630 = vpop.f32.mrb[0].mxu0
      %v4631 = vadd.f32 0.0, %v4630
      %v4632 = vpop.f32.mrb[0].mxu0
      %4633 = vmatprep.mubr.f32.mxu0 0.0
      %4634 = vmatmul.mubr.f32.gmra.mrb[0].mxu0 %v4415
      %v4635 = vpop.f32.mrb[0].mxu0
      %v4636 = vadd.f32 0.0, %v4635
      %v4637 = vpop.f32.mrb[0].mxu0
      %4638 = vmatprep.mubr.f32.mxu0 0.0
      %4639 = vmatmul.mubr.f32.gmra.mrb[0].mxu0 %v4417
      %v4640 = vpop.f32.mrb[0].mxu0
      %v4641 = vadd.f32 0.0, %v4640
      %v4642 = vpop.f32.mrb[0].mxu0
      %4643 = vdwg.mxu0
      %v4644 = vadd.f32 %v4193, %v4486
      %v4645 = vadd.f32 %v4198, %v4491
      %v4646 = vadd.f32 %v4203, %v4496
      %v4647 = vadd.f32 %v4208, %v4501
      %v4648 = vadd.f32 %v4213, %v4506
      %v4649 = vadd.f32 %v4218, %v4511
      %v4650 = vadd.f32 %v4223, %v4516
      %v4651 = vadd.f32 %v4228, %v4521
      %v4652 = vadd.f32 %v4233, %v4526
      %v4653 = vadd.f32 %v4238, %v4531
      %v4654 = vadd.f32 %v4243, %v4536
      %v4655 = vadd.f32 %v4248, %v4541
      %v4656 = vadd.f32 %v4253, %v4546
      %v4657 = vadd.f32 %v4258, %v4551
      %v4658 = vadd.f32 %v4263, %v4556
      %v4659 = vadd.f32 %v4268, %v4561
      %v4660 = vadd.f32 %v4273, %v4566
      %v4661 = vadd.f32 %v4278, %v4571
      %v4662 = vadd.f32 %v4283, %v4576
      %v4663 = vadd.f32 %v4288, %v4581
      %v4664 = vadd.f32 %v4293, %v4586
      %v4665 = vadd.f32 %v4298, %v4591
      %v4666 = vadd.f32 %v4303, %v4596
      %v4667 = vadd.f32 %v4308, %v4601
      %v4668 = vadd.f32 %v4313, %v4606
      %v4669 = vadd.f32 %v4318, %v4611
      %v4670 = vadd.f32 %v4323, %v4616
      %v4671 = vadd.f32 %v4328, %v4621
      %v4672 = vadd.f32 %v4333, %v4626
      %v4673 = vadd.f32 %v4338, %v4631
      %v4674 = vadd.f32 %v4343, %v4636
      %v4675 = vadd.f32 %v4348, %v4641
      %v4676 = vmax.f32 %v4644, 0.0
      %v4677 = vmax.f32 %v4645, 0.0
      %v4678 = vmax.f32 %v4646, 0.0
      %v4679 = vmax.f32 %v4647, 0.0
      %v4680 = vmax.f32 %v4648, 0.0
      %v4681 = vmax.f32 %v4649, 0.0
      %v4682 = vmax.f32 %v4650, 0.0
      %v4683 = vmax.f32 %v4651, 0.0
      %v4684 = vmax.f32 %v4652, 0.0
      %v4685 = vmax.f32 %v4653, 0.0
      %v4686 = vmax.f32 %v4654, 0.0
      %v4687 = vmax.f32 %v4655, 0.0
      %v4688 = vmax.f32 %v4656, 0.0
      %v4689 = vmax.f32 %v4657, 0.0
      %v4690 = vmax.f32 %v4658, 0.0
      %v4691 = vmax.f32 %v4659, 0.0
      %v4692 = vmax.f32 %v4660, 0.0
      %v4693 = vmax.f32 %v4661, 0.0
      %v4694 = vmax.f32 %v4662, 0.0
      %v4695 = vmax.f32 %v4663, 0.0
      %v4696 = vmax.f32 %v4664, 0.0
      %v4697 = vmax.f32 %v4665, 0.0
      %v4698 = vmax.f32 %v4666, 0.0
      %v4699 = vmax.f32 %v4667, 0.0
      %v4700 = vmax.f32 %v4668, 0.0
      %v4701 = vmax.f32 %v4669, 0.0
      %v4702 = vmax.f32 %v4670, 0.0
      %v4703 = vmax.f32 %v4671, 0.0
      %v4704 = vmax.f32 %v4672, 0.0
      %v4705 = vmax.f32 %v4673, 0.0
      %v4706 = vmax.f32 %v4674, 0.0
      %v4707 = vmax.f32 %v4675, 0.0
      %4708 = vst.msk [vmem:[%s251] sm:$0xff] %vm2375, %v4676
      %4709 = vst.msk [vmem:[%s251 + $0x8] sm:$0xff] %vm2375, %v4677
      %4710 = vst.msk [vmem:[%s251 + $0x10] sm:$0xff] %vm2375, %v4678
      %4711 = vst.msk [vmem:[%s251 + $0x18] sm:$0xff] %vm2375, %v4679
      %4712 = vst.msk [vmem:[%s251 + $0x20] sm:$0xff] %vm2375, %v4680
      %4713 = vst.msk [vmem:[%s251 + $0x28] sm:$0xff] %vm2375, %v4681
      %4714 = vst.msk [vmem:[%s251 + $0x30] sm:$0xff] %vm2375, %v4682
      %4715 = vst.msk [vmem:[%s251 + $0x38] sm:$0xff] %vm2375, %v4683
      %4716 = vst.msk [vmem:[%s251 + $0x40] sm:$0xff] %vm2375, %v4684
      %4717 = vst.msk [vmem:[%s251 + $0x48] sm:$0xff] %vm2375, %v4685
      %4718 = vst.msk [vmem:[%s251 + $0x50] sm:$0xff] %vm2375, %v4686
      %4719 = vst.msk [vmem:[%s251 + $0x58] sm:$0xff] %vm2375, %v4687
      %4720 = vst.msk [vmem:[%s251 + $0x60] sm:$0xff] %vm2375, %v4688
      %4721 = vst.msk [vmem:[%s251 + $0x68] sm:$0xff] %vm2375, %v4689
      %4722 = vst.msk [vmem:[%s251 + $0x70] sm:$0xff] %vm2375, %v4690
      %4723 = vst.msk [vmem:[%s251 + $0x78] sm:$0xff] %vm2375, %v4691
      %4724 = vst.msk [vmem:[%s251 + $0x80] sm:$0xff] %vm2375, %v4692
      %4725 = vst.msk [vmem:[%s251 + $0x88] sm:$0xff] %vm2375, %v4693
      %4726 = vst.msk [vmem:[%s251 + $0x90] sm:$0xff] %vm2375, %v4694
      %4727 = vst.msk [vmem:[%s251 + $0x98] sm:$0xff] %vm2375, %v4695
      %4728 = vst.msk [vmem:[%s251 + $0xa0] sm:$0xff] %vm2375, %v4696
      %4729 = vst.msk [vmem:[%s251 + $0xa8] sm:$0xff] %vm2375, %v4697
      %4730 = vst.msk [vmem:[%s251 + $0xb0] sm:$0xff] %vm2375, %v4698
      %4731 = vst.msk [vmem:[%s251 + $0xb8] sm:$0xff] %vm2375, %v4699
      %4732 = vst.msk [vmem:[%s251 + $0xc0] sm:$0xff] %vm2375, %v4700
      %4733 = vst.msk [vmem:[%s251 + $0xc8] sm:$0xff] %vm2375, %v4701
      %4734 = vst.msk [vmem:[%s251 + $0xd0] sm:$0xff] %vm2375, %v4702
      %4735 = vst.msk [vmem:[%s251 + $0xd8] sm:$0xff] %vm2375, %v4703
      %4736 = vst.msk [vmem:[%s251 + $0xe0] sm:$0xff] %vm2375, %v4704
      %4737 = vst.msk [vmem:[%s251 + $0xe8] sm:$0xff] %vm2375, %v4705
      %4738 = vst.msk [vmem:[%s251 + $0xf0] sm:$0xff] %vm2375, %v4706
      %4739 = vst.msk [vmem:[%s251 + $0xf8] sm:$0xff] %vm2375, %v4707
      %p4740 = scmp.lt.s32.totalorder %s17, 1
      %s4741 = scalar_select %p4740, %s17, 1
      %s4742 = smul.addr %s4741, 32
      %s4743 = smul.addr %s4742, 8
      %s4744 = scalar_lea.vmem %s6, %s4743
      // Predicated region
      $region45: #{res_block_forward.1} parent=43 // pred_check
        %p4745 = pneg %p166
      $region46: #{res_block_forward.1} parent=43 // pred_check_branch
        %4747 = sbr.rel (%p4745) target = $region48
      $region47: #{res_block_forward.1} parent=43 // pred_region
        _
      $region48: #{res_block_forward.1} parent=43 // pred_fallthru
        _
    $region44: #{res_block_forward.1} parent=5 // pred_fallthru
      _
    %p4748 = scmp.le.s32.totalorder 2, %s12
    // Predicated region
    $region49: #{res_block_forward.1} parent=5 // pred_check
      %p4749 = pneg %p4748
    $region50: #{res_block_forward.1} parent=5 // pred_check_branch
      %4751 = sbr.rel (%p4749) target = $region52
    $region51: #{res_block_forward.1} parent=5 // pred_region
      %s4752 = ssub.s32 %s12, 2
      // Predicated region
      $region53: #{res_block_forward.1} parent=51 // pred_check
        %p4753 = pneg %p172
      $region54: #{res_block_forward.1} parent=51 // pred_check_branch
        %4755 = sbr.rel (%p4753) target = $region56
      $region55: #{res_block_forward.1} parent=51 // pred_region
        %p4756 = scmp.lt.s32.totalorder %s18, 1
        %s4757 = scalar_select %p4756, %s18, 1
        %s4758 = smul.addr %s4757, 32
        %s4759 = smul.addr %s4758, 8
        %s4760 = scalar_lea.vmem %s6, %s4759
      $region56: #{res_block_forward.1} parent=51 // pred_fallthru
        _
    $region52: #{res_block_forward.1} parent=5 // pred_fallthru
      _
  $region6: #{res_block_forward.1} parent=0 // loop_footer
    %s16 = sadd.s32 1, %s12
  $region7: #{res_block_forward.1} parent=0 // loop_footer_branch
    %11 = sbr.rel target = $region3
  $region8: #{res_block_forward.1} parent=0 // loop_exit
    _

</llo_original>
